<compile_context>
chip_gen: v5e
topology: v5e:2x2
jax: 0.10.0
libtpu: 0.0.40
codegen_flags: <defaults>
</compile_context>

<pallas_src>
import jax
import jax.numpy as jnp
from jax.experimental import pallas as pl
from jax.experimental.pallas import tpu as pltpu


def unet_conv_block_kernel(
    x_ref,      # (TH+4, W+2, Cpi)  f32   overlapping input strip (2-row halo, 1-col pad)
    w1_ref,     # (9*Cpi, Cpo)      bf16  conv1 3x3 weights, taps folded into K
    w2_ref,     # (9*Cpo, Cpo)      bf16  conv2 3x3 weights, taps folded into K
    wr_ref,     # (Cpi, Cpo)        bf16  residual 1x1 conv weight
    vin_ref,    # (2, Cpi)          f32   [bn_in scale; bn_in bias]
    vout_ref,   # (8, Cpo)          f32   [b1, s_mid, b_mid, b2, br, s_res, b_res, 0]
    out_ref,    # (TH, W, Cpo)      f32   output strip
    tpad_ref,   # (TH+2, W+2, Cpo)  bf16  VMEM scratch: conv2 operand with W halo
):
    THp, Wp, Cpi = x_ref.shape            # TH+4, W+2, Cpi
    TH, W, Cpo = out_ref.shape
    H = pl.num_programs(1) * TH           # total image height
    j = pl.program_id(1)
    row0 = j * TH                          # strip offset in padded-row coordinates

    # ---- block prefix: ReLU -> BatchNorm(in_size) ----
    xt = x_ref[...]                                       # (TH+4, W+2, Cpi)
    s_in = vin_ref[0:1, :].reshape(1, 1, Cpi)
    b_in = vin_ref[1:2, :].reshape(1, 1, Cpi)
    y = jnp.maximum(xt, 0.0) * s_in + b_in

    # Re-zero conv1's zero-padding positions (the BN bias must not leak into
    # the padded border).  Padded rows: global padded-row < 2 or >= H+2;
    # padded cols: 0 and W+1.
    rows = jax.lax.broadcasted_iota(jnp.int32, (THp, Wp, Cpi), 0) + row0
    cols = jax.lax.broadcasted_iota(jnp.int32, (THp, Wp, Cpi), 1)
    valid_in = (rows >= 2) & (rows < H + 2) & (cols >= 1) & (cols <= W)
    y = jnp.where(valid_in, y, 0.0)
    yb = y.astype(jnp.bfloat16)

    # ---- conv1: 3x3, pad=1, as one fused-tap matmul (produces TH+2 rows,
    #      i.e. the output strip plus a 1-row halo needed by conv2) ----
    p1 = jnp.concatenate(
        [yb[kh:kh + TH + 2, kw:kw + W, :] for kh in range(3) for kw in range(3)],
        axis=-1).reshape((TH + 2) * W, 9 * Cpi)
    t = jnp.dot(p1, w1_ref[...], preferred_element_type=jnp.float32)
    t = t + vout_ref[0:1, :]                               # + b1
    # ReLU -> BatchNorm(out_size)
    t = jnp.maximum(t, 0.0) * vout_ref[1:2, :] + vout_ref[2:3, :]
    t = t.reshape(TH + 2, W, Cpo)

    # t halo rows that fall outside the image are conv2's zero padding.
    trows = jax.lax.broadcasted_iota(jnp.int32, (TH + 2, W, Cpo), 0) + row0
    t = jnp.where((trows >= 1) & (trows <= H), t, 0.0)

    # ---- stage conv2 operand in bf16 with zeroed W-halo columns ----
    tpad_ref[:, 1:1 + W, :] = t.astype(jnp.bfloat16)
    zcol = jnp.zeros((TH + 2, 1, Cpo), jnp.bfloat16)
    tpad_ref[:, 0:1, :] = zcol
    tpad_ref[:, W + 1:W + 2, :] = zcol
    tp = tpad_ref[...]

    # ---- conv2: 3x3, pad=1, as one fused-tap matmul ----
    p2 = jnp.concatenate(
        [tp[kh:kh + TH, kw:kw + W, :] for kh in range(3) for kw in range(3)],
        axis=-1).reshape(TH * W, 9 * Cpo)
    o = jnp.dot(p2, w2_ref[...], preferred_element_type=jnp.float32)
    o = o + vout_ref[3:4, :]                               # + b2

    # ---- residual path: 1x1 conv + BatchNorm (in_size != out_size) ----
    xr = xt[2:2 + TH, 1:1 + W, :].astype(jnp.bfloat16).reshape(TH * W, Cpi)
    r = jnp.dot(xr, wr_ref[...], preferred_element_type=jnp.float32)
    r = (r + vout_ref[4:5, :]) * vout_ref[5:6, :] + vout_ref[6:7, :]

    out_ref[...] = (o + r).reshape(TH, W, Cpo).astype(out_ref.dtype)


def fold_bn(gamma, beta, mean, var, eps=1e-5):
    scale = gamma / jnp.sqrt(var + eps)
    bias = beta - mean * scale
    return scale, bias


def _round_up(x, m):
    return (x + m - 1) // m * m


def _pad1d(v, n):
    v = v.astype(jnp.float32)
    return jnp.pad(v, (0, n - v.shape[0]))


def unet_conv_block(x_nchw, p, tile_h=8):
    """Pallas forward of UNetConvBlock. x_nchw: (N, Cin, H, W) float32."""
    N, Cin, H, W = x_nchw.shape
    Cout = p["w1"].shape[-1]
    Cpi = _round_up(Cin, 128)
    Cpo = _round_up(Cout, 128)
    if H % tile_h != 0:
        tile_h = H
    TH = tile_h
    S = H // TH

    # NHWC, channels zero-padded to a lane-dense multiple of 128,
    # spatial pre-padded (2 rows / 1 col each side) for the two 3x3 convs.
    x = jnp.transpose(x_nchw, (0, 2, 3, 1)).astype(jnp.float32)
    xp = jnp.pad(x, ((0, 0), (2, 2), (1, 1), (0, Cpi - Cin)))       # (N, H+4, W+2, Cpi)
    # Overlapping H-strips (each strip carries its 2-row halo) so the kernel's
    # BlockSpec blocks are non-overlapping and fully auto-pipelined.
    xs = jnp.stack([xp[:, j * TH:j * TH + TH + 4] for j in range(S)], axis=1)
    xs = xs.reshape(N * S, TH + 4, W + 2, Cpi)

    # Conv weights in HWIO, zero-padded channels, taps folded into K, bf16.
    w1 = jnp.pad(p["w1"], ((0, 0), (0, 0), (0, Cpi - Cin), (0, Cpo - Cout)))
    w1 = w1.reshape(9 * Cpi, Cpo).astype(jnp.bfloat16)
    w2 = jnp.pad(p["w2"], ((0, 0), (0, 0), (0, Cpo - Cout), (0, Cpo - Cout)))
    w2 = w2.reshape(9 * Cpo, Cpo).astype(jnp.bfloat16)
    wr = jnp.pad(p["wr"], ((0, Cpi - Cin), (0, Cpo - Cout))).astype(jnp.bfloat16)

    s_in, b_in = fold_bn(p["bn_in_g"], p["bn_in_b"], p["bn_in_m"], p["bn_in_v"])
    s_mid, b_mid = fold_bn(p["bn_mid_g"], p["bn_mid_b"], p["bn_mid_m"], p["bn_mid_v"])
    s_res, b_res = fold_bn(p["bn_res_g"], p["bn_res_b"], p["bn_res_m"], p["bn_res_v"])

    vec_in = jnp.stack([_pad1d(s_in, Cpi), _pad1d(b_in, Cpi)])       # (2, Cpi)
    vec_out = jnp.stack([
        _pad1d(p["b1"], Cpo), _pad1d(s_mid, Cpo), _pad1d(b_mid, Cpo),
        _pad1d(p["b2"], Cpo), _pad1d(p["br"], Cpo),
        _pad1d(s_res, Cpo), _pad1d(b_res, Cpo),
        jnp.zeros((Cpo,), jnp.float32),
    ])                                                               # (8, Cpo)

    grid_spec = pltpu.PrefetchScalarGridSpec(
        num_scalar_prefetch=0,
        grid=(N, S),
        in_specs=[
            pl.BlockSpec((None, TH + 4, W + 2, Cpi),
                         lambda n, j: (n * S + j, 0, 0, 0)),
            pl.BlockSpec((9 * Cpi, Cpo), lambda n, j: (0, 0)),
            pl.BlockSpec((9 * Cpo, Cpo), lambda n, j: (0, 0)),
            pl.BlockSpec((Cpi, Cpo), lambda n, j: (0, 0)),
            pl.BlockSpec((2, Cpi), lambda n, j: (0, 0)),
            pl.BlockSpec((8, Cpo), lambda n, j: (0, 0)),
        ],
        out_specs=pl.BlockSpec((None, TH, W, Cpo), lambda n, j: (n, j, 0, 0)),
        scratch_shapes=[pltpu.VMEM((TH + 2, W + 2, Cpo), jnp.bfloat16)],
    )

    out_nhwc = pl.pallas_call(
        unet_conv_block_kernel,
        out_shape=jax.ShapeDtypeStruct((N, H, W, Cpo), jnp.float32),
        grid_spec=grid_spec,
        compiler_params=pltpu.CompilerParams(
            dimension_semantics=("parallel", "parallel"),
            vmem_limit_bytes=32 * 1024 * 1024,
        ),
    )(xs, w1, w2, wr, vec_in, vec_out)

    out_nhwc = out_nhwc[..., :Cout]
    return jnp.transpose(out_nhwc, (0, 3, 1, 2))                     # -> NCHW


def ref_forward(x_nchw, p):
    """Pure-JAX f32 reference (eval-mode BN), NCHW in / NCHW out."""
    x = jnp.transpose(x_nchw, (0, 2, 3, 1)).astype(jnp.float32)
    s_in, b_in = fold_bn(p["bn_in_g"], p["bn_in_b"], p["bn_in_m"], p["bn_in_v"])
    s_mid, b_mid = fold_bn(p["bn_mid_g"], p["bn_mid_b"], p["bn_mid_m"], p["bn_mid_v"])
    s_res, b_res = fold_bn(p["bn_res_g"], p["bn_res_b"], p["bn_res_m"], p["bn_res_v"])
    dn = ("NHWC", "HWIO", "NHWC")

    y = jnp.maximum(x, 0.0) * s_in + b_in
    t = jax.lax.conv_general_dilated(y, p["w1"], (1, 1), "SAME",
                                     dimension_numbers=dn) + p["b1"]
    t = jnp.maximum(t, 0.0) * s_mid + b_mid
    o = jax.lax.conv_general_dilated(t, p["w2"], (1, 1), "SAME",
                                     dimension_numbers=dn) + p["b2"]
    r = jnp.einsum("nhwi,io->nhwo", x, p["wr"]) + p["br"]
    r = r * s_res + b_res
    return jnp.transpose(o + r, (0, 3, 1, 2))


def make_params(key, in_size, out_size):
    ks = jax.random.split(key, 18)
    return {
        # Conv weights stored directly in HWIO (synthetic init, not a checkpoint).
        "w1": jax.random.normal(ks[0], (3, 3, in_size, out_size), jnp.float32) * 0.1,
        "b1": jax.random.normal(ks[1], (out_size,), jnp.float32) * 0.1,
        "w2": jax.random.normal(ks[2], (3, 3, out_size, out_size), jnp.float32) * 0.1,
        "b2": jax.random.normal(ks[3], (out_size,), jnp.float32) * 0.1,
        "wr": jax.random.normal(ks[4], (in_size, out_size), jnp.float32) * 0.1,
        "br": jax.random.normal(ks[5], (out_size,), jnp.float32) * 0.1,
        "bn_in_g": 1.0 + 0.1 * jax.random.normal(ks[6], (in_size,), jnp.float32),
        "bn_in_b": 0.1 * jax.random.normal(ks[7], (in_size,), jnp.float32),
        "bn_in_m": 0.1 * jax.random.normal(ks[8], (in_size,), jnp.float32),
        "bn_in_v": jax.random.uniform(ks[9], (in_size,), jnp.float32, 0.5, 1.5),
        "bn_mid_g": 1.0 + 0.1 * jax.random.normal(ks[10], (out_size,), jnp.float32),
        "bn_mid_b": 0.1 * jax.random.normal(ks[11], (out_size,), jnp.float32),
        "bn_mid_m": 0.1 * jax.random.normal(ks[12], (out_size,), jnp.float32),
        "bn_mid_v": jax.random.uniform(ks[13], (out_size,), jnp.float32, 0.5, 1.5),
        "bn_res_g": 1.0 + 0.1 * jax.random.normal(ks[14], (out_size,), jnp.float32),
        "bn_res_b": 0.1 * jax.random.normal(ks[15], (out_size,), jnp.float32),
        "bn_res_m": 0.1 * jax.random.normal(ks[16], (out_size,), jnp.float32),
        "bn_res_v": jax.random.uniform(ks[17], (out_size,), jnp.float32, 0.5, 1.5),
    }


if __name__ == "__main__":
    key = jax.random.PRNGKey(0)
    k_x, k_p = jax.random.split(key)

    N, Cin, H, W = 2, 4, 16, 16
    Cout = 8

    x = jax.random.normal(k_x, (N, Cin, H, W), jnp.float32)
    params = make_params(k_p, Cin, Cout)

    out = jax.block_until_ready(unet_conv_block(x, params, tile_h=8))
    ref = jax.block_until_ready(ref_forward(x, params))

    assert out.shape == (N, Cout, H, W), out.shape
    max_err = float(jnp.max(jnp.abs(out - ref)))
    assert max_err < 5e-2, f"max abs error {max_err}"

    print("KERNEL_OK")
</pallas_src>

<mosaic_0001>
module attributes {stable_mosaic.version = 11 : i64} {
  func.func @unet_conv_block_kernel(%arg0: i32, %arg1: i32, %arg2: memref<1x12x18x128xf32, #tpu.memory_space<vmem>>, %arg3: memref<1152x128xbf16, #tpu.memory_space<vmem>>, %arg4: memref<1152x128xbf16, #tpu.memory_space<vmem>>, %arg5: memref<128x128xbf16, #tpu.memory_space<vmem>>, %arg6: memref<2x128xf32, #tpu.memory_space<vmem>>, %arg7: memref<8x128xf32, #tpu.memory_space<vmem>>, %arg8: memref<1x8x16x128xf32, #tpu.memory_space<vmem>>, %arg9: memref<10x18x128xbf16, #tpu.memory_space<vmem>>) attributes {dimension_semantics = [#tpu.dimension_semantics<parallel>, #tpu.dimension_semantics<parallel>], iteration_bounds = array<i64: 2, 2>, scalar_prefetch = 0 : i64, scratch_operands = 1 : i64, tpu.core_type = #tpu.core_type<tc>, window_params = [{transform_indices = @transform_0, window_bounds = array<i64: 1, 12, 18, 128>}, {pipeline_mode = #tpu.pipeline_mode<synchronous>, transform_indices = @transform_1, window_bounds = array<i64: 1152, 128>}, {pipeline_mode = #tpu.pipeline_mode<synchronous>, transform_indices = @transform_2, window_bounds = array<i64: 1152, 128>}, {pipeline_mode = #tpu.pipeline_mode<synchronous>, transform_indices = @transform_3, window_bounds = array<i64: 128, 128>}, {pipeline_mode = #tpu.pipeline_mode<synchronous>, transform_indices = @transform_4, window_bounds = array<i64: 2, 128>}, {pipeline_mode = #tpu.pipeline_mode<synchronous>, transform_indices = @transform_5, window_bounds = array<i64: 8, 128>}, {transform_indices = @transform_6, window_bounds = array<i64: 1, 8, 16, 128>}]} {
    %c8_i32 = arith.constant 8 : i32
    %0 = arith.muli %arg1, %c8_i32 : i32
    %c0 = arith.constant 0 : index
    %c0_0 = arith.constant 0 : index
    %c0_1 = arith.constant 0 : index
    %c0_2 = arith.constant 0 : index
    %1 = vector.load %arg2[%c0, %c0_0, %c0_1, %c0_2] : memref<1x12x18x128xf32, #tpu.memory_space<vmem>>, vector<1x12x18x128xf32>
    %2 = vector.shape_cast %1 : vector<1x12x18x128xf32> to vector<12x18x128xf32>
    %c0_3 = arith.constant 0 : index
    %c0_4 = arith.constant 0 : index
    %3 = vector.load %arg6[%c0_3, %c0_4] : memref<2x128xf32, #tpu.memory_space<vmem>>, vector<1x128xf32>
    %4 = vector.shape_cast %3 : vector<1x128xf32> to vector<1x1x128xf32>
    %c1 = arith.constant 1 : index
    %c0_5 = arith.constant 0 : index
    %5 = vector.load %arg6[%c1, %c0_5] : memref<2x128xf32, #tpu.memory_space<vmem>>, vector<1x128xf32>
    %6 = vector.shape_cast %5 : vector<1x128xf32> to vector<1x1x128xf32>
    %cst = arith.constant 0.000000e+00 : f32
    %7 = vector.broadcast %cst : f32 to vector<12x18x128xf32>
    %8 = arith.maximumf %2, %7 : vector<12x18x128xf32>
    %9 = vector.broadcast %4 : vector<1x1x128xf32> to vector<12x18x128xf32>
    %10 = arith.mulf %8, %9 : vector<12x18x128xf32>
    %11 = vector.broadcast %6 : vector<1x1x128xf32> to vector<12x18x128xf32>
    %12 = arith.addf %10, %11 : vector<12x18x128xf32>
    %13 = tpu.iota {dimensions = array<i32: 0>} : vector<12x18x128xi32>
    %14 = vector.broadcast %0 : i32 to vector<12x18x128xi32>
    %15 = arith.addi %13, %14 : vector<12x18x128xi32>
    %16 = tpu.iota {dimensions = array<i32: 1>} : vector<12x18x128xi32>
    %c2_i32 = arith.constant 2 : i32
    %17 = vector.broadcast %c2_i32 : i32 to vector<12x18x128xi32>
    %18 = arith.cmpi sge, %15, %17 : vector<12x18x128xi32>
    %c18_i32 = arith.constant 18 : i32
    %19 = vector.broadcast %c18_i32 : i32 to vector<12x18x128xi32>
    %20 = arith.cmpi slt, %15, %19 : vector<12x18x128xi32>
    %21 = arith.andi %18, %20 : vector<12x18x128xi1>
    %c1_i32 = arith.constant 1 : i32
    %22 = vector.broadcast %c1_i32 : i32 to vector<12x18x128xi32>
    %23 = arith.cmpi sge, %16, %22 : vector<12x18x128xi32>
    %24 = arith.andi %21, %23 : vector<12x18x128xi1>
    %c16_i32 = arith.constant 16 : i32
    %25 = vector.broadcast %c16_i32 : i32 to vector<12x18x128xi32>
    %26 = arith.cmpi sle, %16, %25 : vector<12x18x128xi32>
    %27 = arith.andi %24, %26 : vector<12x18x128xi1>
    %cst_6 = arith.constant 0.000000e+00 : f32
    %28 = vector.broadcast %cst_6 : f32 to vector<12x18x128xf32>
    %29 = arith.select %27, %12, %28 : vector<12x18x128xi1>, vector<12x18x128xf32>
    %30 = arith.truncf %29 : vector<12x18x128xf32> to vector<12x18x128xbf16>
    %31 = vector.extract_strided_slice %30 {offsets = [0, 0, 0], sizes = [10, 16, 128], strides = [1, 1, 1]} : vector<12x18x128xbf16> to vector<10x16x128xbf16>
    %32 = vector.extract_strided_slice %30 {offsets = [0, 1, 0], sizes = [10, 16, 128], strides = [1, 1, 1]} : vector<12x18x128xbf16> to vector<10x16x128xbf16>
    %33 = vector.extract_strided_slice %30 {offsets = [0, 2, 0], sizes = [10, 16, 128], strides = [1, 1, 1]} : vector<12x18x128xbf16> to vector<10x16x128xbf16>
    %34 = vector.extract_strided_slice %30 {offsets = [1, 0, 0], sizes = [10, 16, 128], strides = [1, 1, 1]} : vector<12x18x128xbf16> to vector<10x16x128xbf16>
    %35 = vector.extract_strided_slice %30 {offsets = [1, 1, 0], sizes = [10, 16, 128], strides = [1, 1, 1]} : vector<12x18x128xbf16> to vector<10x16x128xbf16>
    %36 = vector.extract_strided_slice %30 {offsets = [1, 2, 0], sizes = [10, 16, 128], strides = [1, 1, 1]} : vector<12x18x128xbf16> to vector<10x16x128xbf16>
    %37 = vector.extract_strided_slice %30 {offsets = [2, 0, 0], sizes = [10, 16, 128], strides = [1, 1, 1]} : vector<12x18x128xbf16> to vector<10x16x128xbf16>
    %38 = vector.extract_strided_slice %30 {offsets = [2, 1, 0], sizes = [10, 16, 128], strides = [1, 1, 1]} : vector<12x18x128xbf16> to vector<10x16x128xbf16>
    %39 = vector.extract_strided_slice %30 {offsets = [2, 2, 0], sizes = [10, 16, 128], strides = [1, 1, 1]} : vector<12x18x128xbf16> to vector<10x16x128xbf16>
    %40 = tpu.concatenate %31, %32, %33, %34, %35, %36, %37, %38, %39 in 2 : vector<10x16x128xbf16>, vector<10x16x128xbf16>, vector<10x16x128xbf16>, vector<10x16x128xbf16>, vector<10x16x128xbf16>, vector<10x16x128xbf16>, vector<10x16x128xbf16>, vector<10x16x128xbf16>, vector<10x16x128xbf16> -> vector<10x16x1152xbf16>
    %41 = vector.shape_cast %40 : vector<10x16x1152xbf16> to vector<160x1152xbf16>
    %c0_7 = arith.constant 0 : index
    %c0_8 = arith.constant 0 : index
    %42 = vector.load %arg3[%c0_7, %c0_8] : memref<1152x128xbf16, #tpu.memory_space<vmem>>, vector<1152x128xbf16>
    %cst_9 = arith.constant dense<0.000000e+00> : vector<160x128xf32>
    %43 = tpu.matmul %41, %42, %cst_9 {dimension_numbers = #tpu.dot_dimension_numbers<[1], [0], [0], [1], [0, 0, 1, 1], [], []>} : vector<160x1152xbf16>, vector<1152x128xbf16>, vector<160x128xf32> -> vector<160x128xf32>
    %c0_10 = arith.constant 0 : index
    %c0_11 = arith.constant 0 : index
    %44 = vector.load %arg7[%c0_10, %c0_11] : memref<8x128xf32, #tpu.memory_space<vmem>>, vector<1x128xf32>
    %45 = vector.broadcast %44 : vector<1x128xf32> to vector<160x128xf32>
    %46 = arith.addf %43, %45 : vector<160x128xf32>
    %cst_12 = arith.constant 0.000000e+00 : f32
    %47 = vector.broadcast %cst_12 : f32 to vector<160x128xf32>
    %48 = arith.maximumf %46, %47 : vector<160x128xf32>
    %c1_13 = arith.constant 1 : index
    %c0_14 = arith.constant 0 : index
    %49 = vector.load %arg7[%c1_13, %c0_14] : memref<8x128xf32, #tpu.memory_space<vmem>>, vector<1x128xf32>
    %50 = vector.broadcast %49 : vector<1x128xf32> to vector<160x128xf32>
    %51 = arith.mulf %48, %50 : vector<160x128xf32>
    %c2 = arith.constant 2 : index
    %c0_15 = arith.constant 0 : index
    %52 = vector.load %arg7[%c2, %c0_15] : memref<8x128xf32, #tpu.memory_space<vmem>>, vector<1x128xf32>
    %53 = vector.broadcast %52 : vector<1x128xf32> to vector<160x128xf32>
    %54 = arith.addf %51, %53 : vector<160x128xf32>
    %55 = vector.shape_cast %54 : vector<160x128xf32> to vector<10x16x128xf32>
    %56 = tpu.iota {dimensions = array<i32: 0>} : vector<10x16x128xi32>
    %57 = vector.broadcast %0 : i32 to vector<10x16x128xi32>
    %58 = arith.addi %56, %57 : vector<10x16x128xi32>
    %c1_i32_16 = arith.constant 1 : i32
    %59 = vector.broadcast %c1_i32_16 : i32 to vector<10x16x128xi32>
    %60 = arith.cmpi sge, %58, %59 : vector<10x16x128xi32>
    %c16_i32_17 = arith.constant 16 : i32
    %61 = vector.broadcast %c16_i32_17 : i32 to vector<10x16x128xi32>
    %62 = arith.cmpi sle, %58, %61 : vector<10x16x128xi32>
    %63 = arith.andi %60, %62 : vector<10x16x128xi1>
    %cst_18 = arith.constant 0.000000e+00 : f32
    %64 = vector.broadcast %cst_18 : f32 to vector<10x16x128xf32>
    %65 = arith.select %63, %55, %64 : vector<10x16x128xi1>, vector<10x16x128xf32>
    %66 = arith.truncf %65 : vector<10x16x128xf32> to vector<10x16x128xbf16>
    %c0_19 = arith.constant 0 : index
    %c1_20 = arith.constant 1 : index
    %c0_21 = arith.constant 0 : index
    %67 = vector.load %arg9[%c0_19, %c1_20, %c0_21] : memref<10x18x128xbf16, #tpu.memory_space<vmem>>, vector<10x16x128xbf16>
    tpu.vector_store %arg9[%c0_19, %c1_20, %c0_21], %66 {strides = array<i32>} : memref<10x18x128xbf16, #tpu.memory_space<vmem>>, vector<10x16x128xbf16>,
    %cst_22 = arith.constant 0.000000e+00 : bf16
    %68 = vector.broadcast %cst_22 : bf16 to vector<10x1x128xbf16>
    %c0_23 = arith.constant 0 : index
    %c0_24 = arith.constant 0 : index
    %c0_25 = arith.constant 0 : index
    %69 = vector.load %arg9[%c0_23, %c0_24, %c0_25] : memref<10x18x128xbf16, #tpu.memory_space<vmem>>, vector<10x1x128xbf16>
    tpu.vector_store %arg9[%c0_23, %c0_24, %c0_25], %68 {strides = array<i32>} : memref<10x18x128xbf16, #tpu.memory_space<vmem>>, vector<10x1x128xbf16>,
    %c0_26 = arith.constant 0 : index
    %c17 = arith.constant 17 : index
    %c0_27 = arith.constant 0 : index
    %70 = vector.load %arg9[%c0_26, %c17, %c0_27] : memref<10x18x128xbf16, #tpu.memory_space<vmem>>, vector<10x1x128xbf16>
    tpu.vector_store %arg9[%c0_26, %c17, %c0_27], %68 {strides = array<i32>} : memref<10x18x128xbf16, #tpu.memory_space<vmem>>, vector<10x1x128xbf16>,
    %c0_28 = arith.constant 0 : index
    %c0_29 = arith.constant 0 : index
    %c0_30 = arith.constant 0 : index
    %71 = vector.load %arg9[%c0_28, %c0_29, %c0_30] : memref<10x18x128xbf16, #tpu.memory_space<vmem>>, vector<10x18x128xbf16>
    %72 = vector.extract_strided_slice %71 {offsets = [0, 0, 0], sizes = [8, 16, 128], strides = [1, 1, 1]} : vector<10x18x128xbf16> to vector<8x16x128xbf16>
    %73 = vector.extract_strided_slice %71 {offsets = [0, 1, 0], sizes = [8, 16, 128], strides = [1, 1, 1]} : vector<10x18x128xbf16> to vector<8x16x128xbf16>
    %74 = vector.extract_strided_slice %71 {offsets = [0, 2, 0], sizes = [8, 16, 128], strides = [1, 1, 1]} : vector<10x18x128xbf16> to vector<8x16x128xbf16>
    %75 = vector.extract_strided_slice %71 {offsets = [1, 0, 0], sizes = [8, 16, 128], strides = [1, 1, 1]} : vector<10x18x128xbf16> to vector<8x16x128xbf16>
    %76 = vector.extract_strided_slice %71 {offsets = [1, 1, 0], sizes = [8, 16, 128], strides = [1, 1, 1]} : vector<10x18x128xbf16> to vector<8x16x128xbf16>
    %77 = vector.extract_strided_slice %71 {offsets = [1, 2, 0], sizes = [8, 16, 128], strides = [1, 1, 1]} : vector<10x18x128xbf16> to vector<8x16x128xbf16>
    %78 = vector.extract_strided_slice %71 {offsets = [2, 0, 0], sizes = [8, 16, 128], strides = [1, 1, 1]} : vector<10x18x128xbf16> to vector<8x16x128xbf16>
    %79 = vector.extract_strided_slice %71 {offsets = [2, 1, 0], sizes = [8, 16, 128], strides = [1, 1, 1]} : vector<10x18x128xbf16> to vector<8x16x128xbf16>
    %80 = vector.extract_strided_slice %71 {offsets = [2, 2, 0], sizes = [8, 16, 128], strides = [1, 1, 1]} : vector<10x18x128xbf16> to vector<8x16x128xbf16>
    %81 = tpu.concatenate %72, %73, %74, %75, %76, %77, %78, %79, %80 in 2 : vector<8x16x128xbf16>, vector<8x16x128xbf16>, vector<8x16x128xbf16>, vector<8x16x128xbf16>, vector<8x16x128xbf16>, vector<8x16x128xbf16>, vector<8x16x128xbf16>, vector<8x16x128xbf16>, vector<8x16x128xbf16> -> vector<8x16x1152xbf16>
    %82 = vector.shape_cast %81 : vector<8x16x1152xbf16> to vector<128x1152xbf16>
    %c0_31 = arith.constant 0 : index
    %c0_32 = arith.constant 0 : index
    %83 = vector.load %arg4[%c0_31, %c0_32] : memref<1152x128xbf16, #tpu.memory_space<vmem>>, vector<1152x128xbf16>
    %cst_33 = arith.constant dense<0.000000e+00> : vector<128x128xf32>
    %84 = tpu.matmul %82, %83, %cst_33 {dimension_numbers = #tpu.dot_dimension_numbers<[1], [0], [0], [1], [0, 0, 1, 1], [], []>} : vector<128x1152xbf16>, vector<1152x128xbf16>, vector<128x128xf32> -> vector<128x128xf32>
    %c3 = arith.constant 3 : index
    %c0_34 = arith.constant 0 : index
    %85 = vector.load %arg7[%c3, %c0_34] : memref<8x128xf32, #tpu.memory_space<vmem>>, vector<1x128xf32>
    %86 = vector.broadcast %85 : vector<1x128xf32> to vector<128x128xf32>
    %87 = arith.addf %84, %86 : vector<128x128xf32>
    %88 = vector.extract_strided_slice %2 {offsets = [2, 1, 0], sizes = [8, 16, 128], strides = [1, 1, 1]} : vector<12x18x128xf32> to vector<8x16x128xf32>
    %89 = arith.truncf %88 : vector<8x16x128xf32> to vector<8x16x128xbf16>
    %90 = vector.shape_cast %89 : vector<8x16x128xbf16> to vector<128x128xbf16>
    %c0_35 = arith.constant 0 : index
    %c0_36 = arith.constant 0 : index
    %91 = vector.load %arg5[%c0_35, %c0_36] : memref<128x128xbf16, #tpu.memory_space<vmem>>, vector<128x128xbf16>
    %cst_37 = arith.constant dense<0.000000e+00> : vector<128x128xf32>
    %92 = tpu.matmul %90, %91, %cst_37 {dimension_numbers = #tpu.dot_dimension_numbers<[1], [0], [0], [1], [0, 0, 1, 1], [], []>} : vector<128x128xbf16>, vector<128x128xbf16>, vector<128x128xf32> -> vector<128x128xf32>
    %c4 = arith.constant 4 : index
    %c0_38 = arith.constant 0 : index
    %93 = vector.load %arg7[%c4, %c0_38] : memref<8x128xf32, #tpu.memory_space<vmem>>, vector<1x128xf32>
    %94 = vector.broadcast %93 : vector<1x128xf32> to vector<128x128xf32>
    %95 = arith.addf %92, %94 : vector<128x128xf32>
    %c5 = arith.constant 5 : index
    %c0_39 = arith.constant 0 : index
    %96 = vector.load %arg7[%c5, %c0_39] : memref<8x128xf32, #tpu.memory_space<vmem>>, vector<1x128xf32>
    %97 = vector.broadcast %96 : vector<1x128xf32> to vector<128x128xf32>
    %98 = arith.mulf %95, %97 : vector<128x128xf32>
    %c6 = arith.constant 6 : index
    %c0_40 = arith.constant 0 : index
    %99 = vector.load %arg7[%c6, %c0_40] : memref<8x128xf32, #tpu.memory_space<vmem>>, vector<1x128xf32>
    %100 = vector.broadcast %99 : vector<1x128xf32> to vector<128x128xf32>
    %101 = arith.addf %98, %100 : vector<128x128xf32>
    %102 = arith.addf %87, %101 : vector<128x128xf32>
    %103 = vector.shape_cast %102 : vector<128x128xf32> to vector<8x16x128xf32>
    %c0_41 = arith.constant 0 : index
    %c0_42 = arith.constant 0 : index
    %c0_43 = arith.constant 0 : index
    %c0_44 = arith.constant 0 : index
    %104 = vector.load %arg8[%c0_41, %c0_42, %c0_43, %c0_44] : memref<1x8x16x128xf32, #tpu.memory_space<vmem>>, vector<1x8x16x128xf32>
    %105 = vector.shape_cast %104 : vector<1x8x16x128xf32> to vector<8x16x128xf32>
    %106 = vector.shape_cast %103 : vector<8x16x128xf32> to vector<1x8x16x128xf32>
    tpu.vector_store %arg8[%c0_41, %c0_42, %c0_43, %c0_44], %106 {strides = array<i32>} : memref<1x8x16x128xf32, #tpu.memory_space<vmem>>, vector<1x8x16x128xf32>,
    return
  }
  func.func @transform_0(%arg0: i32, %arg1: i32) -> (i32, i32, i32, i32) {
    %c2_i32 = arith.constant 2 : i32
    %0 = arith.muli %arg0, %c2_i32 : i32
    %1 = arith.addi %0, %arg1 : i32
    %c0_i32 = arith.constant 0 : i32
    %c0_i32_0 = arith.constant 0 : i32
    %c0_i32_1 = arith.constant 0 : i32
    %c0_i32_2 = arith.constant 0 : i32
    return %1, %c0_i32, %c0_i32_0, %c0_i32_1 : i32, i32, i32, i32
  }
  func.func @transform_1(%arg0: i32, %arg1: i32) -> (i32, i32) {
    %c0_i32 = arith.constant 0 : i32
    %c0_i32_0 = arith.constant 0 : i32
    %c0_i32_1 = arith.constant 0 : i32
    return %c0_i32, %c0_i32_0 : i32, i32
  }
  func.func @transform_2(%arg0: i32, %arg1: i32) -> (i32, i32) {
    %c0_i32 = arith.constant 0 : i32
    %c0_i32_0 = arith.constant 0 : i32
    %c0_i32_1 = arith.constant 0 : i32
    return %c0_i32, %c0_i32_0 : i32, i32
  }
  func.func @transform_3(%arg0: i32, %arg1: i32) -> (i32, i32) {
    %c0_i32 = arith.constant 0 : i32
    %c0_i32_0 = arith.constant 0 : i32
    %c0_i32_1 = arith.constant 0 : i32
    return %c0_i32, %c0_i32_0 : i32, i32
  }
  func.func @transform_4(%arg0: i32, %arg1: i32) -> (i32, i32) {
    %c0_i32 = arith.constant 0 : i32
    %c0_i32_0 = arith.constant 0 : i32
    %c0_i32_1 = arith.constant 0 : i32
    return %c0_i32, %c0_i32_0 : i32, i32
  }
  func.func @transform_5(%arg0: i32, %arg1: i32) -> (i32, i32) {
    %c0_i32 = arith.constant 0 : i32
    %c0_i32_0 = arith.constant 0 : i32
    %c0_i32_1 = arith.constant 0 : i32
    return %c0_i32, %c0_i32_0 : i32, i32
  }
  func.func @transform_6(%arg0: i32, %arg1: i32) -> (i32, i32, i32, i32) {
    %c0_i32 = arith.constant 0 : i32
    %c0_i32_0 = arith.constant 0 : i32
    %c0_i32_1 = arith.constant 0 : i32
    return %arg0, %arg1, %c0_i32, %c0_i32_0 : i32, i32, i32, i32
  }
}

</mosaic_0001>

<llo_original>
// kernel: tpu_custom_call.1
$region0: #{tpu_custom_call.1}
  #allocation0 [shape = 'u32[]', space=smem, size = 0x4, offset = 0x4, fixed_abs, tag = 'smem constant byte address 0x4 - core index']
  #allocation1 [shape = 'u32[72,128]{1,0:T(1,128)}', space=vmem, size = 0x9000, scoped, tag = 'internal scratch']
  #allocation2 [shape = 'bf16[10,18,128]{2,1,0:T(8,128)(2,1)}', space=vmem, size = 0xf000, scoped, tag = 'scratch operand']
  %s0 = inlined_call_operand.vmem [shape: f32[4,12,18,128], index: 0, kind: input, shape index: {}]
  %s1 = inlined_call_operand.vmem [shape: bf16[1152,128], index: 1, kind: input, shape index: {}]
  %s2 = inlined_call_operand.vmem [shape: bf16[1152,128], index: 2, kind: input, shape index: {}]
  %s3 = inlined_call_operand.vmem [shape: bf16[128,128], index: 3, kind: input, shape index: {}]
  %s4 = inlined_call_operand.vmem [shape: f32[2,128], index: 4, kind: input, shape index: {}]
  %s5 = inlined_call_operand.vmem [shape: f32[8,128], index: 5, kind: input, shape index: {}]
  %s6 = inlined_call_operand.hbm [shape: f32[2,16,16,128], index: 6, kind: output, shape index: {}]
  %s7 = sld [smem:[#allocation0]]
  $region57: #{tpu_custom_call.1} parent=0
    _
  %s9 = ssub.s32 1, %s7
  %s10 = scalar_select 0, %s9, %s7
  $region1: #{tpu_custom_call.1} parent=0
    #allocation3 [shape = 'u8[131072]{0}', space=vmem, size = 0x20000, scoped, tag = 'output window, operand 0']
    #allocation4 [shape = 's32[2]{0}', space=sflag, size = 0x8, scoped, tag = 'scoped memory for tpu_custom_call.1']
    %11 = vsyncpa [#allocation4], 0
    %s12 = scalar_lea.sflag [#allocation4], 1
    %13 = vsyncpa %s12, 0
    loop: start=0, step=1, limit=6
    $region2: #{tpu_custom_call.1} parent=1 // loop_pre_header
      _
    $region3: #{tpu_custom_call.1} parent=1 // loop_header
      %s15 = sphi 0, %s19
      %p16 = scmp.ge.s32.totalorder %s15, 6
      %s22 = sphi 0, %s34
      %s23 = sphi 0, %s30
      %s24 = sphi 0, %s22
      %s25 = sphi 0, %s23
      %s26 = sphi 0, %s24
      %s27 = sphi 0, %s25
      %s41 = sphi 0, %s43
      %s44 = sphi 0, %s41
      %s45 = sphi 0, %s44
      %s61 = sphi 0, %s45
      %s65 = sphi 0, %s65
      %s67 = sphi 0, %s65
      %s68 = sphi 0, %s67
      %s82 = sphi 0, %s68
      %s86 = sphi 0, %s86
      %s88 = sphi 0, %s86
      %s89 = sphi 0, %s88
      %s103 = sphi 0, %s89
      %s107 = sphi 0, %s107
      %s109 = sphi 0, %s107
      %s110 = sphi 0, %s109
      %s124 = sphi 0, %s110
      %s128 = sphi 0, %s128
      %s130 = sphi 0, %s128
      %s131 = sphi 0, %s130
      %s145 = sphi 0, %s131
      %s149 = sphi 0, %s149
      %s151 = sphi 0, %s149
      %s152 = sphi 0, %s151
      %s166 = sphi 0, %s152
      %s174 = sphi 0, %s176
      %s177 = sphi 0, %s174
      %s178 = sphi 0, %s177
      %s194 = sphi 0, %s178
    $region4: #{tpu_custom_call.1} parent=1 // loop_header_branch
      %18 = sbr.rel (%p16) target = $region8
    $region5: #{tpu_custom_call.1} parent=1 // loop_body
      %s20 = ssub.s32 %s15, 1
      %s21 = ssub.s32 %s15, 2
      %s28 = sadd.s32 1, %s23
      %p29 = scmp.ge.s32.totalorder %s28, 2
      %s30 = scalar_select %p29, 0, %s28
      %s31 = sadd.s32 1, %s22
      %s32 = scalar_select %p29, %s31, %s22
      %p33 = scmp.ge.s32.totalorder %s32, 2
      %s34 = scalar_select %p33, 0, %s32
      %s35 = smul.u32 %s22, 2
      %s36 = sadd.s32 %s35, %s23
      %s37 = smul.u32 %s34, 2
      %s38 = sadd.s32 %s37, %s30
      %s39 = ssub.s32 %s36, %s38
      %p40 = scmp.eq.s32.totalorder %s39, 0
      %s42 = sadd.s32 %s41, 1
      %s43 = scalar_select %p40, %s41, %s42
      %p46 = pneg %p40
      %p47 = scmp.eq.s32.totalorder %s15, 3
      %p48 = por %p46, %p47
      %p49 = scmp.ne.s32.totalorder %s41, %s44
      %p50 = scmp.eq.s32.totalorder %s15, 0
      %p51 = por %p49, %p50
      %p52 = scmp.ne.s32.totalorder %s41, %s44
      %p53 = scmp.eq.s32.totalorder %s20, 3
      %p54 = por %p52, %p53
      %p55 = scmp.ne.s32.totalorder %s44, %s45
      %p56 = scmp.eq.s32.totalorder %s20, 0
      %p57 = por %p55, %p56
      %p58 = scmp.ne.s32.totalorder %s44, %s45
      %p59 = scmp.eq.s32.totalorder %s21, 3
      %p60 = por %p58, %p59
      %p62 = scmp.ne.s32.totalorder %s45, %s61
      %p63 = scmp.eq.s32.totalorder %s21, 0
      %p64 = por %p62, %p63
      %s66 = sadd.s32 %s65, 1
      %p69 = scmp.eq.s32.totalorder %s15, 3
      %p70 = scmp.ne.s32.totalorder %s65, %s67
      %p71 = scmp.eq.s32.totalorder %s15, 0
      %p72 = por %p70, %p71
      %p73 = scmp.ne.s32.totalorder %s65, %s67
      %p74 = scmp.eq.s32.totalorder %s20, 3
      %p75 = por %p73, %p74
      %p76 = scmp.ne.s32.totalorder %s67, %s68
      %p77 = scmp.eq.s32.totalorder %s20, 0
      %p78 = por %p76, %p77
      %p79 = scmp.ne.s32.totalorder %s67, %s68
      %p80 = scmp.eq.s32.totalorder %s21, 3
      %p81 = por %p79, %p80
      %p83 = scmp.ne.s32.totalorder %s68, %s82
      %p84 = scmp.eq.s32.totalorder %s21, 0
      %p85 = por %p83, %p84
      %s87 = sadd.s32 %s86, 1
      %p90 = scmp.eq.s32.totalorder %s15, 3
      %p91 = scmp.ne.s32.totalorder %s86, %s88
      %p92 = scmp.eq.s32.totalorder %s15, 0
      %p93 = por %p91, %p92
      %p94 = scmp.ne.s32.totalorder %s86, %s88
      %p95 = scmp.eq.s32.totalorder %s20, 3
      %p96 = por %p94, %p95
      %p97 = scmp.ne.s32.totalorder %s88, %s89
      %p98 = scmp.eq.s32.totalorder %s20, 0
      %p99 = por %p97, %p98
      %p100 = scmp.ne.s32.totalorder %s88, %s89
      %p101 = scmp.eq.s32.totalorder %s21, 3
      %p102 = por %p100, %p101
      %p104 = scmp.ne.s32.totalorder %s89, %s103
      %p105 = scmp.eq.s32.totalorder %s21, 0
      %p106 = por %p104, %p105
      %s108 = sadd.s32 %s107, 1
      %p111 = scmp.eq.s32.totalorder %s15, 3
      %p112 = scmp.ne.s32.totalorder %s107, %s109
      %p113 = scmp.eq.s32.totalorder %s15, 0
      %p114 = por %p112, %p113
      %p115 = scmp.ne.s32.totalorder %s107, %s109
      %p116 = scmp.eq.s32.totalorder %s20, 3
      %p117 = por %p115, %p116
      %p118 = scmp.ne.s32.totalorder %s109, %s110
      %p119 = scmp.eq.s32.totalorder %s20, 0
      %p120 = por %p118, %p119
      %p121 = scmp.ne.s32.totalorder %s109, %s110
      %p122 = scmp.eq.s32.totalorder %s21, 3
      %p123 = por %p121, %p122
      %p125 = scmp.ne.s32.totalorder %s110, %s124
      %p126 = scmp.eq.s32.totalorder %s21, 0
      %p127 = por %p125, %p126
      %s129 = sadd.s32 %s128, 1
      %p132 = scmp.eq.s32.totalorder %s15, 3
      %p133 = scmp.ne.s32.totalorder %s128, %s130
      %p134 = scmp.eq.s32.totalorder %s15, 0
      %p135 = por %p133, %p134
      %p136 = scmp.ne.s32.totalorder %s128, %s130
      %p137 = scmp.eq.s32.totalorder %s20, 3
      %p138 = por %p136, %p137
      %p139 = scmp.ne.s32.totalorder %s130, %s131
      %p140 = scmp.eq.s32.totalorder %s20, 0
      %p141 = por %p139, %p140
      %p142 = scmp.ne.s32.totalorder %s130, %s131
      %p143 = scmp.eq.s32.totalorder %s21, 3
      %p144 = por %p142, %p143
      %p146 = scmp.ne.s32.totalorder %s131, %s145
      %p147 = scmp.eq.s32.totalorder %s21, 0
      %p148 = por %p146, %p147
      %s150 = sadd.s32 %s149, 1
      %p153 = scmp.eq.s32.totalorder %s15, 3
      %p154 = scmp.ne.s32.totalorder %s149, %s151
      %p155 = scmp.eq.s32.totalorder %s15, 0
      %p156 = por %p154, %p155
      %p157 = scmp.ne.s32.totalorder %s149, %s151
      %p158 = scmp.eq.s32.totalorder %s20, 3
      %p159 = por %p157, %p158
      %p160 = scmp.ne.s32.totalorder %s151, %s152
      %p161 = scmp.eq.s32.totalorder %s20, 0
      %p162 = por %p160, %p161
      %p163 = scmp.ne.s32.totalorder %s151, %s152
      %p164 = scmp.eq.s32.totalorder %s21, 3
      %p165 = por %p163, %p164
      %p167 = scmp.ne.s32.totalorder %s152, %s166
      %p168 = scmp.eq.s32.totalorder %s21, 0
      %p169 = por %p167, %p168
      %s170 = ssub.s32 %s22, %s34
      %s171 = ssub.s32 %s23, %s30
      %s172 = sor.u32 %s170, %s171
      %p173 = scmp.eq.s32.totalorder %s172, 0
      %s175 = sadd.s32 %s174, 1
      %s176 = scalar_select %p173, %s174, %s175
      %p179 = pneg %p173
      %p180 = scmp.eq.s32.totalorder %s15, 3
      %p181 = por %p179, %p180
      %p182 = scmp.ne.s32.totalorder %s174, %s177
      %p183 = scmp.eq.s32.totalorder %s15, 0
      %p184 = por %p182, %p183
      %p185 = scmp.ne.s32.totalorder %s174, %s177
      %p186 = scmp.eq.s32.totalorder %s20, 3
      %p187 = por %p185, %p186
      %p188 = scmp.ne.s32.totalorder %s177, %s178
      %p189 = scmp.eq.s32.totalorder %s20, 0
      %p190 = por %p188, %p189
      %p191 = scmp.ne.s32.totalorder %s177, %s178
      %p192 = scmp.eq.s32.totalorder %s21, 3
      %p193 = por %p191, %p192
      %p195 = scmp.ne.s32.totalorder %s178, %s194
      %p196 = scmp.eq.s32.totalorder %s21, 0
      %p197 = por %p195, %p196
      %p198 = scmp.le.s32.totalorder 1, %s15
      %p199 = scmp.lt.s32.totalorder %s15, 5
      %p200 = pnand %p198, %p199
      %p201 = pneg %p200
      // Predicated region
      $region9: #{tpu_custom_call.1} parent=5 // pred_check
        _
      $region10: #{tpu_custom_call.1} parent=5 // pred_check_branch
        %203 = sbr.rel (%p200) target = $region12
      $region11: #{tpu_custom_call.1} parent=5 // pred_region
        %s204 = ssub.s32 %s15, 1
        // Predicated region
        $region13: #{tpu_custom_call.1} parent=11 // pred_check
          %p205 = pneg %p78
        $region14: #{tpu_custom_call.1} parent=11 // pred_check_branch
          %207 = sbr.rel (%p205) target = $region16
        $region15: #{tpu_custom_call.1} parent=11 // pred_region
          _
        $region16: #{tpu_custom_call.1} parent=11 // pred_fallthru
          _
        // Predicated region
        $region17: #{tpu_custom_call.1} parent=11 // pred_check
          %p208 = pneg %p99
        $region18: #{tpu_custom_call.1} parent=11 // pred_check_branch
          %210 = sbr.rel (%p208) target = $region20
        $region19: #{tpu_custom_call.1} parent=11 // pred_region
          _
        $region20: #{tpu_custom_call.1} parent=11 // pred_fallthru
          _
        // Predicated region
        $region21: #{tpu_custom_call.1} parent=11 // pred_check
          %p211 = pneg %p120
        $region22: #{tpu_custom_call.1} parent=11 // pred_check_branch
          %213 = sbr.rel (%p211) target = $region24
        $region23: #{tpu_custom_call.1} parent=11 // pred_region
          _
        $region24: #{tpu_custom_call.1} parent=11 // pred_fallthru
          _
        // Predicated region
        $region25: #{tpu_custom_call.1} parent=11 // pred_check
          %p214 = pneg %p141
        $region26: #{tpu_custom_call.1} parent=11 // pred_check_branch
          %216 = sbr.rel (%p214) target = $region28
        $region27: #{tpu_custom_call.1} parent=11 // pred_region
          _
        $region28: #{tpu_custom_call.1} parent=11 // pred_fallthru
          _
        // Predicated region
        $region29: #{tpu_custom_call.1} parent=11 // pred_check
          %p217 = pneg %p162
        $region30: #{tpu_custom_call.1} parent=11 // pred_check_branch
          %219 = sbr.rel (%p217) target = $region32
        $region31: #{tpu_custom_call.1} parent=11 // pred_region
          _
        $region32: #{tpu_custom_call.1} parent=11 // pred_fallthru
          _
      $region12: #{tpu_custom_call.1} parent=5 // pred_fallthru
        _
      %p220 = scmp.lt.s32.totalorder %s15, 4
      // Predicated region
      $region33: #{tpu_custom_call.1} parent=5 // pred_check
        %p221 = pneg %p220
      $region34: #{tpu_custom_call.1} parent=5 // pred_check_branch
        %223 = sbr.rel (%p221) target = $region36
      $region35: #{tpu_custom_call.1} parent=5 // pred_region
        // Predicated region
        $region37: #{tpu_custom_call.1} parent=35 // pred_check
          %p224 = pneg %p51
        $region38: #{tpu_custom_call.1} parent=35 // pred_check_branch
          %226 = sbr.rel (%p224) target = $region40
        $region39: #{tpu_custom_call.1} parent=35 // pred_region
          %s227 = smul.u32 %s22, 2
          %s228 = sadd.s32 %s227, %s23
          %p229 = scmp.lt.s32.totalorder %s228, 3
          %s230 = scalar_select %p229, %s228, 3
          %s231 = smul.addr %s230, 36
          %s232 = smul.addr %s231, 8
          %s233 = scalar_lea.vmem %s0, %s232
          %s234 = smul.u32 %s22, 2
          %s235 = sadd.s32 %s234, %s23
        $region40: #{tpu_custom_call.1} parent=35 // pred_fallthru
          _
      $region36: #{tpu_custom_call.1} parent=5 // pred_fallthru
        _
      %p236 = scmp.le.s32.totalorder 1, %s15
      %p237 = scmp.lt.s32.totalorder %s15, 5
      %p238 = pnand %p236, %p237
      %p239 = pneg %p238
      // Predicated region
      $region41: #{tpu_custom_call.1} parent=5 // pred_check
        _
      $region42: #{tpu_custom_call.1} parent=5 // pred_check_branch
        %241 = sbr.rel (%p238) target = $region44
      $region43: #{tpu_custom_call.1} parent=5 // pred_region
        %s242 = ssub.s32 %s15, 1
        %s243 = smul.u32 %s24, 2
        %s244 = sadd.s32 %s243, %s25
        %p245 = scmp.lt.s32.totalorder %s244, 3
        %s246 = scalar_select %p245, %s244, 3
        %s247 = smul.addr %s246, 36
        %s248 = smul.addr %s247, 8
        %s249 = scalar_lea.vmem %s0, %s248
        %p250 = pneg %p57
        %p251 = pneg %p54
        %p252 = pneg %p78
        %p253 = pneg %p75
        %p254 = pneg %p99
        %p255 = pneg %p96
        %p256 = pneg %p120
        %p257 = pneg %p117
        %p258 = pneg %p141
        %p259 = pneg %p138
        %p260 = pneg %p162
        %p261 = pneg %p159
        %p262 = pneg %p190
        %p263 = pneg %p187
        %s264 = sand.u32 %s177, 1
        %s265 = scalar_lea.sflag [#allocation4], %s264
        %s266 = sand.u32 %s177, 1
        %s267 = smul.addr %s266, 128
        %s268 = scalar_lea.vmem [#allocation3], %s267
        %s269 = smul.u32 %s24, 2
        %s270 = sadd.s32 %s269, %s25
        %p271 = scmp.lt.s32.totalorder %s270, 3
        %s272 = scalar_select %p271, %s270, 3
        %s273 = smul.addr %s272, 36
        %s274 = smul.addr %s273, 8
        %s275 = scalar_lea.vmem %s0, %s274
        %s276 = smul.u32 %s24, 2
        %s277 = sadd.s32 %s276, %s25
        %s278 = smul.u32 8, %s25
        %s280 = smul.u32 %s25, 8
        %v281 = vld [vmem:[%s275] sm:$0xff]
        %v282 = vld [vmem:[%s275 + $0x8] sm:$0xff]
        %v283 = vld [vmem:[%s275 + $0x10] sm:$0x3]
        %v284 = vld [vmem:[%s275 + $0x18] sm:$0xff]
        %v285 = vld [vmem:[%s275 + $0x20] sm:$0xff]
        %v286 = vld [vmem:[%s275 + $0x28] sm:$0x3]
        %v287 = vld [vmem:[%s275 + $0x30] sm:$0xff]
        %v288 = vld [vmem:[%s275 + $0x38] sm:$0xff]
        %v289 = vld [vmem:[%s275 + $0x40] sm:$0x3]
        %v290 = vld [vmem:[%s275 + $0x48] sm:$0xff]
        %v291 = vld [vmem:[%s275 + $0x50] sm:$0xff]
        %v292 = vld [vmem:[%s275 + $0x58] sm:$0x3]
        %v293 = vld [vmem:[%s275 + $0x60] sm:$0xff]
        %v294 = vld [vmem:[%s275 + $0x68] sm:$0xff]
        %v295 = vld [vmem:[%s275 + $0x70] sm:$0x3]
        %v296 = vld [vmem:[%s275 + $0x78] sm:$0xff]
        %v297 = vld [vmem:[%s275 + $0x80] sm:$0xff]
        %v298 = vld [vmem:[%s275 + $0x88] sm:$0x3]
        %v299 = vld [vmem:[%s275 + $0x90] sm:$0xff]
        %v300 = vld [vmem:[%s275 + $0x98] sm:$0xff]
        %v301 = vld [vmem:[%s275 + $0xa0] sm:$0x3]
        %v302 = vld [vmem:[%s275 + $0xa8] sm:$0xff]
        %v303 = vld [vmem:[%s275 + $0xb0] sm:$0xff]
        %v304 = vld [vmem:[%s275 + $0xb8] sm:$0x3]
        %v305 = vld [vmem:[%s275 + $0xc0] sm:$0xff]
        %v306 = vld [vmem:[%s275 + $0xc8] sm:$0xff]
        %v307 = vld [vmem:[%s275 + $0xd0] sm:$0x3]
        %v308 = vld [vmem:[%s275 + $0xd8] sm:$0xff]
        %v309 = vld [vmem:[%s275 + $0xe0] sm:$0xff]
        %v310 = vld [vmem:[%s275 + $0xe8] sm:$0x3]
        %v311 = vld [vmem:[%s275 + $0xf0] sm:$0xff]
        %v312 = vld [vmem:[%s275 + $0xf8] sm:$0xff]
        %v313 = vld [vmem:[%s275 + $0x100] sm:$0x3]
        %v314 = vld [vmem:[%s275 + $0x108] sm:$0xff]
        %v315 = vld [vmem:[%s275 + $0x110] sm:$0xff]
        %v316 = vld [vmem:[%s275 + $0x118] sm:$0x3]
        %v317 = vld [vmem:[%s4] sm:$0x1]
        %v318 = vld [vmem:[%s4 + $0x1] sm:$0x1]
        %v319 = vmax.f32 %v281, 0.0
        %v320 = vmax.f32 %v282, 0.0
        %v321 = vmax.f32 %v283, 0.0
        %v322 = vmax.f32 %v284, 0.0
        %v323 = vmax.f32 %v285, 0.0
        %v324 = vmax.f32 %v286, 0.0
        %v325 = vmax.f32 %v287, 0.0
        %v326 = vmax.f32 %v288, 0.0
        %v327 = vmax.f32 %v289, 0.0
        %v328 = vmax.f32 %v290, 0.0
        %v329 = vmax.f32 %v291, 0.0
        %v330 = vmax.f32 %v292, 0.0
        %v331 = vmax.f32 %v293, 0.0
        %v332 = vmax.f32 %v294, 0.0
        %v333 = vmax.f32 %v295, 0.0
        %v334 = vmax.f32 %v296, 0.0
        %v335 = vmax.f32 %v297, 0.0
        %v336 = vmax.f32 %v298, 0.0
        %v337 = vmax.f32 %v299, 0.0
        %v338 = vmax.f32 %v300, 0.0
        %v339 = vmax.f32 %v301, 0.0
        %v340 = vmax.f32 %v302, 0.0
        %v341 = vmax.f32 %v303, 0.0
        %v342 = vmax.f32 %v304, 0.0
        %v343 = vmax.f32 %v305, 0.0
        %v344 = vmax.f32 %v306, 0.0
        %v345 = vmax.f32 %v307, 0.0
        %v346 = vmax.f32 %v308, 0.0
        %v347 = vmax.f32 %v309, 0.0
        %v348 = vmax.f32 %v310, 0.0
        %v349 = vmax.f32 %v311, 0.0
        %v350 = vmax.f32 %v312, 0.0
        %v351 = vmax.f32 %v313, 0.0
        %v352 = vmax.f32 %v314, 0.0
        %v353 = vmax.f32 %v315, 0.0
        %v354 = vmax.f32 %v316, 0.0
        %v355 = vperm.slane %v317, 0
        %v356 = vmul.f32 %v319, %v355
        %v357 = vmul.f32 %v320, %v355
        %v358 = vmul.f32 %v321, %v355
        %v359 = vmul.f32 %v322, %v355
        %v360 = vmul.f32 %v323, %v355
        %v361 = vmul.f32 %v324, %v355
        %v362 = vmul.f32 %v325, %v355
        %v363 = vmul.f32 %v326, %v355
        %v364 = vmul.f32 %v327, %v355
        %v365 = vmul.f32 %v328, %v355
        %v366 = vmul.f32 %v329, %v355
        %v367 = vmul.f32 %v330, %v355
        %v368 = vmul.f32 %v331, %v355
        %v369 = vmul.f32 %v332, %v355
        %v370 = vmul.f32 %v333, %v355
        %v371 = vmul.f32 %v334, %v355
        %v372 = vmul.f32 %v335, %v355
        %v373 = vmul.f32 %v336, %v355
        %v374 = vmul.f32 %v337, %v355
        %v375 = vmul.f32 %v338, %v355
        %v376 = vmul.f32 %v339, %v355
        %v377 = vmul.f32 %v340, %v355
        %v378 = vmul.f32 %v341, %v355
        %v379 = vmul.f32 %v342, %v355
        %v380 = vmul.f32 %v343, %v355
        %v381 = vmul.f32 %v344, %v355
        %v382 = vmul.f32 %v345, %v355
        %v383 = vmul.f32 %v346, %v355
        %v384 = vmul.f32 %v347, %v355
        %v385 = vmul.f32 %v348, %v355
        %v386 = vmul.f32 %v349, %v355
        %v387 = vmul.f32 %v350, %v355
        %v388 = vmul.f32 %v351, %v355
        %v389 = vmul.f32 %v352, %v355
        %v390 = vmul.f32 %v353, %v355
        %v391 = vmul.f32 %v354, %v355
        %v392 = vperm.slane %v318, 0
        %v393 = vadd.f32 %v356, %v392
        %v394 = vadd.f32 %v357, %v392
        %v395 = vadd.f32 %v358, %v392
        %v396 = vadd.f32 %v359, %v392
        %v397 = vadd.f32 %v360, %v392
        %v398 = vadd.f32 %v361, %v392
        %v399 = vadd.f32 %v362, %v392
        %v400 = vadd.f32 %v363, %v392
        %v401 = vadd.f32 %v364, %v392
        %v402 = vadd.f32 %v365, %v392
        %v403 = vadd.f32 %v366, %v392
        %v404 = vadd.f32 %v367, %v392
        %v405 = vadd.f32 %v368, %v392
        %v406 = vadd.f32 %v369, %v392
        %v407 = vadd.f32 %v370, %v392
        %v408 = vadd.f32 %v371, %v392
        %v409 = vadd.f32 %v372, %v392
        %v410 = vadd.f32 %v373, %v392
        %v411 = vadd.f32 %v374, %v392
        %v412 = vadd.f32 %v375, %v392
        %v413 = vadd.f32 %v376, %v392
        %v414 = vadd.f32 %v377, %v392
        %v415 = vadd.f32 %v378, %v392
        %v416 = vadd.f32 %v379, %v392
        %v417 = vadd.f32 %v380, %v392
        %v418 = vadd.f32 %v381, %v392
        %v419 = vadd.f32 %v382, %v392
        %v420 = vadd.f32 %v383, %v392
        %v421 = vadd.f32 %v384, %v392
        %v422 = vadd.f32 %v385, %v392
        %v423 = vadd.f32 %v386, %v392
        %v424 = vadd.f32 %v387, %v392
        %v425 = vadd.f32 %v388, %v392
        %v426 = vadd.f32 %v389, %v392
        %v427 = vadd.f32 %v390, %v392
        %v428 = vadd.f32 %v391, %v392
        %v429 = vstv %s280
        %v430 = vadd.s32 %v429, 1
        %v431 = vadd.s32 %v429, 2
        %v432 = vadd.s32 %v429, 3
        %v433 = vadd.s32 %v429, 4
        %v434 = vadd.s32 %v429, 5
        %v435 = vadd.s32 %v429, 6
        %v436 = vadd.s32 %v429, 7
        %v437 = vadd.s32 %v429, 8
        %v438 = vadd.s32 %v429, 9
        %v439 = vadd.s32 %v429, 10
        %v440 = vadd.s32 %v429, 11
        %v441 = vlaneseq
        %v442 = vshrl.u32 %v441, 7
        %v443 = vadd.s32 %v442, 8
        %v444 = vadd.s32 %v442, 16
        %vm445 = vcmp.ge.s32.totalorder %v429, 2
        %vm446 = vcmp.ge.s32.totalorder %v430, 2
        %vm447 = vcmp.ge.s32.totalorder %v431, 2
        %vm448 = vcmp.ge.s32.totalorder %v432, 2
        %vm449 = vcmp.ge.s32.totalorder %v433, 2
        %vm450 = vcmp.ge.s32.totalorder %v434, 2
        %vm451 = vcmp.ge.s32.totalorder %v435, 2
        %vm452 = vcmp.ge.s32.totalorder %v436, 2
        %vm453 = vcmp.ge.s32.totalorder %v437, 2
        %vm454 = vcmp.ge.s32.totalorder %v438, 2
        %vm455 = vcmp.ge.s32.totalorder %v439, 2
        %vm456 = vcmp.ge.s32.totalorder %v440, 2
        %vm457 = vcmp.lt.s32.totalorder %v429, 18
        %vm458 = vcmp.lt.s32.totalorder %v430, 18
        %vm459 = vcmp.lt.s32.totalorder %v431, 18
        %vm460 = vcmp.lt.s32.totalorder %v432, 18
        %vm461 = vcmp.lt.s32.totalorder %v433, 18
        %vm462 = vcmp.lt.s32.totalorder %v434, 18
        %vm463 = vcmp.lt.s32.totalorder %v435, 18
        %vm464 = vcmp.lt.s32.totalorder %v436, 18
        %vm465 = vcmp.lt.s32.totalorder %v437, 18
        %vm466 = vcmp.lt.s32.totalorder %v438, 18
        %vm467 = vcmp.lt.s32.totalorder %v439, 18
        %vm468 = vcmp.lt.s32.totalorder %v440, 18
        %vm469 = vmand %vm445, %vm457
        %vm470 = vmand %vm446, %vm458
        %vm471 = vmand %vm447, %vm459
        %vm472 = vmand %vm448, %vm460
        %vm473 = vmand %vm449, %vm461
        %vm474 = vmand %vm450, %vm462
        %vm475 = vmand %vm451, %vm463
        %vm476 = vmand %vm452, %vm464
        %vm477 = vmand %vm453, %vm465
        %vm478 = vmand %vm454, %vm466
        %vm479 = vmand %vm455, %vm467
        %vm480 = vmand %vm456, %vm468
        %vm481 = vcmp.ge.s32.totalorder %v442, 1
        %vm482 = vcmp.ge.s32.totalorder %v443, 1
        %vm483 = vcmp.ge.s32.totalorder %v444, 1
        %vm484 = vmand %vm469, %vm481
        %vm485 = vmand %vm469, %vm482
        %vm486 = vmand %vm469, %vm483
        %vm487 = vmand %vm470, %vm481
        %vm488 = vmand %vm470, %vm482
        %vm489 = vmand %vm470, %vm483
        %vm490 = vmand %vm471, %vm481
        %vm491 = vmand %vm471, %vm482
        %vm492 = vmand %vm471, %vm483
        %vm493 = vmand %vm472, %vm481
        %vm494 = vmand %vm472, %vm482
        %vm495 = vmand %vm472, %vm483
        %vm496 = vmand %vm473, %vm481
        %vm497 = vmand %vm473, %vm482
        %vm498 = vmand %vm473, %vm483
        %vm499 = vmand %vm474, %vm481
        %vm500 = vmand %vm474, %vm482
        %vm501 = vmand %vm474, %vm483
        %vm502 = vmand %vm475, %vm481
        %vm503 = vmand %vm475, %vm482
        %vm504 = vmand %vm475, %vm483
        %vm505 = vmand %vm476, %vm481
        %vm506 = vmand %vm476, %vm482
        %vm507 = vmand %vm476, %vm483
        %vm508 = vmand %vm477, %vm481
        %vm509 = vmand %vm477, %vm482
        %vm510 = vmand %vm477, %vm483
        %vm511 = vmand %vm478, %vm481
        %vm512 = vmand %vm478, %vm482
        %vm513 = vmand %vm478, %vm483
        %vm514 = vmand %vm479, %vm481
        %vm515 = vmand %vm479, %vm482
        %vm516 = vmand %vm479, %vm483
        %vm517 = vmand %vm480, %vm481
        %vm518 = vmand %vm480, %vm482
        %vm519 = vmand %vm480, %vm483
        %vm520 = vcmp.le.s32.totalorder %v442, 16
        %vm521 = vcmp.le.s32.totalorder %v443, 16
        %vm522 = vcmp.le.s32.totalorder %v444, 16
        %vm523 = vmand %vm484, %vm520
        %vm524 = vmand %vm485, %vm521
        %vm525 = vmand %vm486, %vm522
        %vm526 = vmand %vm487, %vm520
        %vm527 = vmand %vm488, %vm521
        %vm528 = vmand %vm489, %vm522
        %vm529 = vmand %vm490, %vm520
        %vm530 = vmand %vm491, %vm521
        %vm531 = vmand %vm492, %vm522
        %vm532 = vmand %vm493, %vm520
        %vm533 = vmand %vm494, %vm521
        %vm534 = vmand %vm495, %vm522
        %vm535 = vmand %vm496, %vm520
        %vm536 = vmand %vm497, %vm521
        %vm537 = vmand %vm498, %vm522
        %vm538 = vmand %vm499, %vm520
        %vm539 = vmand %vm500, %vm521
        %vm540 = vmand %vm501, %vm522
        %vm541 = vmand %vm502, %vm520
        %vm542 = vmand %vm503, %vm521
        %vm543 = vmand %vm504, %vm522
        %vm544 = vmand %vm505, %vm520
        %vm545 = vmand %vm506, %vm521
        %vm546 = vmand %vm507, %vm522
        %vm547 = vmand %vm508, %vm520
        %vm548 = vmand %vm509, %vm521
        %vm549 = vmand %vm510, %vm522
        %vm550 = vmand %vm511, %vm520
        %vm551 = vmand %vm512, %vm521
        %vm552 = vmand %vm513, %vm522
        %vm553 = vmand %vm514, %vm520
        %vm554 = vmand %vm515, %vm521
        %vm555 = vmand %vm516, %vm522
        %vm556 = vmand %vm517, %vm520
        %vm557 = vmand %vm518, %vm521
        %vm558 = vmand %vm519, %vm522
        %v559 = vsel %vm523, %v393, 0.0
        %v560 = vsel %vm524, %v394, 0.0
        %v561 = vsel %vm525, %v395, 0.0
        %v562 = vsel %vm526, %v396, 0.0
        %v563 = vsel %vm527, %v397, 0.0
        %v564 = vsel %vm528, %v398, 0.0
        %v565 = vsel %vm529, %v399, 0.0
        %v566 = vsel %vm530, %v400, 0.0
        %v567 = vsel %vm531, %v401, 0.0
        %v568 = vsel %vm532, %v402, 0.0
        %v569 = vsel %vm533, %v403, 0.0
        %v570 = vsel %vm534, %v404, 0.0
        %v571 = vsel %vm535, %v405, 0.0
        %v572 = vsel %vm536, %v406, 0.0
        %v573 = vsel %vm537, %v407, 0.0
        %v574 = vsel %vm538, %v408, 0.0
        %v575 = vsel %vm539, %v409, 0.0
        %v576 = vsel %vm540, %v410, 0.0
        %v577 = vsel %vm541, %v411, 0.0
        %v578 = vsel %vm542, %v412, 0.0
        %v579 = vsel %vm543, %v413, 0.0
        %v580 = vsel %vm544, %v414, 0.0
        %v581 = vsel %vm545, %v415, 0.0
        %v582 = vsel %vm546, %v416, 0.0
        %v583 = vsel %vm547, %v417, 0.0
        %v584 = vsel %vm548, %v418, 0.0
        %v585 = vsel %vm549, %v419, 0.0
        %v586 = vsel %vm550, %v420, 0.0
        %v587 = vsel %vm551, %v421, 0.0
        %v588 = vsel %vm552, %v422, 0.0
        %v589 = vsel %vm553, %v423, 0.0
        %v590 = vsel %vm554, %v424, 0.0
        %v591 = vsel %vm555, %v425, 0.0
        %v592 = vsel %vm556, %v426, 0.0
        %v593 = vsel %vm557, %v427, 0.0
        %v594 = vsel %vm558, %v428, 0.0
        %v595 = vpack.c.bf16 %v559, %v559
        %v596 = vpack.c.bf16 %v560, %v560
        %v597 = vpack.c.bf16 %v561, %v561
        %v598 = vpack.c.bf16 %v562, %v562
        %v599 = vpack.c.bf16 %v563, %v563
        %v600 = vpack.c.bf16 %v564, %v564
        %v601 = vpack.c.bf16 %v565, %v565
        %v602 = vpack.c.bf16 %v566, %v566
        %v603 = vpack.c.bf16 %v567, %v567
        %v604 = vpack.c.bf16 %v568, %v568
        %v605 = vpack.c.bf16 %v569, %v569
        %v606 = vpack.c.bf16 %v570, %v570
        %v607 = vpack.c.bf16 %v571, %v571
        %v608 = vpack.c.bf16 %v572, %v572
        %v609 = vpack.c.bf16 %v573, %v573
        %v610 = vpack.c.bf16 %v574, %v574
        %v611 = vpack.c.bf16 %v575, %v575
        %v612 = vpack.c.bf16 %v576, %v576
        %v613 = vpack.c.bf16 %v577, %v577
        %v614 = vpack.c.bf16 %v578, %v578
        %v615 = vpack.c.bf16 %v579, %v579
        %v616 = vpack.c.bf16 %v580, %v580
        %v617 = vpack.c.bf16 %v581, %v581
        %v618 = vpack.c.bf16 %v582, %v582
        %v619 = vpack.c.bf16 %v583, %v583
        %v620 = vpack.c.bf16 %v584, %v584
        %v621 = vpack.c.bf16 %v585, %v585
        %v622 = vpack.c.bf16 %v586, %v586
        %v623 = vpack.c.bf16 %v587, %v587
        %v624 = vpack.c.bf16 %v588, %v588
        %v625 = vpack.c.bf16 %v589, %v589
        %v626 = vpack.c.bf16 %v590, %v590
        %v627 = vpack.c.bf16 %v591, %v591
        %v628 = vpack.c.bf16 %v592, %v592
        %v629 = vpack.c.bf16 %v593, %v593
        %v630 = vpack.c.bf16 %v594, %v594
        %v651 = vunpack.c.l.b16 %v595
        %v652 = vunpack.c.l.b16 %v596
        %v653 = vunpack.c.l.b16 %v598
        %v654 = vunpack.c.l.b16 %v599
        %v655 = vunpack.c.l.b16 %v601
        %v656 = vunpack.c.l.b16 %v602
        %v657 = vunpack.c.l.b16 %v604
        %v658 = vunpack.c.l.b16 %v605
        %v659 = vunpack.c.l.b16 %v607
        %v660 = vunpack.c.l.b16 %v608
        %v661 = vunpack.c.l.b16 %v610
        %v662 = vunpack.c.l.b16 %v611
        %v663 = vunpack.c.l.b16 %v613
        %v664 = vunpack.c.l.b16 %v614
        %v665 = vunpack.c.l.b16 %v616
        %v666 = vunpack.c.l.b16 %v617
        %v667 = vunpack.c.l.b16 %v619
        %v668 = vunpack.c.l.b16 %v620
        %v669 = vunpack.c.l.b16 %v622
        %v670 = vunpack.c.l.b16 %v623
        %v671 = vpack.c.b16 %v652, %v651
        %v672 = vpack.c.b16 %v654, %v653
        %v673 = vpack.c.b16 %v656, %v655
        %v674 = vpack.c.b16 %v658, %v657
        %v675 = vpack.c.b16 %v660, %v659
        %v676 = vpack.c.b16 %v662, %v661
        %v677 = vpack.c.b16 %v664, %v663
        %v678 = vpack.c.b16 %v666, %v665
        %v679 = vpack.c.b16 %v668, %v667
        %v680 = vpack.c.b16 %v670, %v669
        %v701 = vunpack.c.l.b16 %v597
        %v702 = vunpack.c.l.b16 %v600
        %v703 = vunpack.c.l.b16 %v603
        %v704 = vunpack.c.l.b16 %v606
        %v705 = vunpack.c.l.b16 %v609
        %v706 = vunpack.c.l.b16 %v612
        %v707 = vunpack.c.l.b16 %v615
        %v708 = vunpack.c.l.b16 %v618
        %v709 = vunpack.c.l.b16 %v621
        %v710 = vunpack.c.l.b16 %v624
        %v711 = vpack.c.b16 %v701, %v701
        %v712 = vpack.c.b16 %v702, %v702
        %v713 = vpack.c.b16 %v703, %v703
        %v714 = vpack.c.b16 %v704, %v704
        %v715 = vpack.c.b16 %v705, %v705
        %v716 = vpack.c.b16 %v706, %v706
        %v717 = vpack.c.b16 %v707, %v707
        %v718 = vpack.c.b16 %v708, %v708
        %v719 = vpack.c.b16 %v709, %v709
        %v720 = vpack.c.b16 %v710, %v710
        %vm721 = vsmask.f32 7424
        %v723 = vshrl.u32 %v671, 16
        %v725 = vshll.u32 %v671, 16
        %v727 = vrot.slane %v725, 1
        %v728 = vor.u32 %v723, %v727
        %v730 = vshll.u32 %v711, 16
        %v732 = vrot.slane %v730, 1
        %v733 = vsel %vm721, %v728, %v732
        %v735 = vshrl.u32 %v672, 16
        %v737 = vshll.u32 %v672, 16
        %v739 = vrot.slane %v737, 1
        %v740 = vor.u32 %v735, %v739
        %v742 = vshll.u32 %v712, 16
        %v744 = vrot.slane %v742, 1
        %v745 = vsel %vm721, %v740, %v744
        %v747 = vshrl.u32 %v673, 16
        %v749 = vshll.u32 %v673, 16
        %v751 = vrot.slane %v749, 1
        %v752 = vor.u32 %v747, %v751
        %v754 = vshll.u32 %v713, 16
        %v756 = vrot.slane %v754, 1
        %v757 = vsel %vm721, %v752, %v756
        %v759 = vshrl.u32 %v674, 16
        %v761 = vshll.u32 %v674, 16
        %v763 = vrot.slane %v761, 1
        %v764 = vor.u32 %v759, %v763
        %v766 = vshll.u32 %v714, 16
        %v768 = vrot.slane %v766, 1
        %v769 = vsel %vm721, %v764, %v768
        %v771 = vshrl.u32 %v675, 16
        %v773 = vshll.u32 %v675, 16
        %v775 = vrot.slane %v773, 1
        %v776 = vor.u32 %v771, %v775
        %v778 = vshll.u32 %v715, 16
        %v780 = vrot.slane %v778, 1
        %v781 = vsel %vm721, %v776, %v780
        %v783 = vshrl.u32 %v676, 16
        %v785 = vshll.u32 %v676, 16
        %v787 = vrot.slane %v785, 1
        %v788 = vor.u32 %v783, %v787
        %v790 = vshll.u32 %v716, 16
        %v792 = vrot.slane %v790, 1
        %v793 = vsel %vm721, %v788, %v792
        %v795 = vshrl.u32 %v677, 16
        %v797 = vshll.u32 %v677, 16
        %v799 = vrot.slane %v797, 1
        %v800 = vor.u32 %v795, %v799
        %v802 = vshll.u32 %v717, 16
        %v804 = vrot.slane %v802, 1
        %v805 = vsel %vm721, %v800, %v804
        %v807 = vshrl.u32 %v678, 16
        %v809 = vshll.u32 %v678, 16
        %v811 = vrot.slane %v809, 1
        %v812 = vor.u32 %v807, %v811
        %v814 = vshll.u32 %v718, 16
        %v816 = vrot.slane %v814, 1
        %v817 = vsel %vm721, %v812, %v816
        %v819 = vshrl.u32 %v679, 16
        %v821 = vshll.u32 %v679, 16
        %v823 = vrot.slane %v821, 1
        %v824 = vor.u32 %v819, %v823
        %v826 = vshll.u32 %v719, 16
        %v828 = vrot.slane %v826, 1
        %v829 = vsel %vm721, %v824, %v828
        %v831 = vshrl.u32 %v680, 16
        %v833 = vshll.u32 %v680, 16
        %v835 = vrot.slane %v833, 1
        %v836 = vor.u32 %v831, %v835
        %v838 = vshll.u32 %v720, 16
        %v840 = vrot.slane %v838, 1
        %v841 = vsel %vm721, %v836, %v840
        %vm852 = vcmask 1046528
        %v853 = vrot.slane %v671, 1
        %v854 = vrot.slane %v711, 1
        %v855 = vsel %vm852, %v853, %v854
        %v856 = vrot.slane %v672, 1
        %v857 = vrot.slane %v712, 1
        %v858 = vsel %vm852, %v856, %v857
        %v859 = vrot.slane %v673, 1
        %v860 = vrot.slane %v713, 1
        %v861 = vsel %vm852, %v859, %v860
        %v862 = vrot.slane %v674, 1
        %v863 = vrot.slane %v714, 1
        %v864 = vsel %vm852, %v862, %v863
        %v865 = vrot.slane %v675, 1
        %v866 = vrot.slane %v715, 1
        %v867 = vsel %vm852, %v865, %v866
        %v868 = vrot.slane %v676, 1
        %v869 = vrot.slane %v716, 1
        %v870 = vsel %vm852, %v868, %v869
        %v871 = vrot.slane %v677, 1
        %v872 = vrot.slane %v717, 1
        %v873 = vsel %vm852, %v871, %v872
        %v874 = vrot.slane %v678, 1
        %v875 = vrot.slane %v718, 1
        %v876 = vsel %vm852, %v874, %v875
        %v877 = vrot.slane %v679, 1
        %v878 = vrot.slane %v719, 1
        %v879 = vsel %vm852, %v877, %v878
        %v880 = vrot.slane %v680, 1
        %v881 = vrot.slane %v720, 1
        %v882 = vsel %vm852, %v880, %v881
        %v895 = vunpack.c.l.b16 %v625
        %v896 = vunpack.c.l.b16 %v626
        %v897 = vpack.c.b16 %v896, %v895
        %v900 = vunpack.c.l.b16 %v627
        %v901 = vpack.c.b16 %v900, %v900
        %v903 = vshrl.u32 %v897, 16
        %v905 = vshll.u32 %v897, 16
        %v907 = vrot.slane %v905, 1
        %v908 = vor.u32 %v903, %v907
        %v910 = vshll.u32 %v901, 16
        %v912 = vrot.slane %v910, 1
        %v913 = vsel %vm721, %v908, %v912
        %v915 = vrot.slane %v897, 1
        %v916 = vrot.slane %v901, 1
        %v917 = vsel %vm852, %v915, %v916
        %v921 = vunpack.c.l.b16 %v628
        %v922 = vunpack.c.l.b16 %v629
        %v923 = vpack.c.b16 %v922, %v921
        %v926 = vunpack.c.l.b16 %v630
        %v927 = vpack.c.b16 %v926, %v926
        %v929 = vshrl.u32 %v923, 16
        %v931 = vshll.u32 %v923, 16
        %v933 = vrot.slane %v931, 1
        %v934 = vor.u32 %v929, %v933
        %v936 = vshll.u32 %v927, 16
        %v938 = vrot.slane %v936, 1
        %v939 = vsel %vm721, %v934, %v938
        %v941 = vrot.slane %v923, 1
        %v942 = vrot.slane %v927, 1
        %v943 = vsel %vm852, %v941, %v942
        %v945 = vld [vmem:[%s1] sm:$0xf]
        %v946 = vld [vmem:[%s1 + $0x4] sm:$0xf]
        %v947 = vld [vmem:[%s1 + $0x8] sm:$0xf]
        %v948 = vld [vmem:[%s1 + $0xc] sm:$0xf]
        %v949 = vld [vmem:[%s1 + $0x10] sm:$0xf]
        %v950 = vld [vmem:[%s1 + $0x14] sm:$0xf]
        %v951 = vld [vmem:[%s1 + $0x18] sm:$0xf]
        %v952 = vld [vmem:[%s1 + $0x1c] sm:$0xf]
        %v953 = vld [vmem:[%s1 + $0x20] sm:$0xf]
        %v954 = vld [vmem:[%s1 + $0x24] sm:$0xf]
        %v955 = vld [vmem:[%s1 + $0x28] sm:$0xf]
        %v956 = vld [vmem:[%s1 + $0x2c] sm:$0xf]
        %v957 = vld [vmem:[%s1 + $0x30] sm:$0xf]
        %v958 = vld [vmem:[%s1 + $0x34] sm:$0xf]
        %v959 = vld [vmem:[%s1 + $0x38] sm:$0xf]
        %v960 = vld [vmem:[%s1 + $0x3c] sm:$0xf]
        %v961 = vld [vmem:[%s1 + $0x40] sm:$0xf]
        %v962 = vld [vmem:[%s1 + $0x44] sm:$0xf]
        %v963 = vld [vmem:[%s1 + $0x48] sm:$0xf]
        %v964 = vld [vmem:[%s1 + $0x4c] sm:$0xf]
        %v965 = vld [vmem:[%s1 + $0x50] sm:$0xf]
        %v966 = vld [vmem:[%s1 + $0x54] sm:$0xf]
        %v967 = vld [vmem:[%s1 + $0x58] sm:$0xf]
        %v968 = vld [vmem:[%s1 + $0x5c] sm:$0xf]
        %v969 = vld [vmem:[%s1 + $0x60] sm:$0xf]
        %v970 = vld [vmem:[%s1 + $0x64] sm:$0xf]
        %v971 = vld [vmem:[%s1 + $0x68] sm:$0xf]
        %v972 = vld [vmem:[%s1 + $0x6c] sm:$0xf]
        %v973 = vld [vmem:[%s1 + $0x70] sm:$0xf]
        %v974 = vld [vmem:[%s1 + $0x74] sm:$0xf]
        %v975 = vld [vmem:[%s1 + $0x78] sm:$0xf]
        %v976 = vld [vmem:[%s1 + $0x7c] sm:$0xf]
        %v977 = vld [vmem:[%s1 + $0x80] sm:$0xf]
        %v978 = vld [vmem:[%s1 + $0x84] sm:$0xf]
        %v979 = vld [vmem:[%s1 + $0x88] sm:$0xf]
        %v980 = vld [vmem:[%s1 + $0x8c] sm:$0xf]
        %v981 = vld [vmem:[%s1 + $0x90] sm:$0xf]
        %v982 = vld [vmem:[%s1 + $0x94] sm:$0xf]
        %v983 = vld [vmem:[%s1 + $0x98] sm:$0xf]
        %v984 = vld [vmem:[%s1 + $0x9c] sm:$0xf]
        %v985 = vld [vmem:[%s1 + $0xa0] sm:$0xf]
        %v986 = vld [vmem:[%s1 + $0xa4] sm:$0xf]
        %v987 = vld [vmem:[%s1 + $0xa8] sm:$0xf]
        %v988 = vld [vmem:[%s1 + $0xac] sm:$0xf]
        %v989 = vld [vmem:[%s1 + $0xb0] sm:$0xf]
        %v990 = vld [vmem:[%s1 + $0xb4] sm:$0xf]
        %v991 = vld [vmem:[%s1 + $0xb8] sm:$0xf]
        %v992 = vld [vmem:[%s1 + $0xbc] sm:$0xf]
        %v993 = vld [vmem:[%s1 + $0xc0] sm:$0xf]
        %v994 = vld [vmem:[%s1 + $0xc4] sm:$0xf]
        %v995 = vld [vmem:[%s1 + $0xc8] sm:$0xf]
        %v996 = vld [vmem:[%s1 + $0xcc] sm:$0xf]
        %v997 = vld [vmem:[%s1 + $0xd0] sm:$0xf]
        %v998 = vld [vmem:[%s1 + $0xd4] sm:$0xf]
        %v999 = vld [vmem:[%s1 + $0xd8] sm:$0xf]
        %v1000 = vld [vmem:[%s1 + $0xdc] sm:$0xf]
        %v1001 = vld [vmem:[%s1 + $0xe0] sm:$0xf]
        %v1002 = vld [vmem:[%s1 + $0xe4] sm:$0xf]
        %v1003 = vld [vmem:[%s1 + $0xe8] sm:$0xf]
        %v1004 = vld [vmem:[%s1 + $0xec] sm:$0xf]
        %v1005 = vld [vmem:[%s1 + $0xf0] sm:$0xf]
        %v1006 = vld [vmem:[%s1 + $0xf4] sm:$0xf]
        %v1007 = vld [vmem:[%s1 + $0xf8] sm:$0xf]
        %v1008 = vld [vmem:[%s1 + $0xfc] sm:$0xf]
        %v1009 = vld [vmem:[%s1 + $0x100] sm:$0xf]
        %v1010 = vld [vmem:[%s1 + $0x104] sm:$0xf]
        %v1011 = vld [vmem:[%s1 + $0x108] sm:$0xf]
        %v1012 = vld [vmem:[%s1 + $0x10c] sm:$0xf]
        %v1013 = vld [vmem:[%s1 + $0x110] sm:$0xf]
        %v1014 = vld [vmem:[%s1 + $0x114] sm:$0xf]
        %v1015 = vld [vmem:[%s1 + $0x118] sm:$0xf]
        %v1016 = vld [vmem:[%s1 + $0x11c] sm:$0xf]
        %v1017 = vld [vmem:[%s1 + $0x120] sm:$0xf]
        %v1018 = vld [vmem:[%s1 + $0x124] sm:$0xf]
        %v1019 = vld [vmem:[%s1 + $0x128] sm:$0xf]
        %v1020 = vld [vmem:[%s1 + $0x12c] sm:$0xf]
        %v1021 = vld [vmem:[%s1 + $0x130] sm:$0xf]
        %v1022 = vld [vmem:[%s1 + $0x134] sm:$0xf]
        %v1023 = vld [vmem:[%s1 + $0x138] sm:$0xf]
        %v1024 = vld [vmem:[%s1 + $0x13c] sm:$0xf]
        %v1025 = vld [vmem:[%s1 + $0x140] sm:$0xf]
        %v1026 = vld [vmem:[%s1 + $0x144] sm:$0xf]
        %v1027 = vld [vmem:[%s1 + $0x148] sm:$0xf]
        %v1028 = vld [vmem:[%s1 + $0x14c] sm:$0xf]
        %v1029 = vld [vmem:[%s1 + $0x150] sm:$0xf]
        %v1030 = vld [vmem:[%s1 + $0x154] sm:$0xf]
        %v1031 = vld [vmem:[%s1 + $0x158] sm:$0xf]
        %v1032 = vld [vmem:[%s1 + $0x15c] sm:$0xf]
        %v1033 = vld [vmem:[%s1 + $0x160] sm:$0xf]
        %v1034 = vld [vmem:[%s1 + $0x164] sm:$0xf]
        %v1035 = vld [vmem:[%s1 + $0x168] sm:$0xf]
        %v1036 = vld [vmem:[%s1 + $0x16c] sm:$0xf]
        %v1037 = vld [vmem:[%s1 + $0x170] sm:$0xf]
        %v1038 = vld [vmem:[%s1 + $0x174] sm:$0xf]
        %v1039 = vld [vmem:[%s1 + $0x178] sm:$0xf]
        %v1040 = vld [vmem:[%s1 + $0x17c] sm:$0xf]
        %v1041 = vld [vmem:[%s1 + $0x180] sm:$0xf]
        %v1042 = vld [vmem:[%s1 + $0x184] sm:$0xf]
        %v1043 = vld [vmem:[%s1 + $0x188] sm:$0xf]
        %v1044 = vld [vmem:[%s1 + $0x18c] sm:$0xf]
        %v1045 = vld [vmem:[%s1 + $0x190] sm:$0xf]
        %v1046 = vld [vmem:[%s1 + $0x194] sm:$0xf]
        %v1047 = vld [vmem:[%s1 + $0x198] sm:$0xf]
        %v1048 = vld [vmem:[%s1 + $0x19c] sm:$0xf]
        %v1049 = vld [vmem:[%s1 + $0x1a0] sm:$0xf]
        %v1050 = vld [vmem:[%s1 + $0x1a4] sm:$0xf]
        %v1051 = vld [vmem:[%s1 + $0x1a8] sm:$0xf]
        %v1052 = vld [vmem:[%s1 + $0x1ac] sm:$0xf]
        %v1053 = vld [vmem:[%s1 + $0x1b0] sm:$0xf]
        %v1054 = vld [vmem:[%s1 + $0x1b4] sm:$0xf]
        %v1055 = vld [vmem:[%s1 + $0x1b8] sm:$0xf]
        %v1056 = vld [vmem:[%s1 + $0x1bc] sm:$0xf]
        %v1057 = vld [vmem:[%s1 + $0x1c0] sm:$0xf]
        %v1058 = vld [vmem:[%s1 + $0x1c4] sm:$0xf]
        %v1059 = vld [vmem:[%s1 + $0x1c8] sm:$0xf]
        %v1060 = vld [vmem:[%s1 + $0x1cc] sm:$0xf]
        %v1061 = vld [vmem:[%s1 + $0x1d0] sm:$0xf]
        %v1062 = vld [vmem:[%s1 + $0x1d4] sm:$0xf]
        %v1063 = vld [vmem:[%s1 + $0x1d8] sm:$0xf]
        %v1064 = vld [vmem:[%s1 + $0x1dc] sm:$0xf]
        %v1065 = vld [vmem:[%s1 + $0x1e0] sm:$0xf]
        %v1066 = vld [vmem:[%s1 + $0x1e4] sm:$0xf]
        %v1067 = vld [vmem:[%s1 + $0x1e8] sm:$0xf]
        %v1068 = vld [vmem:[%s1 + $0x1ec] sm:$0xf]
        %v1069 = vld [vmem:[%s1 + $0x1f0] sm:$0xf]
        %v1070 = vld [vmem:[%s1 + $0x1f4] sm:$0xf]
        %v1071 = vld [vmem:[%s1 + $0x1f8] sm:$0xf]
        %v1072 = vld [vmem:[%s1 + $0x1fc] sm:$0xf]
        %v1073 = vld [vmem:[%s1 + $0x200] sm:$0xf]
        %v1074 = vld [vmem:[%s1 + $0x204] sm:$0xf]
        %v1075 = vld [vmem:[%s1 + $0x208] sm:$0xf]
        %v1076 = vld [vmem:[%s1 + $0x20c] sm:$0xf]
        %v1077 = vld [vmem:[%s1 + $0x210] sm:$0xf]
        %v1078 = vld [vmem:[%s1 + $0x214] sm:$0xf]
        %v1079 = vld [vmem:[%s1 + $0x218] sm:$0xf]
        %v1080 = vld [vmem:[%s1 + $0x21c] sm:$0xf]
        %v1081 = vld [vmem:[%s1 + $0x220] sm:$0xf]
        %v1082 = vld [vmem:[%s1 + $0x224] sm:$0xf]
        %v1083 = vld [vmem:[%s1 + $0x228] sm:$0xf]
        %v1084 = vld [vmem:[%s1 + $0x22c] sm:$0xf]
        %v1085 = vld [vmem:[%s1 + $0x230] sm:$0xf]
        %v1086 = vld [vmem:[%s1 + $0x234] sm:$0xf]
        %v1087 = vld [vmem:[%s1 + $0x238] sm:$0xf]
        %v1088 = vld [vmem:[%s1 + $0x23c] sm:$0xf]
        %v1089 = vld [vmem:[%s5] sm:$0x1]
        %v1090 = vperm.slane %v1089, 0
        %v1235 = vunpack.c.l.b16 %v945
        %v1236 = vunpack.c.l.b16 %v946
        %v1237 = vunpack.c.l.b16 %v947
        %v1238 = vunpack.c.l.b16 %v948
        %v1239 = vunpack.c.l.b16 %v949
        %v1240 = vunpack.c.l.b16 %v950
        %v1241 = vunpack.c.l.b16 %v951
        %v1242 = vunpack.c.l.b16 %v952
        %v1243 = vunpack.c.l.b16 %v953
        %v1244 = vunpack.c.l.b16 %v954
        %v1245 = vunpack.c.l.b16 %v955
        %v1246 = vunpack.c.l.b16 %v956
        %v1247 = vunpack.c.l.b16 %v957
        %v1248 = vunpack.c.l.b16 %v958
        %v1249 = vunpack.c.l.b16 %v959
        %v1250 = vunpack.c.l.b16 %v960
        %v1251 = vunpack.c.l.b16 %v961
        %v1252 = vunpack.c.l.b16 %v962
        %v1253 = vunpack.c.l.b16 %v963
        %v1254 = vunpack.c.l.b16 %v964
        %v1255 = vunpack.c.l.b16 %v965
        %v1256 = vunpack.c.l.b16 %v966
        %v1257 = vunpack.c.l.b16 %v967
        %v1258 = vunpack.c.l.b16 %v968
        %v1259 = vunpack.c.l.b16 %v969
        %v1260 = vunpack.c.l.b16 %v970
        %v1261 = vunpack.c.l.b16 %v971
        %v1262 = vunpack.c.l.b16 %v972
        %v1263 = vunpack.c.l.b16 %v973
        %v1264 = vunpack.c.l.b16 %v974
        %v1265 = vunpack.c.l.b16 %v975
        %v1266 = vunpack.c.l.b16 %v976
        %v1267 = vunpack.c.l.b16 %v977
        %v1268 = vunpack.c.l.b16 %v978
        %v1269 = vunpack.c.l.b16 %v979
        %v1270 = vunpack.c.l.b16 %v980
        %v1271 = vunpack.c.l.b16 %v981
        %v1272 = vunpack.c.l.b16 %v982
        %v1273 = vunpack.c.l.b16 %v983
        %v1274 = vunpack.c.l.b16 %v984
        %v1275 = vunpack.c.l.b16 %v985
        %v1276 = vunpack.c.l.b16 %v986
        %v1277 = vunpack.c.l.b16 %v987
        %v1278 = vunpack.c.l.b16 %v988
        %v1279 = vunpack.c.l.b16 %v989
        %v1280 = vunpack.c.l.b16 %v990
        %v1281 = vunpack.c.l.b16 %v991
        %v1282 = vunpack.c.l.b16 %v992
        %v1283 = vunpack.c.l.b16 %v993
        %v1284 = vunpack.c.l.b16 %v994
        %v1285 = vunpack.c.l.b16 %v995
        %v1286 = vunpack.c.l.b16 %v996
        %v1287 = vunpack.c.l.b16 %v997
        %v1288 = vunpack.c.l.b16 %v998
        %v1289 = vunpack.c.l.b16 %v999
        %v1290 = vunpack.c.l.b16 %v1000
        %v1291 = vunpack.c.l.b16 %v1001
        %v1292 = vunpack.c.l.b16 %v1002
        %v1293 = vunpack.c.l.b16 %v1003
        %v1294 = vunpack.c.l.b16 %v1004
        %v1295 = vunpack.c.l.b16 %v1005
        %v1296 = vunpack.c.l.b16 %v1006
        %v1297 = vunpack.c.l.b16 %v1007
        %v1298 = vunpack.c.l.b16 %v1008
        %v1299 = vunpack.c.l.b16 %v1009
        %v1300 = vunpack.c.l.b16 %v1010
        %v1301 = vunpack.c.l.b16 %v1011
        %v1302 = vunpack.c.l.b16 %v1012
        %v1303 = vunpack.c.l.b16 %v1013
        %v1304 = vunpack.c.l.b16 %v1014
        %v1305 = vunpack.c.l.b16 %v1015
        %v1306 = vunpack.c.l.b16 %v1016
        %v1307 = vunpack.c.l.b16 %v1017
        %v1308 = vunpack.c.l.b16 %v1018
        %v1309 = vunpack.c.l.b16 %v1019
        %v1310 = vunpack.c.l.b16 %v1020
        %v1311 = vunpack.c.l.b16 %v1021
        %v1312 = vunpack.c.l.b16 %v1022
        %v1313 = vunpack.c.l.b16 %v1023
        %v1314 = vunpack.c.l.b16 %v1024
        %v1315 = vunpack.c.l.b16 %v1025
        %v1316 = vunpack.c.l.b16 %v1026
        %v1317 = vunpack.c.l.b16 %v1027
        %v1318 = vunpack.c.l.b16 %v1028
        %v1319 = vunpack.c.l.b16 %v1029
        %v1320 = vunpack.c.l.b16 %v1030
        %v1321 = vunpack.c.l.b16 %v1031
        %v1322 = vunpack.c.l.b16 %v1032
        %v1323 = vunpack.c.l.b16 %v1033
        %v1324 = vunpack.c.l.b16 %v1034
        %v1325 = vunpack.c.l.b16 %v1035
        %v1326 = vunpack.c.l.b16 %v1036
        %v1327 = vunpack.c.l.b16 %v1037
        %v1328 = vunpack.c.l.b16 %v1038
        %v1329 = vunpack.c.l.b16 %v1039
        %v1330 = vunpack.c.l.b16 %v1040
        %v1331 = vunpack.c.l.b16 %v1041
        %v1332 = vunpack.c.l.b16 %v1042
        %v1333 = vunpack.c.l.b16 %v1043
        %v1334 = vunpack.c.l.b16 %v1044
        %v1335 = vunpack.c.l.b16 %v1045
        %v1336 = vunpack.c.l.b16 %v1046
        %v1337 = vunpack.c.l.b16 %v1047
        %v1338 = vunpack.c.l.b16 %v1048
        %v1339 = vunpack.c.l.b16 %v1049
        %v1340 = vunpack.c.l.b16 %v1050
        %v1341 = vunpack.c.l.b16 %v1051
        %v1342 = vunpack.c.l.b16 %v1052
        %v1343 = vunpack.c.l.b16 %v1053
        %v1344 = vunpack.c.l.b16 %v1054
        %v1345 = vunpack.c.l.b16 %v1055
        %v1346 = vunpack.c.l.b16 %v1056
        %v1347 = vunpack.c.l.b16 %v1057
        %v1348 = vunpack.c.l.b16 %v1058
        %v1349 = vunpack.c.l.b16 %v1059
        %v1350 = vunpack.c.l.b16 %v1060
        %v1351 = vunpack.c.l.b16 %v1061
        %v1352 = vunpack.c.l.b16 %v1062
        %v1353 = vunpack.c.l.b16 %v1063
        %v1354 = vunpack.c.l.b16 %v1064
        %v1355 = vunpack.c.l.b16 %v1065
        %v1356 = vunpack.c.l.b16 %v1066
        %v1357 = vunpack.c.l.b16 %v1067
        %v1358 = vunpack.c.l.b16 %v1068
        %v1359 = vunpack.c.l.b16 %v1069
        %v1360 = vunpack.c.l.b16 %v1070
        %v1361 = vunpack.c.l.b16 %v1071
        %v1362 = vunpack.c.l.b16 %v1072
        %v1363 = vunpack.c.l.b16 %v1073
        %v1364 = vunpack.c.l.b16 %v1074
        %v1365 = vunpack.c.l.b16 %v1075
        %v1366 = vunpack.c.l.b16 %v1076
        %v1367 = vunpack.c.l.b16 %v1077
        %v1368 = vunpack.c.l.b16 %v1078
        %v1369 = vunpack.c.l.b16 %v1079
        %v1370 = vunpack.c.l.b16 %v1080
        %v1371 = vunpack.c.l.b16 %v1081
        %v1372 = vunpack.c.l.b16 %v1082
        %v1373 = vunpack.c.l.b16 %v1083
        %v1374 = vunpack.c.l.b16 %v1084
        %v1375 = vunpack.c.l.b16 %v1085
        %v1376 = vunpack.c.l.b16 %v1086
        %v1377 = vunpack.c.l.b16 %v1087
        %v1378 = vunpack.c.l.b16 %v1088
        %v1379 = vpack.c.b16 %v1236, %v1235
        %v1380 = vpack.c.b16 %v1238, %v1237
        %v1381 = vpack.c.b16 %v1240, %v1239
        %v1382 = vpack.c.b16 %v1242, %v1241
        %v1383 = vpack.c.b16 %v1244, %v1243
        %v1384 = vpack.c.b16 %v1246, %v1245
        %v1385 = vpack.c.b16 %v1248, %v1247
        %v1386 = vpack.c.b16 %v1250, %v1249
        %v1387 = vpack.c.b16 %v1252, %v1251
        %v1388 = vpack.c.b16 %v1254, %v1253
        %v1389 = vpack.c.b16 %v1256, %v1255
        %v1390 = vpack.c.b16 %v1258, %v1257
        %v1391 = vpack.c.b16 %v1260, %v1259
        %v1392 = vpack.c.b16 %v1262, %v1261
        %v1393 = vpack.c.b16 %v1264, %v1263
        %v1394 = vpack.c.b16 %v1266, %v1265
        %v1395 = vpack.c.b16 %v1268, %v1267
        %v1396 = vpack.c.b16 %v1270, %v1269
        %v1397 = vpack.c.b16 %v1272, %v1271
        %v1398 = vpack.c.b16 %v1274, %v1273
        %v1399 = vpack.c.b16 %v1276, %v1275
        %v1400 = vpack.c.b16 %v1278, %v1277
        %v1401 = vpack.c.b16 %v1280, %v1279
        %v1402 = vpack.c.b16 %v1282, %v1281
        %v1403 = vpack.c.b16 %v1284, %v1283
        %v1404 = vpack.c.b16 %v1286, %v1285
        %v1405 = vpack.c.b16 %v1288, %v1287
        %v1406 = vpack.c.b16 %v1290, %v1289
        %v1407 = vpack.c.b16 %v1292, %v1291
        %v1408 = vpack.c.b16 %v1294, %v1293
        %v1409 = vpack.c.b16 %v1296, %v1295
        %v1410 = vpack.c.b16 %v1298, %v1297
        %v1411 = vpack.c.b16 %v1300, %v1299
        %v1412 = vpack.c.b16 %v1302, %v1301
        %v1413 = vpack.c.b16 %v1304, %v1303
        %v1414 = vpack.c.b16 %v1306, %v1305
        %v1415 = vpack.c.b16 %v1308, %v1307
        %v1416 = vpack.c.b16 %v1310, %v1309
        %v1417 = vpack.c.b16 %v1312, %v1311
        %v1418 = vpack.c.b16 %v1314, %v1313
        %v1419 = vpack.c.b16 %v1316, %v1315
        %v1420 = vpack.c.b16 %v1318, %v1317
        %v1421 = vpack.c.b16 %v1320, %v1319
        %v1422 = vpack.c.b16 %v1322, %v1321
        %v1423 = vpack.c.b16 %v1324, %v1323
        %v1424 = vpack.c.b16 %v1326, %v1325
        %v1425 = vpack.c.b16 %v1328, %v1327
        %v1426 = vpack.c.b16 %v1330, %v1329
        %v1427 = vpack.c.b16 %v1332, %v1331
        %v1428 = vpack.c.b16 %v1334, %v1333
        %v1429 = vpack.c.b16 %v1336, %v1335
        %v1430 = vpack.c.b16 %v1338, %v1337
        %v1431 = vpack.c.b16 %v1340, %v1339
        %v1432 = vpack.c.b16 %v1342, %v1341
        %v1433 = vpack.c.b16 %v1344, %v1343
        %v1434 = vpack.c.b16 %v1346, %v1345
        %v1435 = vpack.c.b16 %v1348, %v1347
        %v1436 = vpack.c.b16 %v1350, %v1349
        %v1437 = vpack.c.b16 %v1352, %v1351
        %v1438 = vpack.c.b16 %v1354, %v1353
        %v1439 = vpack.c.b16 %v1356, %v1355
        %v1440 = vpack.c.b16 %v1358, %v1357
        %v1441 = vpack.c.b16 %v1360, %v1359
        %v1442 = vpack.c.b16 %v1362, %v1361
        %v1443 = vpack.c.b16 %v1364, %v1363
        %v1444 = vpack.c.b16 %v1366, %v1365
        %v1445 = vpack.c.b16 %v1368, %v1367
        %v1446 = vpack.c.b16 %v1370, %v1369
        %v1447 = vpack.c.b16 %v1372, %v1371
        %v1448 = vpack.c.b16 %v1374, %v1373
        %v1449 = vpack.c.b16 %v1376, %v1375
        %v1450 = vpack.c.b16 %v1378, %v1377
        %1523 = vmatpush.bf16.msra.mxu0 %v1386
        %1524 = vmatpush.bf16.msra.mxu0 %v1385
        %1525 = vmatpush.bf16.msra.mxu0 %v1384
        %1526 = vmatpush.bf16.msra.mxu0 %v1383
        %1527 = vmatpush.bf16.msra.mxu0 %v1382
        %1528 = vmatpush.bf16.msra.mxu0 %v1381
        %1529 = vmatpush.bf16.msra.mxu0 %v1380
        %1530 = vmatpush.bf16.msra.mxu0 %v1379
        %1531 = vmatmul.bf16.gmra.mxu0 %v671
        %v1532 = vpop.f32.mrf.mxu0
        %v1533 = vadd.f32 %v1090, %v1532
        %v1534 = vpop.f32.mrf.mxu0
        %v1535 = vadd.f32 %v1090, %v1534
        %1536 = vmatmul.bf16.gmra.mxu0 %v672
        %v1537 = vpop.f32.mrf.mxu0
        %v1538 = vadd.f32 %v1090, %v1537
        %v1539 = vpop.f32.mrf.mxu0
        %v1540 = vadd.f32 %v1090, %v1539
        %1541 = vmatmul.bf16.gmra.mxu0 %v673
        %v1542 = vpop.f32.mrf.mxu0
        %v1543 = vadd.f32 %v1090, %v1542
        %v1544 = vpop.f32.mrf.mxu0
        %v1545 = vadd.f32 %v1090, %v1544
        %1546 = vmatmul.bf16.gmra.mxu0 %v674
        %v1547 = vpop.f32.mrf.mxu0
        %v1548 = vadd.f32 %v1090, %v1547
        %v1549 = vpop.f32.mrf.mxu0
        %v1550 = vadd.f32 %v1090, %v1549
        %1551 = vmatmul.bf16.gmra.mxu0 %v675
        %v1552 = vpop.f32.mrf.mxu0
        %v1553 = vadd.f32 %v1090, %v1552
        %v1554 = vpop.f32.mrf.mxu0
        %v1555 = vadd.f32 %v1090, %v1554
        %1556 = vmatmul.bf16.gmra.mxu0 %v676
        %v1557 = vpop.f32.mrf.mxu0
        %v1558 = vadd.f32 %v1090, %v1557
        %v1559 = vpop.f32.mrf.mxu0
        %v1560 = vadd.f32 %v1090, %v1559
        %1561 = vmatmul.bf16.gmra.mxu0 %v677
        %v1562 = vpop.f32.mrf.mxu0
        %v1563 = vadd.f32 %v1090, %v1562
        %v1564 = vpop.f32.mrf.mxu0
        %v1565 = vadd.f32 %v1090, %v1564
        %1566 = vmatmul.bf16.gmra.mxu0 %v678
        %v1567 = vpop.f32.mrf.mxu0
        %v1568 = vadd.f32 %v1090, %v1567
        %v1569 = vpop.f32.mrf.mxu0
        %v1570 = vadd.f32 %v1090, %v1569
        %1571 = vmatmul.bf16.gmra.mxu0 %v679
        %v1572 = vpop.f32.mrf.mxu0
        %v1573 = vadd.f32 %v1090, %v1572
        %v1574 = vpop.f32.mrf.mxu0
        %v1575 = vadd.f32 %v1090, %v1574
        %1576 = vmatmul.bf16.gmra.mxu0 %v680
        %v1577 = vpop.f32.mrf.mxu0
        %v1578 = vadd.f32 %v1090, %v1577
        %v1579 = vpop.f32.mrf.mxu0
        %v1580 = vadd.f32 %v1090, %v1579
        %1581 = vdwg.mxu0
        %1582 = vmatpush.bf16.msra.mxu0 %v1394
        %1583 = vmatpush.bf16.msra.mxu0 %v1393
        %1584 = vmatpush.bf16.msra.mxu0 %v1392
        %1585 = vmatpush.bf16.msra.mxu0 %v1391
        %1586 = vmatpush.bf16.msra.mxu0 %v1390
        %1587 = vmatpush.bf16.msra.mxu0 %v1389
        %1588 = vmatpush.bf16.msra.mxu0 %v1388
        %1589 = vmatpush.bf16.msra.mxu0 %v1387
        %1590 = vmatmul.bf16.gmra.mxu0 %v733
        %v1591 = vpop.f32.mrf.mxu0
        %v1592 = vadd.f32 %v1533, %v1591
        %v1593 = vpop.f32.mrf.mxu0
        %v1594 = vadd.f32 %v1535, %v1593
        %1595 = vmatmul.bf16.gmra.mxu0 %v745
        %v1596 = vpop.f32.mrf.mxu0
        %v1597 = vadd.f32 %v1538, %v1596
        %v1598 = vpop.f32.mrf.mxu0
        %v1599 = vadd.f32 %v1540, %v1598
        %1600 = vmatmul.bf16.gmra.mxu0 %v757
        %v1601 = vpop.f32.mrf.mxu0
        %v1602 = vadd.f32 %v1543, %v1601
        %v1603 = vpop.f32.mrf.mxu0
        %v1604 = vadd.f32 %v1545, %v1603
        %1605 = vmatmul.bf16.gmra.mxu0 %v769
        %v1606 = vpop.f32.mrf.mxu0
        %v1607 = vadd.f32 %v1548, %v1606
        %v1608 = vpop.f32.mrf.mxu0
        %v1609 = vadd.f32 %v1550, %v1608
        %1610 = vmatmul.bf16.gmra.mxu0 %v781
        %v1611 = vpop.f32.mrf.mxu0
        %v1612 = vadd.f32 %v1553, %v1611
        %v1613 = vpop.f32.mrf.mxu0
        %v1614 = vadd.f32 %v1555, %v1613
        %1615 = vmatmul.bf16.gmra.mxu0 %v793
        %v1616 = vpop.f32.mrf.mxu0
        %v1617 = vadd.f32 %v1558, %v1616
        %v1618 = vpop.f32.mrf.mxu0
        %v1619 = vadd.f32 %v1560, %v1618
        %1620 = vmatmul.bf16.gmra.mxu0 %v805
        %v1621 = vpop.f32.mrf.mxu0
        %v1622 = vadd.f32 %v1563, %v1621
        %v1623 = vpop.f32.mrf.mxu0
        %v1624 = vadd.f32 %v1565, %v1623
        %1625 = vmatmul.bf16.gmra.mxu0 %v817
        %v1626 = vpop.f32.mrf.mxu0
        %v1627 = vadd.f32 %v1568, %v1626
        %v1628 = vpop.f32.mrf.mxu0
        %v1629 = vadd.f32 %v1570, %v1628
        %1630 = vmatmul.bf16.gmra.mxu0 %v829
        %v1631 = vpop.f32.mrf.mxu0
        %v1632 = vadd.f32 %v1573, %v1631
        %v1633 = vpop.f32.mrf.mxu0
        %v1634 = vadd.f32 %v1575, %v1633
        %1635 = vmatmul.bf16.gmra.mxu0 %v841
        %v1636 = vpop.f32.mrf.mxu0
        %v1637 = vadd.f32 %v1578, %v1636
        %v1638 = vpop.f32.mrf.mxu0
        %v1639 = vadd.f32 %v1580, %v1638
        %1640 = vdwg.mxu0
        %1641 = vmatpush.bf16.msra.mxu0 %v1402
        %1642 = vmatpush.bf16.msra.mxu0 %v1401
        %1643 = vmatpush.bf16.msra.mxu0 %v1400
        %1644 = vmatpush.bf16.msra.mxu0 %v1399
        %1645 = vmatpush.bf16.msra.mxu0 %v1398
        %1646 = vmatpush.bf16.msra.mxu0 %v1397
        %1647 = vmatpush.bf16.msra.mxu0 %v1396
        %1648 = vmatpush.bf16.msra.mxu0 %v1395
        %1649 = vmatmul.bf16.gmra.mxu0 %v855
        %v1650 = vpop.f32.mrf.mxu0
        %v1651 = vadd.f32 %v1592, %v1650
        %v1652 = vpop.f32.mrf.mxu0
        %v1653 = vadd.f32 %v1594, %v1652
        %1654 = vmatmul.bf16.gmra.mxu0 %v858
        %v1655 = vpop.f32.mrf.mxu0
        %v1656 = vadd.f32 %v1597, %v1655
        %v1657 = vpop.f32.mrf.mxu0
        %v1658 = vadd.f32 %v1599, %v1657
        %1659 = vmatmul.bf16.gmra.mxu0 %v861
        %v1660 = vpop.f32.mrf.mxu0
        %v1661 = vadd.f32 %v1602, %v1660
        %v1662 = vpop.f32.mrf.mxu0
        %v1663 = vadd.f32 %v1604, %v1662
        %1664 = vmatmul.bf16.gmra.mxu0 %v864
        %v1665 = vpop.f32.mrf.mxu0
        %v1666 = vadd.f32 %v1607, %v1665
        %v1667 = vpop.f32.mrf.mxu0
        %v1668 = vadd.f32 %v1609, %v1667
        %1669 = vmatmul.bf16.gmra.mxu0 %v867
        %v1670 = vpop.f32.mrf.mxu0
        %v1671 = vadd.f32 %v1612, %v1670
        %v1672 = vpop.f32.mrf.mxu0
        %v1673 = vadd.f32 %v1614, %v1672
        %1674 = vmatmul.bf16.gmra.mxu0 %v870
        %v1675 = vpop.f32.mrf.mxu0
        %v1676 = vadd.f32 %v1617, %v1675
        %v1677 = vpop.f32.mrf.mxu0
        %v1678 = vadd.f32 %v1619, %v1677
        %1679 = vmatmul.bf16.gmra.mxu0 %v873
        %v1680 = vpop.f32.mrf.mxu0
        %v1681 = vadd.f32 %v1622, %v1680
        %v1682 = vpop.f32.mrf.mxu0
        %v1683 = vadd.f32 %v1624, %v1682
        %1684 = vmatmul.bf16.gmra.mxu0 %v876
        %v1685 = vpop.f32.mrf.mxu0
        %v1686 = vadd.f32 %v1627, %v1685
        %v1687 = vpop.f32.mrf.mxu0
        %v1688 = vadd.f32 %v1629, %v1687
        %1689 = vmatmul.bf16.gmra.mxu0 %v879
        %v1690 = vpop.f32.mrf.mxu0
        %v1691 = vadd.f32 %v1632, %v1690
        %v1692 = vpop.f32.mrf.mxu0
        %v1693 = vadd.f32 %v1634, %v1692
        %1694 = vmatmul.bf16.gmra.mxu0 %v882
        %v1695 = vpop.f32.mrf.mxu0
        %v1696 = vadd.f32 %v1637, %v1695
        %v1697 = vpop.f32.mrf.mxu0
        %v1698 = vadd.f32 %v1639, %v1697
        %1699 = vdwg.mxu0
        %1700 = vmatpush.bf16.msra.mxu0 %v1410
        %1701 = vmatpush.bf16.msra.mxu0 %v1409
        %1702 = vmatpush.bf16.msra.mxu0 %v1408
        %1703 = vmatpush.bf16.msra.mxu0 %v1407
        %1704 = vmatpush.bf16.msra.mxu0 %v1406
        %1705 = vmatpush.bf16.msra.mxu0 %v1405
        %1706 = vmatpush.bf16.msra.mxu0 %v1404
        %1707 = vmatpush.bf16.msra.mxu0 %v1403
        %1708 = vmatmul.bf16.gmra.mxu0 %v672
        %v1709 = vpop.f32.mrf.mxu0
        %v1710 = vadd.f32 %v1651, %v1709
        %v1711 = vpop.f32.mrf.mxu0
        %v1712 = vadd.f32 %v1653, %v1711
        %1713 = vmatmul.bf16.gmra.mxu0 %v673
        %v1714 = vpop.f32.mrf.mxu0
        %v1715 = vadd.f32 %v1656, %v1714
        %v1716 = vpop.f32.mrf.mxu0
        %v1717 = vadd.f32 %v1658, %v1716
        %1718 = vmatmul.bf16.gmra.mxu0 %v674
        %v1719 = vpop.f32.mrf.mxu0
        %v1720 = vadd.f32 %v1661, %v1719
        %v1721 = vpop.f32.mrf.mxu0
        %v1722 = vadd.f32 %v1663, %v1721
        %1723 = vmatmul.bf16.gmra.mxu0 %v675
        %v1724 = vpop.f32.mrf.mxu0
        %v1725 = vadd.f32 %v1666, %v1724
        %v1726 = vpop.f32.mrf.mxu0
        %v1727 = vadd.f32 %v1668, %v1726
        %1728 = vmatmul.bf16.gmra.mxu0 %v676
        %v1729 = vpop.f32.mrf.mxu0
        %v1730 = vadd.f32 %v1671, %v1729
        %v1731 = vpop.f32.mrf.mxu0
        %v1732 = vadd.f32 %v1673, %v1731
        %1733 = vmatmul.bf16.gmra.mxu0 %v677
        %v1734 = vpop.f32.mrf.mxu0
        %v1735 = vadd.f32 %v1676, %v1734
        %v1736 = vpop.f32.mrf.mxu0
        %v1737 = vadd.f32 %v1678, %v1736
        %1738 = vmatmul.bf16.gmra.mxu0 %v678
        %v1739 = vpop.f32.mrf.mxu0
        %v1740 = vadd.f32 %v1681, %v1739
        %v1741 = vpop.f32.mrf.mxu0
        %v1742 = vadd.f32 %v1683, %v1741
        %1743 = vmatmul.bf16.gmra.mxu0 %v679
        %v1744 = vpop.f32.mrf.mxu0
        %v1745 = vadd.f32 %v1686, %v1744
        %v1746 = vpop.f32.mrf.mxu0
        %v1747 = vadd.f32 %v1688, %v1746
        %1748 = vmatmul.bf16.gmra.mxu0 %v680
        %v1749 = vpop.f32.mrf.mxu0
        %v1750 = vadd.f32 %v1691, %v1749
        %v1751 = vpop.f32.mrf.mxu0
        %v1752 = vadd.f32 %v1693, %v1751
        %1753 = vmatmul.bf16.gmra.mxu0 %v897
        %v1754 = vpop.f32.mrf.mxu0
        %v1755 = vadd.f32 %v1696, %v1754
        %v1756 = vpop.f32.mrf.mxu0
        %v1757 = vadd.f32 %v1698, %v1756
        %1758 = vdwg.mxu0
        %1759 = vmatpush.bf16.msra.mxu0 %v1418
        %1760 = vmatpush.bf16.msra.mxu0 %v1417
        %1761 = vmatpush.bf16.msra.mxu0 %v1416
        %1762 = vmatpush.bf16.msra.mxu0 %v1415
        %1763 = vmatpush.bf16.msra.mxu0 %v1414
        %1764 = vmatpush.bf16.msra.mxu0 %v1413
        %1765 = vmatpush.bf16.msra.mxu0 %v1412
        %1766 = vmatpush.bf16.msra.mxu0 %v1411
        %1767 = vmatmul.bf16.gmra.mxu0 %v745
        %v1768 = vpop.f32.mrf.mxu0
        %v1769 = vadd.f32 %v1710, %v1768
        %v1770 = vpop.f32.mrf.mxu0
        %v1771 = vadd.f32 %v1712, %v1770
        %1772 = vmatmul.bf16.gmra.mxu0 %v757
        %v1773 = vpop.f32.mrf.mxu0
        %v1774 = vadd.f32 %v1715, %v1773
        %v1775 = vpop.f32.mrf.mxu0
        %v1776 = vadd.f32 %v1717, %v1775
        %1777 = vmatmul.bf16.gmra.mxu0 %v769
        %v1778 = vpop.f32.mrf.mxu0
        %v1779 = vadd.f32 %v1720, %v1778
        %v1780 = vpop.f32.mrf.mxu0
        %v1781 = vadd.f32 %v1722, %v1780
        %1782 = vmatmul.bf16.gmra.mxu0 %v781
        %v1783 = vpop.f32.mrf.mxu0
        %v1784 = vadd.f32 %v1725, %v1783
        %v1785 = vpop.f32.mrf.mxu0
        %v1786 = vadd.f32 %v1727, %v1785
        %1787 = vmatmul.bf16.gmra.mxu0 %v793
        %v1788 = vpop.f32.mrf.mxu0
        %v1789 = vadd.f32 %v1730, %v1788
        %v1790 = vpop.f32.mrf.mxu0
        %v1791 = vadd.f32 %v1732, %v1790
        %1792 = vmatmul.bf16.gmra.mxu0 %v805
        %v1793 = vpop.f32.mrf.mxu0
        %v1794 = vadd.f32 %v1735, %v1793
        %v1795 = vpop.f32.mrf.mxu0
        %v1796 = vadd.f32 %v1737, %v1795
        %1797 = vmatmul.bf16.gmra.mxu0 %v817
        %v1798 = vpop.f32.mrf.mxu0
        %v1799 = vadd.f32 %v1740, %v1798
        %v1800 = vpop.f32.mrf.mxu0
        %v1801 = vadd.f32 %v1742, %v1800
        %1802 = vmatmul.bf16.gmra.mxu0 %v829
        %v1803 = vpop.f32.mrf.mxu0
        %v1804 = vadd.f32 %v1745, %v1803
        %v1805 = vpop.f32.mrf.mxu0
        %v1806 = vadd.f32 %v1747, %v1805
        %1807 = vmatmul.bf16.gmra.mxu0 %v841
        %v1808 = vpop.f32.mrf.mxu0
        %v1809 = vadd.f32 %v1750, %v1808
        %v1810 = vpop.f32.mrf.mxu0
        %v1811 = vadd.f32 %v1752, %v1810
        %1812 = vmatmul.bf16.gmra.mxu0 %v913
        %v1813 = vpop.f32.mrf.mxu0
        %v1814 = vadd.f32 %v1755, %v1813
        %v1815 = vpop.f32.mrf.mxu0
        %v1816 = vadd.f32 %v1757, %v1815
        %1817 = vdwg.mxu0
        %1818 = vmatpush.bf16.msra.mxu0 %v1426
        %1819 = vmatpush.bf16.msra.mxu0 %v1425
        %1820 = vmatpush.bf16.msra.mxu0 %v1424
        %1821 = vmatpush.bf16.msra.mxu0 %v1423
        %1822 = vmatpush.bf16.msra.mxu0 %v1422
        %1823 = vmatpush.bf16.msra.mxu0 %v1421
        %1824 = vmatpush.bf16.msra.mxu0 %v1420
        %1825 = vmatpush.bf16.msra.mxu0 %v1419
        %1826 = vmatmul.bf16.gmra.mxu0 %v858
        %v1827 = vpop.f32.mrf.mxu0
        %v1828 = vadd.f32 %v1769, %v1827
        %v1829 = vpop.f32.mrf.mxu0
        %v1830 = vadd.f32 %v1771, %v1829
        %1831 = vmatmul.bf16.gmra.mxu0 %v861
        %v1832 = vpop.f32.mrf.mxu0
        %v1833 = vadd.f32 %v1774, %v1832
        %v1834 = vpop.f32.mrf.mxu0
        %v1835 = vadd.f32 %v1776, %v1834
        %1836 = vmatmul.bf16.gmra.mxu0 %v864
        %v1837 = vpop.f32.mrf.mxu0
        %v1838 = vadd.f32 %v1779, %v1837
        %v1839 = vpop.f32.mrf.mxu0
        %v1840 = vadd.f32 %v1781, %v1839
        %1841 = vmatmul.bf16.gmra.mxu0 %v867
        %v1842 = vpop.f32.mrf.mxu0
        %v1843 = vadd.f32 %v1784, %v1842
        %v1844 = vpop.f32.mrf.mxu0
        %v1845 = vadd.f32 %v1786, %v1844
        %1846 = vmatmul.bf16.gmra.mxu0 %v870
        %v1847 = vpop.f32.mrf.mxu0
        %v1848 = vadd.f32 %v1789, %v1847
        %v1849 = vpop.f32.mrf.mxu0
        %v1850 = vadd.f32 %v1791, %v1849
        %1851 = vmatmul.bf16.gmra.mxu0 %v873
        %v1852 = vpop.f32.mrf.mxu0
        %v1853 = vadd.f32 %v1794, %v1852
        %v1854 = vpop.f32.mrf.mxu0
        %v1855 = vadd.f32 %v1796, %v1854
        %1856 = vmatmul.bf16.gmra.mxu0 %v876
        %v1857 = vpop.f32.mrf.mxu0
        %v1858 = vadd.f32 %v1799, %v1857
        %v1859 = vpop.f32.mrf.mxu0
        %v1860 = vadd.f32 %v1801, %v1859
        %1861 = vmatmul.bf16.gmra.mxu0 %v879
        %v1862 = vpop.f32.mrf.mxu0
        %v1863 = vadd.f32 %v1804, %v1862
        %v1864 = vpop.f32.mrf.mxu0
        %v1865 = vadd.f32 %v1806, %v1864
        %1866 = vmatmul.bf16.gmra.mxu0 %v882
        %v1867 = vpop.f32.mrf.mxu0
        %v1868 = vadd.f32 %v1809, %v1867
        %v1869 = vpop.f32.mrf.mxu0
        %v1870 = vadd.f32 %v1811, %v1869
        %1871 = vmatmul.bf16.gmra.mxu0 %v917
        %v1872 = vpop.f32.mrf.mxu0
        %v1873 = vadd.f32 %v1814, %v1872
        %v1874 = vpop.f32.mrf.mxu0
        %v1875 = vadd.f32 %v1816, %v1874
        %1876 = vdwg.mxu0
        %1877 = vmatpush.bf16.msra.mxu0 %v1434
        %1878 = vmatpush.bf16.msra.mxu0 %v1433
        %1879 = vmatpush.bf16.msra.mxu0 %v1432
        %1880 = vmatpush.bf16.msra.mxu0 %v1431
        %1881 = vmatpush.bf16.msra.mxu0 %v1430
        %1882 = vmatpush.bf16.msra.mxu0 %v1429
        %1883 = vmatpush.bf16.msra.mxu0 %v1428
        %1884 = vmatpush.bf16.msra.mxu0 %v1427
        %1885 = vmatmul.bf16.gmra.mxu0 %v673
        %v1886 = vpop.f32.mrf.mxu0
        %v1887 = vadd.f32 %v1828, %v1886
        %v1888 = vpop.f32.mrf.mxu0
        %v1889 = vadd.f32 %v1830, %v1888
        %1890 = vmatmul.bf16.gmra.mxu0 %v674
        %v1891 = vpop.f32.mrf.mxu0
        %v1892 = vadd.f32 %v1833, %v1891
        %v1893 = vpop.f32.mrf.mxu0
        %v1894 = vadd.f32 %v1835, %v1893
        %1895 = vmatmul.bf16.gmra.mxu0 %v675
        %v1896 = vpop.f32.mrf.mxu0
        %v1897 = vadd.f32 %v1838, %v1896
        %v1898 = vpop.f32.mrf.mxu0
        %v1899 = vadd.f32 %v1840, %v1898
        %1900 = vmatmul.bf16.gmra.mxu0 %v676
        %v1901 = vpop.f32.mrf.mxu0
        %v1902 = vadd.f32 %v1843, %v1901
        %v1903 = vpop.f32.mrf.mxu0
        %v1904 = vadd.f32 %v1845, %v1903
        %1905 = vmatmul.bf16.gmra.mxu0 %v677
        %v1906 = vpop.f32.mrf.mxu0
        %v1907 = vadd.f32 %v1848, %v1906
        %v1908 = vpop.f32.mrf.mxu0
        %v1909 = vadd.f32 %v1850, %v1908
        %1910 = vmatmul.bf16.gmra.mxu0 %v678
        %v1911 = vpop.f32.mrf.mxu0
        %v1912 = vadd.f32 %v1853, %v1911
        %v1913 = vpop.f32.mrf.mxu0
        %v1914 = vadd.f32 %v1855, %v1913
        %1915 = vmatmul.bf16.gmra.mxu0 %v679
        %v1916 = vpop.f32.mrf.mxu0
        %v1917 = vadd.f32 %v1858, %v1916
        %v1918 = vpop.f32.mrf.mxu0
        %v1919 = vadd.f32 %v1860, %v1918
        %1920 = vmatmul.bf16.gmra.mxu0 %v680
        %v1921 = vpop.f32.mrf.mxu0
        %v1922 = vadd.f32 %v1863, %v1921
        %v1923 = vpop.f32.mrf.mxu0
        %v1924 = vadd.f32 %v1865, %v1923
        %1925 = vmatmul.bf16.gmra.mxu0 %v897
        %v1926 = vpop.f32.mrf.mxu0
        %v1927 = vadd.f32 %v1868, %v1926
        %v1928 = vpop.f32.mrf.mxu0
        %v1929 = vadd.f32 %v1870, %v1928
        %1930 = vmatmul.bf16.gmra.mxu0 %v923
        %v1931 = vpop.f32.mrf.mxu0
        %v1932 = vadd.f32 %v1873, %v1931
        %v1933 = vpop.f32.mrf.mxu0
        %v1934 = vadd.f32 %v1875, %v1933
        %1935 = vdwg.mxu0
        %1936 = vmatpush.bf16.msra.mxu0 %v1442
        %1937 = vmatpush.bf16.msra.mxu0 %v1441
        %1938 = vmatpush.bf16.msra.mxu0 %v1440
        %1939 = vmatpush.bf16.msra.mxu0 %v1439
        %1940 = vmatpush.bf16.msra.mxu0 %v1438
        %1941 = vmatpush.bf16.msra.mxu0 %v1437
        %1942 = vmatpush.bf16.msra.mxu0 %v1436
        %1943 = vmatpush.bf16.msra.mxu0 %v1435
        %1944 = vmatmul.bf16.gmra.mxu0 %v757
        %v1945 = vpop.f32.mrf.mxu0
        %v1946 = vadd.f32 %v1887, %v1945
        %v1947 = vpop.f32.mrf.mxu0
        %v1948 = vadd.f32 %v1889, %v1947
        %1949 = vmatmul.bf16.gmra.mxu0 %v769
        %v1950 = vpop.f32.mrf.mxu0
        %v1951 = vadd.f32 %v1892, %v1950
        %v1952 = vpop.f32.mrf.mxu0
        %v1953 = vadd.f32 %v1894, %v1952
        %1954 = vmatmul.bf16.gmra.mxu0 %v781
        %v1955 = vpop.f32.mrf.mxu0
        %v1956 = vadd.f32 %v1897, %v1955
        %v1957 = vpop.f32.mrf.mxu0
        %v1958 = vadd.f32 %v1899, %v1957
        %1959 = vmatmul.bf16.gmra.mxu0 %v793
        %v1960 = vpop.f32.mrf.mxu0
        %v1961 = vadd.f32 %v1902, %v1960
        %v1962 = vpop.f32.mrf.mxu0
        %v1963 = vadd.f32 %v1904, %v1962
        %1964 = vmatmul.bf16.gmra.mxu0 %v805
        %v1965 = vpop.f32.mrf.mxu0
        %v1966 = vadd.f32 %v1907, %v1965
        %v1967 = vpop.f32.mrf.mxu0
        %v1968 = vadd.f32 %v1909, %v1967
        %1969 = vmatmul.bf16.gmra.mxu0 %v817
        %v1970 = vpop.f32.mrf.mxu0
        %v1971 = vadd.f32 %v1912, %v1970
        %v1972 = vpop.f32.mrf.mxu0
        %v1973 = vadd.f32 %v1914, %v1972
        %1974 = vmatmul.bf16.gmra.mxu0 %v829
        %v1975 = vpop.f32.mrf.mxu0
        %v1976 = vadd.f32 %v1917, %v1975
        %v1977 = vpop.f32.mrf.mxu0
        %v1978 = vadd.f32 %v1919, %v1977
        %1979 = vmatmul.bf16.gmra.mxu0 %v841
        %v1980 = vpop.f32.mrf.mxu0
        %v1981 = vadd.f32 %v1922, %v1980
        %v1982 = vpop.f32.mrf.mxu0
        %v1983 = vadd.f32 %v1924, %v1982
        %1984 = vmatmul.bf16.gmra.mxu0 %v913
        %v1985 = vpop.f32.mrf.mxu0
        %v1986 = vadd.f32 %v1927, %v1985
        %v1987 = vpop.f32.mrf.mxu0
        %v1988 = vadd.f32 %v1929, %v1987
        %1989 = vmatmul.bf16.gmra.mxu0 %v939
        %v1990 = vpop.f32.mrf.mxu0
        %v1991 = vadd.f32 %v1932, %v1990
        %v1992 = vpop.f32.mrf.mxu0
        %v1993 = vadd.f32 %v1934, %v1992
        %1994 = vdwg.mxu0
        %1995 = vmatpush.bf16.msra.mxu0 %v1450
        %1996 = vmatpush.bf16.msra.mxu0 %v1449
        %1997 = vmatpush.bf16.msra.mxu0 %v1448
        %1998 = vmatpush.bf16.msra.mxu0 %v1447
        %1999 = vmatpush.bf16.msra.mxu0 %v1446
        %2000 = vmatpush.bf16.msra.mxu0 %v1445
        %2001 = vmatpush.bf16.msra.mxu0 %v1444
        %2002 = vmatpush.bf16.msra.mxu0 %v1443
        %2003 = vmatmul.bf16.gmra.mxu0 %v861
        %v2004 = vpop.f32.mrf.mxu0
        %v2005 = vadd.f32 %v1946, %v2004
        %v2006 = vpop.f32.mrf.mxu0
        %v2007 = vadd.f32 %v1948, %v2006
        %2008 = vmatmul.bf16.gmra.mxu0 %v864
        %v2009 = vpop.f32.mrf.mxu0
        %v2010 = vadd.f32 %v1951, %v2009
        %v2011 = vpop.f32.mrf.mxu0
        %v2012 = vadd.f32 %v1953, %v2011
        %2013 = vmatmul.bf16.gmra.mxu0 %v867
        %v2014 = vpop.f32.mrf.mxu0
        %v2015 = vadd.f32 %v1956, %v2014
        %v2016 = vpop.f32.mrf.mxu0
        %v2017 = vadd.f32 %v1958, %v2016
        %2018 = vmatmul.bf16.gmra.mxu0 %v870
        %v2019 = vpop.f32.mrf.mxu0
        %v2020 = vadd.f32 %v1961, %v2019
        %v2021 = vpop.f32.mrf.mxu0
        %v2022 = vadd.f32 %v1963, %v2021
        %2023 = vmatmul.bf16.gmra.mxu0 %v873
        %v2024 = vpop.f32.mrf.mxu0
        %v2025 = vadd.f32 %v1966, %v2024
        %v2026 = vpop.f32.mrf.mxu0
        %v2027 = vadd.f32 %v1968, %v2026
        %2028 = vmatmul.bf16.gmra.mxu0 %v876
        %v2029 = vpop.f32.mrf.mxu0
        %v2030 = vadd.f32 %v1971, %v2029
        %v2031 = vpop.f32.mrf.mxu0
        %v2032 = vadd.f32 %v1973, %v2031
        %2033 = vmatmul.bf16.gmra.mxu0 %v879
        %v2034 = vpop.f32.mrf.mxu0
        %v2035 = vadd.f32 %v1976, %v2034
        %v2036 = vpop.f32.mrf.mxu0
        %v2037 = vadd.f32 %v1978, %v2036
        %2038 = vmatmul.bf16.gmra.mxu0 %v882
        %v2039 = vpop.f32.mrf.mxu0
        %v2040 = vadd.f32 %v1981, %v2039
        %v2041 = vpop.f32.mrf.mxu0
        %v2042 = vadd.f32 %v1983, %v2041
        %2043 = vmatmul.bf16.gmra.mxu0 %v917
        %v2044 = vpop.f32.mrf.mxu0
        %v2045 = vadd.f32 %v1986, %v2044
        %v2046 = vpop.f32.mrf.mxu0
        %v2047 = vadd.f32 %v1988, %v2046
        %2048 = vmatmul.bf16.gmra.mxu0 %v943
        %v2049 = vpop.f32.mrf.mxu0
        %v2050 = vadd.f32 %v1991, %v2049
        %v2051 = vpop.f32.mrf.mxu0
        %v2052 = vadd.f32 %v1993, %v2051
        %2053 = vdwg.mxu0
        %v2054 = vmax.f32 %v2005, 0.0
        %v2055 = vmax.f32 %v2007, 0.0
        %v2056 = vmax.f32 %v2010, 0.0
        %v2057 = vmax.f32 %v2012, 0.0
        %v2058 = vmax.f32 %v2015, 0.0
        %v2059 = vmax.f32 %v2017, 0.0
        %v2060 = vmax.f32 %v2020, 0.0
        %v2061 = vmax.f32 %v2022, 0.0
        %v2062 = vmax.f32 %v2025, 0.0
        %v2063 = vmax.f32 %v2027, 0.0
        %v2064 = vmax.f32 %v2030, 0.0
        %v2065 = vmax.f32 %v2032, 0.0
        %v2066 = vmax.f32 %v2035, 0.0
        %v2067 = vmax.f32 %v2037, 0.0
        %v2068 = vmax.f32 %v2040, 0.0
        %v2069 = vmax.f32 %v2042, 0.0
        %v2070 = vmax.f32 %v2045, 0.0
        %v2071 = vmax.f32 %v2047, 0.0
        %v2072 = vmax.f32 %v2050, 0.0
        %v2073 = vmax.f32 %v2052, 0.0
        %v2074 = vld [vmem:[%s5 + $0x1] sm:$0x1]
        %v2075 = vperm.slane %v2074, 0
        %v2076 = vmul.f32 %v2054, %v2075
        %v2077 = vmul.f32 %v2055, %v2075
        %v2078 = vmul.f32 %v2056, %v2075
        %v2079 = vmul.f32 %v2057, %v2075
        %v2080 = vmul.f32 %v2058, %v2075
        %v2081 = vmul.f32 %v2059, %v2075
        %v2082 = vmul.f32 %v2060, %v2075
        %v2083 = vmul.f32 %v2061, %v2075
        %v2084 = vmul.f32 %v2062, %v2075
        %v2085 = vmul.f32 %v2063, %v2075
        %v2086 = vmul.f32 %v2064, %v2075
        %v2087 = vmul.f32 %v2065, %v2075
        %v2088 = vmul.f32 %v2066, %v2075
        %v2089 = vmul.f32 %v2067, %v2075
        %v2090 = vmul.f32 %v2068, %v2075
        %v2091 = vmul.f32 %v2069, %v2075
        %v2092 = vmul.f32 %v2070, %v2075
        %v2093 = vmul.f32 %v2071, %v2075
        %v2094 = vmul.f32 %v2072, %v2075
        %v2095 = vmul.f32 %v2073, %v2075
        %v2096 = vld [vmem:[%s5 + $0x2] sm:$0x1]
        %v2097 = vperm.slane %v2096, 0
        %v2098 = vadd.f32 %v2076, %v2097
        %v2099 = vadd.f32 %v2077, %v2097
        %v2100 = vadd.f32 %v2078, %v2097
        %v2101 = vadd.f32 %v2079, %v2097
        %v2102 = vadd.f32 %v2080, %v2097
        %v2103 = vadd.f32 %v2081, %v2097
        %v2104 = vadd.f32 %v2082, %v2097
        %v2105 = vadd.f32 %v2083, %v2097
        %v2106 = vadd.f32 %v2084, %v2097
        %v2107 = vadd.f32 %v2085, %v2097
        %v2108 = vadd.f32 %v2086, %v2097
        %v2109 = vadd.f32 %v2087, %v2097
        %v2110 = vadd.f32 %v2088, %v2097
        %v2111 = vadd.f32 %v2089, %v2097
        %v2112 = vadd.f32 %v2090, %v2097
        %v2113 = vadd.f32 %v2091, %v2097
        %v2114 = vadd.f32 %v2092, %v2097
        %v2115 = vadd.f32 %v2093, %v2097
        %v2116 = vadd.f32 %v2094, %v2097
        %v2117 = vadd.f32 %v2095, %v2097
        %vm2118 = vcmp.ge.s32.totalorder %v429, 1
        %vm2119 = vcmp.ge.s32.totalorder %v430, 1
        %vm2120 = vcmp.ge.s32.totalorder %v431, 1
        %vm2121 = vcmp.ge.s32.totalorder %v432, 1
        %vm2122 = vcmp.ge.s32.totalorder %v433, 1
        %vm2123 = vcmp.ge.s32.totalorder %v434, 1
        %vm2124 = vcmp.ge.s32.totalorder %v435, 1
        %vm2125 = vcmp.ge.s32.totalorder %v436, 1
        %vm2126 = vcmp.ge.s32.totalorder %v437, 1
        %vm2127 = vcmp.ge.s32.totalorder %v438, 1
        %vm2128 = vcmp.le.s32.totalorder %v429, 16
        %vm2129 = vcmp.le.s32.totalorder %v430, 16
        %vm2130 = vcmp.le.s32.totalorder %v431, 16
        %vm2131 = vcmp.le.s32.totalorder %v432, 16
        %vm2132 = vcmp.le.s32.totalorder %v433, 16
        %vm2133 = vcmp.le.s32.totalorder %v434, 16
        %vm2134 = vcmp.le.s32.totalorder %v435, 16
        %vm2135 = vcmp.le.s32.totalorder %v436, 16
        %vm2136 = vcmp.le.s32.totalorder %v437, 16
        %vm2137 = vcmp.le.s32.totalorder %v438, 16
        %vm2138 = vmand %vm2118, %vm2128
        %vm2139 = vmand %vm2119, %vm2129
        %vm2140 = vmand %vm2120, %vm2130
        %vm2141 = vmand %vm2121, %vm2131
        %vm2142 = vmand %vm2122, %vm2132
        %vm2143 = vmand %vm2123, %vm2133
        %vm2144 = vmand %vm2124, %vm2134
        %vm2145 = vmand %vm2125, %vm2135
        %vm2146 = vmand %vm2126, %vm2136
        %vm2147 = vmand %vm2127, %vm2137
        %v2148 = vsel %vm2138, %v2098, 0.0
        %v2149 = vsel %vm2138, %v2099, 0.0
        %v2150 = vsel %vm2139, %v2100, 0.0
        %v2151 = vsel %vm2139, %v2101, 0.0
        %v2152 = vsel %vm2140, %v2102, 0.0
        %v2153 = vsel %vm2140, %v2103, 0.0
        %v2154 = vsel %vm2141, %v2104, 0.0
        %v2155 = vsel %vm2141, %v2105, 0.0
        %v2156 = vsel %vm2142, %v2106, 0.0
        %v2157 = vsel %vm2142, %v2107, 0.0
        %v2158 = vsel %vm2143, %v2108, 0.0
        %v2159 = vsel %vm2143, %v2109, 0.0
        %v2160 = vsel %vm2144, %v2110, 0.0
        %v2161 = vsel %vm2144, %v2111, 0.0
        %v2162 = vsel %vm2145, %v2112, 0.0
        %v2163 = vsel %vm2145, %v2113, 0.0
        %v2164 = vsel %vm2146, %v2114, 0.0
        %v2165 = vsel %vm2146, %v2115, 0.0
        %v2166 = vsel %vm2147, %v2116, 0.0
        %v2167 = vsel %vm2147, %v2117, 0.0
        %v2168 = vpack.c.bf16 %v2148, %v2148
        %v2169 = vpack.c.bf16 %v2149, %v2149
        %v2170 = vpack.c.bf16 %v2150, %v2150
        %v2171 = vpack.c.bf16 %v2151, %v2151
        %v2172 = vpack.c.bf16 %v2152, %v2152
        %v2173 = vpack.c.bf16 %v2153, %v2153
        %v2174 = vpack.c.bf16 %v2154, %v2154
        %v2175 = vpack.c.bf16 %v2155, %v2155
        %v2176 = vpack.c.bf16 %v2156, %v2156
        %v2177 = vpack.c.bf16 %v2157, %v2157
        %v2178 = vpack.c.bf16 %v2158, %v2158
        %v2179 = vpack.c.bf16 %v2159, %v2159
        %v2180 = vpack.c.bf16 %v2160, %v2160
        %v2181 = vpack.c.bf16 %v2161, %v2161
        %v2182 = vpack.c.bf16 %v2162, %v2162
        %v2183 = vpack.c.bf16 %v2163, %v2163
        %v2184 = vpack.c.bf16 %v2164, %v2164
        %v2185 = vpack.c.bf16 %v2165, %v2165
        %v2186 = vpack.c.bf16 %v2166, %v2166
        %v2187 = vpack.c.bf16 %v2167, %v2167
        %vm2188 = vsmask.f32 256
        %vm2189 = vsmask.f32 4368
        %vm2190 = vmor %vm2188, %vm2189
        %v2192 = vshrl.u32 %v2168, 16
        %v2194 = vrot.slane %v2192, 7
        %v2195 = vshll.u32 %v2168, 16
        %v2197 = vor.u32 %v2194, %v2195
        %v2198 = vrot.slane %v2194, 4
        %v2200 = vshrl.u32 %v2169, 16
        %v2202 = vrot.slane %v2200, 7
        %v2203 = vshll.u32 %v2169, 16
        %v2205 = vor.u32 %v2202, %v2203
        %v2206 = vsel %vm2190, %v2198, %v2205
        %v2207 = vrot.slane %v2202, 4
        %v2209 = vshrl.u32 %v2170, 16
        %v2211 = vrot.slane %v2209, 7
        %v2212 = vshll.u32 %v2170, 16
        %v2214 = vor.u32 %v2211, %v2212
        %v2215 = vrot.slane %v2211, 4
        %v2217 = vshrl.u32 %v2171, 16
        %v2219 = vrot.slane %v2217, 7
        %v2220 = vshll.u32 %v2171, 16
        %v2222 = vor.u32 %v2219, %v2220
        %v2223 = vsel %vm2190, %v2215, %v2222
        %v2224 = vrot.slane %v2219, 4
        %v2226 = vshrl.u32 %v2172, 16
        %v2228 = vrot.slane %v2226, 7
        %v2229 = vshll.u32 %v2172, 16
        %v2231 = vor.u32 %v2228, %v2229
        %v2232 = vrot.slane %v2228, 4
        %v2234 = vshrl.u32 %v2173, 16
        %v2236 = vrot.slane %v2234, 7
        %v2237 = vshll.u32 %v2173, 16
        %v2239 = vor.u32 %v2236, %v2237
        %v2240 = vsel %vm2190, %v2232, %v2239
        %v2241 = vrot.slane %v2236, 4
        %v2243 = vshrl.u32 %v2174, 16
        %v2245 = vrot.slane %v2243, 7
        %v2246 = vshll.u32 %v2174, 16
        %v2248 = vor.u32 %v2245, %v2246
        %v2249 = vrot.slane %v2245, 4
        %v2251 = vshrl.u32 %v2175, 16
        %v2253 = vrot.slane %v2251, 7
        %v2254 = vshll.u32 %v2175, 16
        %v2256 = vor.u32 %v2253, %v2254
        %v2257 = vsel %vm2190, %v2249, %v2256
        %v2258 = vrot.slane %v2253, 4
        %v2260 = vshrl.u32 %v2176, 16
        %v2262 = vrot.slane %v2260, 7
        %v2263 = vshll.u32 %v2176, 16
        %v2265 = vor.u32 %v2262, %v2263
        %v2266 = vrot.slane %v2262, 4
        %v2268 = vshrl.u32 %v2177, 16
        %v2270 = vrot.slane %v2268, 7
        %v2271 = vshll.u32 %v2177, 16
        %v2273 = vor.u32 %v2270, %v2271
        %v2274 = vsel %vm2190, %v2266, %v2273
        %v2275 = vrot.slane %v2270, 4
        %v2277 = vshrl.u32 %v2178, 16
        %v2279 = vrot.slane %v2277, 7
        %v2280 = vshll.u32 %v2178, 16
        %v2282 = vor.u32 %v2279, %v2280
        %v2283 = vrot.slane %v2279, 4
        %v2285 = vshrl.u32 %v2179, 16
        %v2287 = vrot.slane %v2285, 7
        %v2288 = vshll.u32 %v2179, 16
        %v2290 = vor.u32 %v2287, %v2288
        %v2291 = vsel %vm2190, %v2283, %v2290
        %v2292 = vrot.slane %v2287, 4
        %v2294 = vshrl.u32 %v2180, 16
        %v2296 = vrot.slane %v2294, 7
        %v2297 = vshll.u32 %v2180, 16
        %v2299 = vor.u32 %v2296, %v2297
        %v2300 = vrot.slane %v2296, 4
        %v2302 = vshrl.u32 %v2181, 16
        %v2304 = vrot.slane %v2302, 7
        %v2305 = vshll.u32 %v2181, 16
        %v2307 = vor.u32 %v2304, %v2305
        %v2308 = vsel %vm2190, %v2300, %v2307
        %v2309 = vrot.slane %v2304, 4
        %v2311 = vshrl.u32 %v2182, 16
        %v2313 = vrot.slane %v2311, 7
        %v2314 = vshll.u32 %v2182, 16
        %v2316 = vor.u32 %v2313, %v2314
        %v2317 = vrot.slane %v2313, 4
        %v2319 = vshrl.u32 %v2183, 16
        %v2321 = vrot.slane %v2319, 7
        %v2322 = vshll.u32 %v2183, 16
        %v2324 = vor.u32 %v2321, %v2322
        %v2325 = vsel %vm2190, %v2317, %v2324
        %v2326 = vrot.slane %v2321, 4
        %v2328 = vshrl.u32 %v2184, 16
        %v2330 = vrot.slane %v2328, 7
        %v2331 = vshll.u32 %v2184, 16
        %v2333 = vor.u32 %v2330, %v2331
        %v2334 = vrot.slane %v2330, 4
        %v2336 = vshrl.u32 %v2185, 16
        %v2338 = vrot.slane %v2336, 7
        %v2339 = vshll.u32 %v2185, 16
        %v2341 = vor.u32 %v2338, %v2339
        %v2342 = vsel %vm2190, %v2334, %v2341
        %v2343 = vrot.slane %v2338, 4
        %v2345 = vshrl.u32 %v2186, 16
        %v2347 = vrot.slane %v2345, 7
        %v2348 = vshll.u32 %v2186, 16
        %v2350 = vor.u32 %v2347, %v2348
        %v2351 = vrot.slane %v2347, 4
        %v2353 = vshrl.u32 %v2187, 16
        %v2355 = vrot.slane %v2353, 7
        %v2356 = vshll.u32 %v2187, 16
        %v2358 = vor.u32 %v2355, %v2356
        %v2359 = vsel %vm2190, %v2351, %v2358
        %v2360 = vrot.slane %v2355, 4
        %vm2391 = vcmask 1043456
        %vm2392 = vsmask.f32 7938
        %vm2393 = vmand %vm2391, %vm2392
        %v2394 = vld [vmem:[#allocation2] sm:$0xf]
        %v2395 = vsel %vm2393, %v2197, %v2394
        %2396 = vst [vmem:[#allocation2] sm:$0xf] %v2395
        %2397 = vst [vmem:[#allocation2 + $0x4] sm:$0xf] %v2206
        %vm2398 = vcmask 1040384
        %vm2399 = vmand %vm2398, %vm2188
        %v2400 = vld [vmem:[#allocation2 + $0x8] sm:$0x1]
        %v2401 = vsel %vm2399, %v2207, %v2400
        %2402 = vst [vmem:[#allocation2 + $0x8] sm:$0x1] %v2401
        %v2403 = vld [vmem:[#allocation2 + $0xc] sm:$0xf]
        %v2404 = vsel %vm2393, %v2214, %v2403
        %2405 = vst [vmem:[#allocation2 + $0xc] sm:$0xf] %v2404
        %2406 = vst [vmem:[#allocation2 + $0x10] sm:$0xf] %v2223
        %v2407 = vld [vmem:[#allocation2 + $0x14] sm:$0x1]
        %v2408 = vsel %vm2399, %v2224, %v2407
        %2409 = vst [vmem:[#allocation2 + $0x14] sm:$0x1] %v2408
        %v2410 = vld [vmem:[#allocation2 + $0x18] sm:$0xf]
        %v2411 = vsel %vm2393, %v2231, %v2410
        %2412 = vst [vmem:[#allocation2 + $0x18] sm:$0xf] %v2411
        %2413 = vst [vmem:[#allocation2 + $0x1c] sm:$0xf] %v2240
        %v2414 = vld [vmem:[#allocation2 + $0x20] sm:$0x1]
        %v2415 = vsel %vm2399, %v2241, %v2414
        %2416 = vst [vmem:[#allocation2 + $0x20] sm:$0x1] %v2415
        %v2417 = vld [vmem:[#allocation2 + $0x24] sm:$0xf]
        %v2418 = vsel %vm2393, %v2248, %v2417
        %2419 = vst [vmem:[#allocation2 + $0x24] sm:$0xf] %v2418
        %2420 = vst [vmem:[#allocation2 + $0x28] sm:$0xf] %v2257
        %v2421 = vld [vmem:[#allocation2 + $0x2c] sm:$0x1]
        %v2422 = vsel %vm2399, %v2258, %v2421
        %2423 = vst [vmem:[#allocation2 + $0x2c] sm:$0x1] %v2422
        %v2424 = vld [vmem:[#allocation2 + $0x30] sm:$0xf]
        %v2425 = vsel %vm2393, %v2265, %v2424
        %2426 = vst [vmem:[#allocation2 + $0x30] sm:$0xf] %v2425
        %2427 = vst [vmem:[#allocation2 + $0x34] sm:$0xf] %v2274
        %v2428 = vld [vmem:[#allocation2 + $0x38] sm:$0x1]
        %v2429 = vsel %vm2399, %v2275, %v2428
        %2430 = vst [vmem:[#allocation2 + $0x38] sm:$0x1] %v2429
        %v2431 = vld [vmem:[#allocation2 + $0x3c] sm:$0xf]
        %v2432 = vsel %vm2393, %v2282, %v2431
        %2433 = vst [vmem:[#allocation2 + $0x3c] sm:$0xf] %v2432
        %2434 = vst [vmem:[#allocation2 + $0x40] sm:$0xf] %v2291
        %v2435 = vld [vmem:[#allocation2 + $0x44] sm:$0x1]
        %v2436 = vsel %vm2399, %v2292, %v2435
        %2437 = vst [vmem:[#allocation2 + $0x44] sm:$0x1] %v2436
        %v2438 = vld [vmem:[#allocation2 + $0x48] sm:$0xf]
        %v2439 = vsel %vm2393, %v2299, %v2438
        %2440 = vst [vmem:[#allocation2 + $0x48] sm:$0xf] %v2439
        %2441 = vst [vmem:[#allocation2 + $0x4c] sm:$0xf] %v2308
        %v2442 = vld [vmem:[#allocation2 + $0x50] sm:$0x1]
        %v2443 = vsel %vm2399, %v2309, %v2442
        %2444 = vst [vmem:[#allocation2 + $0x50] sm:$0x1] %v2443
        %v2445 = vld [vmem:[#allocation2 + $0x54] sm:$0xf]
        %v2446 = vsel %vm2393, %v2316, %v2445
        %2447 = vst [vmem:[#allocation2 + $0x54] sm:$0xf] %v2446
        %2448 = vst [vmem:[#allocation2 + $0x58] sm:$0xf] %v2325
        %v2449 = vld [vmem:[#allocation2 + $0x5c] sm:$0x1]
        %v2450 = vsel %vm2399, %v2326, %v2449
        %2451 = vst [vmem:[#allocation2 + $0x5c] sm:$0x1] %v2450
        %v2452 = vld [vmem:[#allocation2 + $0x60] sm:$0xf]
        %v2453 = vsel %vm2393, %v2333, %v2452
        %2454 = vst [vmem:[#allocation2 + $0x60] sm:$0xf] %v2453
        %2455 = vst [vmem:[#allocation2 + $0x64] sm:$0xf] %v2342
        %v2456 = vld [vmem:[#allocation2 + $0x68] sm:$0x1]
        %v2457 = vsel %vm2399, %v2343, %v2456
        %2458 = vst [vmem:[#allocation2 + $0x68] sm:$0x1] %v2457
        %v2459 = vld [vmem:[#allocation2 + $0x6c] sm:$0xf]
        %v2460 = vsel %vm2393, %v2350, %v2459
        %2461 = vst [vmem:[#allocation2 + $0x6c] sm:$0xf] %v2460
        %2462 = vst [vmem:[#allocation2 + $0x70] sm:$0xf] %v2359
        %v2463 = vld [vmem:[#allocation2 + $0x74] sm:$0x1]
        %v2464 = vsel %vm2399, %v2360, %v2463
        %2465 = vst [vmem:[#allocation2 + $0x74] sm:$0x1] %v2464
        %v2466 = vld [vmem:[#allocation2] sm:$0x1]
        %v2467 = vsel %vm2399, 0, %v2466
        %2468 = vst [vmem:[#allocation2] sm:$0x1] %v2467
        %v2469 = vld [vmem:[#allocation2 + $0xc] sm:$0x1]
        %v2470 = vsel %vm2399, 0, %v2469
        %2471 = vst [vmem:[#allocation2 + $0xc] sm:$0x1] %v2470
        %v2472 = vld [vmem:[#allocation2 + $0x18] sm:$0x1]
        %v2473 = vsel %vm2399, 0, %v2472
        %2474 = vst [vmem:[#allocation2 + $0x18] sm:$0x1] %v2473
        %v2475 = vld [vmem:[#allocation2 + $0x24] sm:$0x1]
        %v2476 = vsel %vm2399, 0, %v2475
        %2477 = vst [vmem:[#allocation2 + $0x24] sm:$0x1] %v2476
        %v2478 = vld [vmem:[#allocation2 + $0x30] sm:$0x1]
        %v2479 = vsel %vm2399, 0, %v2478
        %2480 = vst [vmem:[#allocation2 + $0x30] sm:$0x1] %v2479
        %v2481 = vld [vmem:[#allocation2 + $0x3c] sm:$0x1]
        %v2482 = vsel %vm2399, 0, %v2481
        %2483 = vst [vmem:[#allocation2 + $0x3c] sm:$0x1] %v2482
        %v2484 = vld [vmem:[#allocation2 + $0x48] sm:$0x1]
        %v2485 = vsel %vm2399, 0, %v2484
        %2486 = vst [vmem:[#allocation2 + $0x48] sm:$0x1] %v2485
        %v2487 = vld [vmem:[#allocation2 + $0x54] sm:$0x1]
        %v2488 = vsel %vm2399, 0, %v2487
        %2489 = vst [vmem:[#allocation2 + $0x54] sm:$0x1] %v2488
        %v2490 = vld [vmem:[#allocation2 + $0x60] sm:$0x1]
        %v2491 = vsel %vm2399, 0, %v2490
        %2492 = vst [vmem:[#allocation2 + $0x60] sm:$0x1] %v2491
        %v2493 = vld [vmem:[#allocation2 + $0x6c] sm:$0x1]
        %v2494 = vsel %vm2399, 0, %v2493
        %2495 = vst [vmem:[#allocation2 + $0x6c] sm:$0x1] %v2494
        %vm2496 = vmand %vm2398, %vm2392
        %v2497 = vld [vmem:[#allocation2 + $0x8] sm:$0x1]
        %v2498 = vsel %vm2496, 0, %v2497
        %2499 = vst [vmem:[#allocation2 + $0x8] sm:$0x1] %v2498
        %v2500 = vld [vmem:[#allocation2 + $0x14] sm:$0x1]
        %v2501 = vsel %vm2496, 0, %v2500
        %2502 = vst [vmem:[#allocation2 + $0x14] sm:$0x1] %v2501
        %v2503 = vld [vmem:[#allocation2 + $0x20] sm:$0x1]
        %v2504 = vsel %vm2496, 0, %v2503
        %2505 = vst [vmem:[#allocation2 + $0x20] sm:$0x1] %v2504
        %v2506 = vld [vmem:[#allocation2 + $0x2c] sm:$0x1]
        %v2507 = vsel %vm2496, 0, %v2506
        %2508 = vst [vmem:[#allocation2 + $0x2c] sm:$0x1] %v2507
        %v2509 = vld [vmem:[#allocation2 + $0x38] sm:$0x1]
        %v2510 = vsel %vm2496, 0, %v2509
        %2511 = vst [vmem:[#allocation2 + $0x38] sm:$0x1] %v2510
        %v2512 = vld [vmem:[#allocation2 + $0x44] sm:$0x1]
        %v2513 = vsel %vm2496, 0, %v2512
        %2514 = vst [vmem:[#allocation2 + $0x44] sm:$0x1] %v2513
        %v2515 = vld [vmem:[#allocation2 + $0x50] sm:$0x1]
        %v2516 = vsel %vm2496, 0, %v2515
        %2517 = vst [vmem:[#allocation2 + $0x50] sm:$0x1] %v2516
        %v2518 = vld [vmem:[#allocation2 + $0x5c] sm:$0x1]
        %v2519 = vsel %vm2496, 0, %v2518
        %2520 = vst [vmem:[#allocation2 + $0x5c] sm:$0x1] %v2519
        %v2521 = vld [vmem:[#allocation2 + $0x68] sm:$0x1]
        %v2522 = vsel %vm2496, 0, %v2521
        %2523 = vst [vmem:[#allocation2 + $0x68] sm:$0x1] %v2522
        %v2524 = vld [vmem:[#allocation2 + $0x74] sm:$0x1]
        %v2525 = vsel %vm2496, 0, %v2524
        %2526 = vst [vmem:[#allocation2 + $0x74] sm:$0x1] %v2525
        %v2527 = vld [vmem:[#allocation2] sm:$0xf]
        %v2528 = vld [vmem:[#allocation2 + $0x4] sm:$0xf]
        %v2529 = vld [vmem:[#allocation2 + $0x8] sm:$0x1]
        %v2530 = vld [vmem:[#allocation2 + $0xc] sm:$0xf]
        %v2531 = vld [vmem:[#allocation2 + $0x10] sm:$0xf]
        %v2532 = vld [vmem:[#allocation2 + $0x14] sm:$0x1]
        %v2533 = vld [vmem:[#allocation2 + $0x18] sm:$0xf]
        %v2534 = vld [vmem:[#allocation2 + $0x1c] sm:$0xf]
        %v2535 = vld [vmem:[#allocation2 + $0x20] sm:$0x1]
        %v2536 = vld [vmem:[#allocation2 + $0x24] sm:$0xf]
        %v2537 = vld [vmem:[#allocation2 + $0x28] sm:$0xf]
        %v2538 = vld [vmem:[#allocation2 + $0x2c] sm:$0x1]
        %v2539 = vld [vmem:[#allocation2 + $0x30] sm:$0xf]
        %v2540 = vld [vmem:[#allocation2 + $0x34] sm:$0xf]
        %v2541 = vld [vmem:[#allocation2 + $0x38] sm:$0x1]
        %v2542 = vld [vmem:[#allocation2 + $0x3c] sm:$0xf]
        %v2543 = vld [vmem:[#allocation2 + $0x40] sm:$0xf]
        %v2544 = vld [vmem:[#allocation2 + $0x44] sm:$0x1]
        %v2545 = vld [vmem:[#allocation2 + $0x48] sm:$0xf]
        %v2546 = vld [vmem:[#allocation2 + $0x4c] sm:$0xf]
        %v2547 = vld [vmem:[#allocation2 + $0x50] sm:$0x1]
        %v2548 = vld [vmem:[#allocation2 + $0x54] sm:$0xf]
        %v2549 = vld [vmem:[#allocation2 + $0x58] sm:$0xf]
        %v2550 = vld [vmem:[#allocation2 + $0x5c] sm:$0x1]
        %v2551 = vld [vmem:[#allocation2 + $0x60] sm:$0xf]
        %v2552 = vld [vmem:[#allocation2 + $0x64] sm:$0xf]
        %v2553 = vld [vmem:[#allocation2 + $0x68] sm:$0x1]
        %v2554 = vld [vmem:[#allocation2 + $0x6c] sm:$0xf]
        %v2555 = vld [vmem:[#allocation2 + $0x70] sm:$0xf]
        %v2556 = vld [vmem:[#allocation2 + $0x74] sm:$0x1]
        %v2573 = vunpack.c.l.b16 %v2527
        %v2574 = vunpack.c.l.b16 %v2528
        %v2575 = vunpack.c.l.b16 %v2530
        %v2576 = vunpack.c.l.b16 %v2531
        %v2577 = vunpack.c.l.b16 %v2533
        %v2578 = vunpack.c.l.b16 %v2534
        %v2579 = vunpack.c.l.b16 %v2536
        %v2580 = vunpack.c.l.b16 %v2537
        %v2581 = vunpack.c.l.b16 %v2539
        %v2582 = vunpack.c.l.b16 %v2540
        %v2583 = vunpack.c.l.b16 %v2542
        %v2584 = vunpack.c.l.b16 %v2543
        %v2585 = vunpack.c.l.b16 %v2545
        %v2586 = vunpack.c.l.b16 %v2546
        %v2587 = vunpack.c.l.b16 %v2548
        %v2588 = vunpack.c.l.b16 %v2549
        %v2589 = vpack.c.b16 %v2574, %v2573
        %v2590 = vpack.c.b16 %v2576, %v2575
        %v2591 = vpack.c.b16 %v2578, %v2577
        %v2592 = vpack.c.b16 %v2580, %v2579
        %v2593 = vpack.c.b16 %v2582, %v2581
        %v2594 = vpack.c.b16 %v2584, %v2583
        %v2595 = vpack.c.b16 %v2586, %v2585
        %v2596 = vpack.c.b16 %v2588, %v2587
        %v2613 = vunpack.c.l.b16 %v2529
        %v2614 = vunpack.c.l.b16 %v2532
        %v2615 = vunpack.c.l.b16 %v2535
        %v2616 = vunpack.c.l.b16 %v2538
        %v2617 = vunpack.c.l.b16 %v2541
        %v2618 = vunpack.c.l.b16 %v2544
        %v2619 = vunpack.c.l.b16 %v2547
        %v2620 = vunpack.c.l.b16 %v2550
        %v2621 = vpack.c.b16 %v2613, %v2613
        %v2622 = vpack.c.b16 %v2614, %v2614
        %v2623 = vpack.c.b16 %v2615, %v2615
        %v2624 = vpack.c.b16 %v2616, %v2616
        %v2625 = vpack.c.b16 %v2617, %v2617
        %v2626 = vpack.c.b16 %v2618, %v2618
        %v2627 = vpack.c.b16 %v2619, %v2619
        %v2628 = vpack.c.b16 %v2620, %v2620
        %v2630 = vshrl.u32 %v2589, 16
        %v2632 = vshll.u32 %v2589, 16
        %v2634 = vrot.slane %v2632, 1
        %v2635 = vor.u32 %v2630, %v2634
        %v2637 = vshll.u32 %v2621, 16
        %v2639 = vrot.slane %v2637, 1
        %v2640 = vsel %vm721, %v2635, %v2639
        %v2642 = vshrl.u32 %v2590, 16
        %v2644 = vshll.u32 %v2590, 16
        %v2646 = vrot.slane %v2644, 1
        %v2647 = vor.u32 %v2642, %v2646
        %v2649 = vshll.u32 %v2622, 16
        %v2651 = vrot.slane %v2649, 1
        %v2652 = vsel %vm721, %v2647, %v2651
        %v2654 = vshrl.u32 %v2591, 16
        %v2656 = vshll.u32 %v2591, 16
        %v2658 = vrot.slane %v2656, 1
        %v2659 = vor.u32 %v2654, %v2658
        %v2661 = vshll.u32 %v2623, 16
        %v2663 = vrot.slane %v2661, 1
        %v2664 = vsel %vm721, %v2659, %v2663
        %v2666 = vshrl.u32 %v2592, 16
        %v2668 = vshll.u32 %v2592, 16
        %v2670 = vrot.slane %v2668, 1
        %v2671 = vor.u32 %v2666, %v2670
        %v2673 = vshll.u32 %v2624, 16
        %v2675 = vrot.slane %v2673, 1
        %v2676 = vsel %vm721, %v2671, %v2675
        %v2678 = vshrl.u32 %v2593, 16
        %v2680 = vshll.u32 %v2593, 16
        %v2682 = vrot.slane %v2680, 1
        %v2683 = vor.u32 %v2678, %v2682
        %v2685 = vshll.u32 %v2625, 16
        %v2687 = vrot.slane %v2685, 1
        %v2688 = vsel %vm721, %v2683, %v2687
        %v2690 = vshrl.u32 %v2594, 16
        %v2692 = vshll.u32 %v2594, 16
        %v2694 = vrot.slane %v2692, 1
        %v2695 = vor.u32 %v2690, %v2694
        %v2697 = vshll.u32 %v2626, 16
        %v2699 = vrot.slane %v2697, 1
        %v2700 = vsel %vm721, %v2695, %v2699
        %v2702 = vshrl.u32 %v2595, 16
        %v2704 = vshll.u32 %v2595, 16
        %v2706 = vrot.slane %v2704, 1
        %v2707 = vor.u32 %v2702, %v2706
        %v2709 = vshll.u32 %v2627, 16
        %v2711 = vrot.slane %v2709, 1
        %v2712 = vsel %vm721, %v2707, %v2711
        %v2714 = vshrl.u32 %v2596, 16
        %v2716 = vshll.u32 %v2596, 16
        %v2718 = vrot.slane %v2716, 1
        %v2719 = vor.u32 %v2714, %v2718
        %v2721 = vshll.u32 %v2628, 16
        %v2723 = vrot.slane %v2721, 1
        %v2724 = vsel %vm721, %v2719, %v2723
        %v2733 = vrot.slane %v2589, 1
        %v2734 = vrot.slane %v2621, 1
        %v2735 = vsel %vm852, %v2733, %v2734
        %v2736 = vrot.slane %v2590, 1
        %v2737 = vrot.slane %v2622, 1
        %v2738 = vsel %vm852, %v2736, %v2737
        %v2739 = vrot.slane %v2591, 1
        %v2740 = vrot.slane %v2623, 1
        %v2741 = vsel %vm852, %v2739, %v2740
        %v2742 = vrot.slane %v2592, 1
        %v2743 = vrot.slane %v2624, 1
        %v2744 = vsel %vm852, %v2742, %v2743
        %v2745 = vrot.slane %v2593, 1
        %v2746 = vrot.slane %v2625, 1
        %v2747 = vsel %vm852, %v2745, %v2746
        %v2748 = vrot.slane %v2594, 1
        %v2749 = vrot.slane %v2626, 1
        %v2750 = vsel %vm852, %v2748, %v2749
        %v2751 = vrot.slane %v2595, 1
        %v2752 = vrot.slane %v2627, 1
        %v2753 = vsel %vm852, %v2751, %v2752
        %v2754 = vrot.slane %v2596, 1
        %v2755 = vrot.slane %v2628, 1
        %v2756 = vsel %vm852, %v2754, %v2755
        %v2767 = vunpack.c.l.b16 %v2551
        %v2768 = vunpack.c.l.b16 %v2552
        %v2769 = vpack.c.b16 %v2768, %v2767
        %v2772 = vunpack.c.l.b16 %v2553
        %v2773 = vpack.c.b16 %v2772, %v2772
        %v2775 = vshrl.u32 %v2769, 16
        %v2777 = vshll.u32 %v2769, 16
        %v2779 = vrot.slane %v2777, 1
        %v2780 = vor.u32 %v2775, %v2779
        %v2782 = vshll.u32 %v2773, 16
        %v2784 = vrot.slane %v2782, 1
        %v2785 = vsel %vm721, %v2780, %v2784
        %v2787 = vrot.slane %v2769, 1
        %v2788 = vrot.slane %v2773, 1
        %v2789 = vsel %vm852, %v2787, %v2788
        %v2793 = vunpack.c.l.b16 %v2554
        %v2794 = vunpack.c.l.b16 %v2555
        %v2795 = vpack.c.b16 %v2794, %v2793
        %v2798 = vunpack.c.l.b16 %v2556
        %v2799 = vpack.c.b16 %v2798, %v2798
        %v2801 = vshrl.u32 %v2795, 16
        %v2803 = vshll.u32 %v2795, 16
        %v2805 = vrot.slane %v2803, 1
        %v2806 = vor.u32 %v2801, %v2805
        %v2808 = vshll.u32 %v2799, 16
        %v2810 = vrot.slane %v2808, 1
        %v2811 = vsel %vm721, %v2806, %v2810
        %v2813 = vrot.slane %v2795, 1
        %v2814 = vrot.slane %v2799, 1
        %v2815 = vsel %vm852, %v2813, %v2814
        %v2817 = vld [vmem:[%s2] sm:$0xf]
        %v2818 = vld [vmem:[%s2 + $0x4] sm:$0xf]
        %v2819 = vld [vmem:[%s2 + $0x8] sm:$0xf]
        %v2820 = vld [vmem:[%s2 + $0xc] sm:$0xf]
        %v2821 = vld [vmem:[%s2 + $0x10] sm:$0xf]
        %v2822 = vld [vmem:[%s2 + $0x14] sm:$0xf]
        %v2823 = vld [vmem:[%s2 + $0x18] sm:$0xf]
        %v2824 = vld [vmem:[%s2 + $0x1c] sm:$0xf]
        %v2825 = vld [vmem:[%s2 + $0x20] sm:$0xf]
        %v2826 = vld [vmem:[%s2 + $0x24] sm:$0xf]
        %v2827 = vld [vmem:[%s2 + $0x28] sm:$0xf]
        %v2828 = vld [vmem:[%s2 + $0x2c] sm:$0xf]
        %v2829 = vld [vmem:[%s2 + $0x30] sm:$0xf]
        %v2830 = vld [vmem:[%s2 + $0x34] sm:$0xf]
        %v2831 = vld [vmem:[%s2 + $0x38] sm:$0xf]
        %v2832 = vld [vmem:[%s2 + $0x3c] sm:$0xf]
        %v2833 = vld [vmem:[%s2 + $0x40] sm:$0xf]
        %v2834 = vld [vmem:[%s2 + $0x44] sm:$0xf]
        %v2835 = vld [vmem:[%s2 + $0x48] sm:$0xf]
        %v2836 = vld [vmem:[%s2 + $0x4c] sm:$0xf]
        %v2837 = vld [vmem:[%s2 + $0x50] sm:$0xf]
        %v2838 = vld [vmem:[%s2 + $0x54] sm:$0xf]
        %v2839 = vld [vmem:[%s2 + $0x58] sm:$0xf]
        %v2840 = vld [vmem:[%s2 + $0x5c] sm:$0xf]
        %v2841 = vld [vmem:[%s2 + $0x60] sm:$0xf]
        %v2842 = vld [vmem:[%s2 + $0x64] sm:$0xf]
        %v2843 = vld [vmem:[%s2 + $0x68] sm:$0xf]
        %v2844 = vld [vmem:[%s2 + $0x6c] sm:$0xf]
        %v2845 = vld [vmem:[%s2 + $0x70] sm:$0xf]
        %v2846 = vld [vmem:[%s2 + $0x74] sm:$0xf]
        %v2847 = vld [vmem:[%s2 + $0x78] sm:$0xf]
        %v2848 = vld [vmem:[%s2 + $0x7c] sm:$0xf]
        %v2849 = vld [vmem:[%s2 + $0x80] sm:$0xf]
        %v2850 = vld [vmem:[%s2 + $0x84] sm:$0xf]
        %v2851 = vld [vmem:[%s2 + $0x88] sm:$0xf]
        %v2852 = vld [vmem:[%s2 + $0x8c] sm:$0xf]
        %v2853 = vld [vmem:[%s2 + $0x90] sm:$0xf]
        %v2854 = vld [vmem:[%s2 + $0x94] sm:$0xf]
        %v2855 = vld [vmem:[%s2 + $0x98] sm:$0xf]
        %v2856 = vld [vmem:[%s2 + $0x9c] sm:$0xf]
        %v2857 = vld [vmem:[%s2 + $0xa0] sm:$0xf]
        %v2858 = vld [vmem:[%s2 + $0xa4] sm:$0xf]
        %v2859 = vld [vmem:[%s2 + $0xa8] sm:$0xf]
        %v2860 = vld [vmem:[%s2 + $0xac] sm:$0xf]
        %v2861 = vld [vmem:[%s2 + $0xb0] sm:$0xf]
        %v2862 = vld [vmem:[%s2 + $0xb4] sm:$0xf]
        %v2863 = vld [vmem:[%s2 + $0xb8] sm:$0xf]
        %v2864 = vld [vmem:[%s2 + $0xbc] sm:$0xf]
        %v2865 = vld [vmem:[%s2 + $0xc0] sm:$0xf]
        %v2866 = vld [vmem:[%s2 + $0xc4] sm:$0xf]
        %v2867 = vld [vmem:[%s2 + $0xc8] sm:$0xf]
        %v2868 = vld [vmem:[%s2 + $0xcc] sm:$0xf]
        %v2869 = vld [vmem:[%s2 + $0xd0] sm:$0xf]
        %v2870 = vld [vmem:[%s2 + $0xd4] sm:$0xf]
        %v2871 = vld [vmem:[%s2 + $0xd8] sm:$0xf]
        %v2872 = vld [vmem:[%s2 + $0xdc] sm:$0xf]
        %v2873 = vld [vmem:[%s2 + $0xe0] sm:$0xf]
        %v2874 = vld [vmem:[%s2 + $0xe4] sm:$0xf]
        %v2875 = vld [vmem:[%s2 + $0xe8] sm:$0xf]
        %v2876 = vld [vmem:[%s2 + $0xec] sm:$0xf]
        %v2877 = vld [vmem:[%s2 + $0xf0] sm:$0xf]
        %v2878 = vld [vmem:[%s2 + $0xf4] sm:$0xf]
        %v2879 = vld [vmem:[%s2 + $0xf8] sm:$0xf]
        %v2880 = vld [vmem:[%s2 + $0xfc] sm:$0xf]
        %v2881 = vld [vmem:[%s2 + $0x100] sm:$0xf]
        %v2882 = vld [vmem:[%s2 + $0x104] sm:$0xf]
        %v2883 = vld [vmem:[%s2 + $0x108] sm:$0xf]
        %v2884 = vld [vmem:[%s2 + $0x10c] sm:$0xf]
        %v2885 = vld [vmem:[%s2 + $0x110] sm:$0xf]
        %v2886 = vld [vmem:[%s2 + $0x114] sm:$0xf]
        %v2887 = vld [vmem:[%s2 + $0x118] sm:$0xf]
        %v2888 = vld [vmem:[%s2 + $0x11c] sm:$0xf]
        %v2889 = vld [vmem:[%s2 + $0x120] sm:$0xf]
        %v2890 = vld [vmem:[%s2 + $0x124] sm:$0xf]
        %v2891 = vld [vmem:[%s2 + $0x128] sm:$0xf]
        %v2892 = vld [vmem:[%s2 + $0x12c] sm:$0xf]
        %v2893 = vld [vmem:[%s2 + $0x130] sm:$0xf]
        %v2894 = vld [vmem:[%s2 + $0x134] sm:$0xf]
        %v2895 = vld [vmem:[%s2 + $0x138] sm:$0xf]
        %v2896 = vld [vmem:[%s2 + $0x13c] sm:$0xf]
        %v2897 = vld [vmem:[%s2 + $0x140] sm:$0xf]
        %v2898 = vld [vmem:[%s2 + $0x144] sm:$0xf]
        %v2899 = vld [vmem:[%s2 + $0x148] sm:$0xf]
        %v2900 = vld [vmem:[%s2 + $0x14c] sm:$0xf]
        %v2901 = vld [vmem:[%s2 + $0x150] sm:$0xf]
        %v2902 = vld [vmem:[%s2 + $0x154] sm:$0xf]
        %v2903 = vld [vmem:[%s2 + $0x158] sm:$0xf]
        %v2904 = vld [vmem:[%s2 + $0x15c] sm:$0xf]
        %v2905 = vld [vmem:[%s2 + $0x160] sm:$0xf]
        %v2906 = vld [vmem:[%s2 + $0x164] sm:$0xf]
        %v2907 = vld [vmem:[%s2 + $0x168] sm:$0xf]
        %v2908 = vld [vmem:[%s2 + $0x16c] sm:$0xf]
        %v2909 = vld [vmem:[%s2 + $0x170] sm:$0xf]
        %v2910 = vld [vmem:[%s2 + $0x174] sm:$0xf]
        %v2911 = vld [vmem:[%s2 + $0x178] sm:$0xf]
        %v2912 = vld [vmem:[%s2 + $0x17c] sm:$0xf]
        %v2913 = vld [vmem:[%s2 + $0x180] sm:$0xf]
        %v2914 = vld [vmem:[%s2 + $0x184] sm:$0xf]
        %v2915 = vld [vmem:[%s2 + $0x188] sm:$0xf]
        %v2916 = vld [vmem:[%s2 + $0x18c] sm:$0xf]
        %v2917 = vld [vmem:[%s2 + $0x190] sm:$0xf]
        %v2918 = vld [vmem:[%s2 + $0x194] sm:$0xf]
        %v2919 = vld [vmem:[%s2 + $0x198] sm:$0xf]
        %v2920 = vld [vmem:[%s2 + $0x19c] sm:$0xf]
        %v2921 = vld [vmem:[%s2 + $0x1a0] sm:$0xf]
        %v2922 = vld [vmem:[%s2 + $0x1a4] sm:$0xf]
        %v2923 = vld [vmem:[%s2 + $0x1a8] sm:$0xf]
        %v2924 = vld [vmem:[%s2 + $0x1ac] sm:$0xf]
        %v2925 = vld [vmem:[%s2 + $0x1b0] sm:$0xf]
        %v2926 = vld [vmem:[%s2 + $0x1b4] sm:$0xf]
        %v2927 = vld [vmem:[%s2 + $0x1b8] sm:$0xf]
        %v2928 = vld [vmem:[%s2 + $0x1bc] sm:$0xf]
        %v2929 = vld [vmem:[%s2 + $0x1c0] sm:$0xf]
        %v2930 = vld [vmem:[%s2 + $0x1c4] sm:$0xf]
        %v2931 = vld [vmem:[%s2 + $0x1c8] sm:$0xf]
        %v2932 = vld [vmem:[%s2 + $0x1cc] sm:$0xf]
        %v2933 = vld [vmem:[%s2 + $0x1d0] sm:$0xf]
        %v2934 = vld [vmem:[%s2 + $0x1d4] sm:$0xf]
        %v2935 = vld [vmem:[%s2 + $0x1d8] sm:$0xf]
        %v2936 = vld [vmem:[%s2 + $0x1dc] sm:$0xf]
        %v2937 = vld [vmem:[%s2 + $0x1e0] sm:$0xf]
        %v2938 = vld [vmem:[%s2 + $0x1e4] sm:$0xf]
        %v2939 = vld [vmem:[%s2 + $0x1e8] sm:$0xf]
        %v2940 = vld [vmem:[%s2 + $0x1ec] sm:$0xf]
        %v2941 = vld [vmem:[%s2 + $0x1f0] sm:$0xf]
        %v2942 = vld [vmem:[%s2 + $0x1f4] sm:$0xf]
        %v2943 = vld [vmem:[%s2 + $0x1f8] sm:$0xf]
        %v2944 = vld [vmem:[%s2 + $0x1fc] sm:$0xf]
        %v2945 = vld [vmem:[%s2 + $0x200] sm:$0xf]
        %v2946 = vld [vmem:[%s2 + $0x204] sm:$0xf]
        %v2947 = vld [vmem:[%s2 + $0x208] sm:$0xf]
        %v2948 = vld [vmem:[%s2 + $0x20c] sm:$0xf]
        %v2949 = vld [vmem:[%s2 + $0x210] sm:$0xf]
        %v2950 = vld [vmem:[%s2 + $0x214] sm:$0xf]
        %v2951 = vld [vmem:[%s2 + $0x218] sm:$0xf]
        %v2952 = vld [vmem:[%s2 + $0x21c] sm:$0xf]
        %v2953 = vld [vmem:[%s2 + $0x220] sm:$0xf]
        %v2954 = vld [vmem:[%s2 + $0x224] sm:$0xf]
        %v2955 = vld [vmem:[%s2 + $0x228] sm:$0xf]
        %v2956 = vld [vmem:[%s2 + $0x22c] sm:$0xf]
        %v2957 = vld [vmem:[%s2 + $0x230] sm:$0xf]
        %v2958 = vld [vmem:[%s2 + $0x234] sm:$0xf]
        %v2959 = vld [vmem:[%s2 + $0x238] sm:$0xf]
        %v2960 = vld [vmem:[%s2 + $0x23c] sm:$0xf]
        %v2961 = vld [vmem:[%s5 + $0x3] sm:$0x1]
        %v2962 = vperm.slane %v2961, 0
        %v3107 = vunpack.c.l.b16 %v2817
        %v3108 = vunpack.c.l.b16 %v2818
        %v3109 = vunpack.c.l.b16 %v2819
        %v3110 = vunpack.c.l.b16 %v2820
        %v3111 = vunpack.c.l.b16 %v2821
        %v3112 = vunpack.c.l.b16 %v2822
        %v3113 = vunpack.c.l.b16 %v2823
        %v3114 = vunpack.c.l.b16 %v2824
        %v3115 = vunpack.c.l.b16 %v2825
        %v3116 = vunpack.c.l.b16 %v2826
        %v3117 = vunpack.c.l.b16 %v2827
        %v3118 = vunpack.c.l.b16 %v2828
        %v3119 = vunpack.c.l.b16 %v2829
        %v3120 = vunpack.c.l.b16 %v2830
        %v3121 = vunpack.c.l.b16 %v2831
        %v3122 = vunpack.c.l.b16 %v2832
        %v3123 = vunpack.c.l.b16 %v2833
        %v3124 = vunpack.c.l.b16 %v2834
        %v3125 = vunpack.c.l.b16 %v2835
        %v3126 = vunpack.c.l.b16 %v2836
        %v3127 = vunpack.c.l.b16 %v2837
        %v3128 = vunpack.c.l.b16 %v2838
        %v3129 = vunpack.c.l.b16 %v2839
        %v3130 = vunpack.c.l.b16 %v2840
        %v3131 = vunpack.c.l.b16 %v2841
        %v3132 = vunpack.c.l.b16 %v2842
        %v3133 = vunpack.c.l.b16 %v2843
        %v3134 = vunpack.c.l.b16 %v2844
        %v3135 = vunpack.c.l.b16 %v2845
        %v3136 = vunpack.c.l.b16 %v2846
        %v3137 = vunpack.c.l.b16 %v2847
        %v3138 = vunpack.c.l.b16 %v2848
        %v3139 = vunpack.c.l.b16 %v2849
        %v3140 = vunpack.c.l.b16 %v2850
        %v3141 = vunpack.c.l.b16 %v2851
        %v3142 = vunpack.c.l.b16 %v2852
        %v3143 = vunpack.c.l.b16 %v2853
        %v3144 = vunpack.c.l.b16 %v2854
        %v3145 = vunpack.c.l.b16 %v2855
        %v3146 = vunpack.c.l.b16 %v2856
        %v3147 = vunpack.c.l.b16 %v2857
        %v3148 = vunpack.c.l.b16 %v2858
        %v3149 = vunpack.c.l.b16 %v2859
        %v3150 = vunpack.c.l.b16 %v2860
        %v3151 = vunpack.c.l.b16 %v2861
        %v3152 = vunpack.c.l.b16 %v2862
        %v3153 = vunpack.c.l.b16 %v2863
        %v3154 = vunpack.c.l.b16 %v2864
        %v3155 = vunpack.c.l.b16 %v2865
        %v3156 = vunpack.c.l.b16 %v2866
        %v3157 = vunpack.c.l.b16 %v2867
        %v3158 = vunpack.c.l.b16 %v2868
        %v3159 = vunpack.c.l.b16 %v2869
        %v3160 = vunpack.c.l.b16 %v2870
        %v3161 = vunpack.c.l.b16 %v2871
        %v3162 = vunpack.c.l.b16 %v2872
        %v3163 = vunpack.c.l.b16 %v2873
        %v3164 = vunpack.c.l.b16 %v2874
        %v3165 = vunpack.c.l.b16 %v2875
        %v3166 = vunpack.c.l.b16 %v2876
        %v3167 = vunpack.c.l.b16 %v2877
        %v3168 = vunpack.c.l.b16 %v2878
        %v3169 = vunpack.c.l.b16 %v2879
        %v3170 = vunpack.c.l.b16 %v2880
        %v3171 = vunpack.c.l.b16 %v2881
        %v3172 = vunpack.c.l.b16 %v2882
        %v3173 = vunpack.c.l.b16 %v2883
        %v3174 = vunpack.c.l.b16 %v2884
        %v3175 = vunpack.c.l.b16 %v2885
        %v3176 = vunpack.c.l.b16 %v2886
        %v3177 = vunpack.c.l.b16 %v2887
        %v3178 = vunpack.c.l.b16 %v2888
        %v3179 = vunpack.c.l.b16 %v2889
        %v3180 = vunpack.c.l.b16 %v2890
        %v3181 = vunpack.c.l.b16 %v2891
        %v3182 = vunpack.c.l.b16 %v2892
        %v3183 = vunpack.c.l.b16 %v2893
        %v3184 = vunpack.c.l.b16 %v2894
        %v3185 = vunpack.c.l.b16 %v2895
        %v3186 = vunpack.c.l.b16 %v2896
        %v3187 = vunpack.c.l.b16 %v2897
        %v3188 = vunpack.c.l.b16 %v2898
        %v3189 = vunpack.c.l.b16 %v2899
        %v3190 = vunpack.c.l.b16 %v2900
        %v3191 = vunpack.c.l.b16 %v2901
        %v3192 = vunpack.c.l.b16 %v2902
        %v3193 = vunpack.c.l.b16 %v2903
        %v3194 = vunpack.c.l.b16 %v2904
        %v3195 = vunpack.c.l.b16 %v2905
        %v3196 = vunpack.c.l.b16 %v2906
        %v3197 = vunpack.c.l.b16 %v2907
        %v3198 = vunpack.c.l.b16 %v2908
        %v3199 = vunpack.c.l.b16 %v2909
        %v3200 = vunpack.c.l.b16 %v2910
        %v3201 = vunpack.c.l.b16 %v2911
        %v3202 = vunpack.c.l.b16 %v2912
        %v3203 = vunpack.c.l.b16 %v2913
        %v3204 = vunpack.c.l.b16 %v2914
        %v3205 = vunpack.c.l.b16 %v2915
        %v3206 = vunpack.c.l.b16 %v2916
        %v3207 = vunpack.c.l.b16 %v2917
        %v3208 = vunpack.c.l.b16 %v2918
        %v3209 = vunpack.c.l.b16 %v2919
        %v3210 = vunpack.c.l.b16 %v2920
        %v3211 = vunpack.c.l.b16 %v2921
        %v3212 = vunpack.c.l.b16 %v2922
        %v3213 = vunpack.c.l.b16 %v2923
        %v3214 = vunpack.c.l.b16 %v2924
        %v3215 = vunpack.c.l.b16 %v2925
        %v3216 = vunpack.c.l.b16 %v2926
        %v3217 = vunpack.c.l.b16 %v2927
        %v3218 = vunpack.c.l.b16 %v2928
        %v3219 = vunpack.c.l.b16 %v2929
        %v3220 = vunpack.c.l.b16 %v2930
        %v3221 = vunpack.c.l.b16 %v2931
        %v3222 = vunpack.c.l.b16 %v2932
        %v3223 = vunpack.c.l.b16 %v2933
        %v3224 = vunpack.c.l.b16 %v2934
        %v3225 = vunpack.c.l.b16 %v2935
        %v3226 = vunpack.c.l.b16 %v2936
        %v3227 = vunpack.c.l.b16 %v2937
        %v3228 = vunpack.c.l.b16 %v2938
        %v3229 = vunpack.c.l.b16 %v2939
        %v3230 = vunpack.c.l.b16 %v2940
        %v3231 = vunpack.c.l.b16 %v2941
        %v3232 = vunpack.c.l.b16 %v2942
        %v3233 = vunpack.c.l.b16 %v2943
        %v3234 = vunpack.c.l.b16 %v2944
        %v3235 = vunpack.c.l.b16 %v2945
        %v3236 = vunpack.c.l.b16 %v2946
        %v3237 = vunpack.c.l.b16 %v2947
        %v3238 = vunpack.c.l.b16 %v2948
        %v3239 = vunpack.c.l.b16 %v2949
        %v3240 = vunpack.c.l.b16 %v2950
        %v3241 = vunpack.c.l.b16 %v2951
        %v3242 = vunpack.c.l.b16 %v2952
        %v3243 = vunpack.c.l.b16 %v2953
        %v3244 = vunpack.c.l.b16 %v2954
        %v3245 = vunpack.c.l.b16 %v2955
        %v3246 = vunpack.c.l.b16 %v2956
        %v3247 = vunpack.c.l.b16 %v2957
        %v3248 = vunpack.c.l.b16 %v2958
        %v3249 = vunpack.c.l.b16 %v2959
        %v3250 = vunpack.c.l.b16 %v2960
        %v3251 = vpack.c.b16 %v3108, %v3107
        %v3252 = vpack.c.b16 %v3110, %v3109
        %v3253 = vpack.c.b16 %v3112, %v3111
        %v3254 = vpack.c.b16 %v3114, %v3113
        %v3255 = vpack.c.b16 %v3116, %v3115
        %v3256 = vpack.c.b16 %v3118, %v3117
        %v3257 = vpack.c.b16 %v3120, %v3119
        %v3258 = vpack.c.b16 %v3122, %v3121
        %v3259 = vpack.c.b16 %v3124, %v3123
        %v3260 = vpack.c.b16 %v3126, %v3125
        %v3261 = vpack.c.b16 %v3128, %v3127
        %v3262 = vpack.c.b16 %v3130, %v3129
        %v3263 = vpack.c.b16 %v3132, %v3131
        %v3264 = vpack.c.b16 %v3134, %v3133
        %v3265 = vpack.c.b16 %v3136, %v3135
        %v3266 = vpack.c.b16 %v3138, %v3137
        %v3267 = vpack.c.b16 %v3140, %v3139
        %v3268 = vpack.c.b16 %v3142, %v3141
        %v3269 = vpack.c.b16 %v3144, %v3143
        %v3270 = vpack.c.b16 %v3146, %v3145
        %v3271 = vpack.c.b16 %v3148, %v3147
        %v3272 = vpack.c.b16 %v3150, %v3149
        %v3273 = vpack.c.b16 %v3152, %v3151
        %v3274 = vpack.c.b16 %v3154, %v3153
        %v3275 = vpack.c.b16 %v3156, %v3155
        %v3276 = vpack.c.b16 %v3158, %v3157
        %v3277 = vpack.c.b16 %v3160, %v3159
        %v3278 = vpack.c.b16 %v3162, %v3161
        %v3279 = vpack.c.b16 %v3164, %v3163
        %v3280 = vpack.c.b16 %v3166, %v3165
        %v3281 = vpack.c.b16 %v3168, %v3167
        %v3282 = vpack.c.b16 %v3170, %v3169
        %v3283 = vpack.c.b16 %v3172, %v3171
        %v3284 = vpack.c.b16 %v3174, %v3173
        %v3285 = vpack.c.b16 %v3176, %v3175
        %v3286 = vpack.c.b16 %v3178, %v3177
        %v3287 = vpack.c.b16 %v3180, %v3179
        %v3288 = vpack.c.b16 %v3182, %v3181
        %v3289 = vpack.c.b16 %v3184, %v3183
        %v3290 = vpack.c.b16 %v3186, %v3185
        %v3291 = vpack.c.b16 %v3188, %v3187
        %v3292 = vpack.c.b16 %v3190, %v3189
        %v3293 = vpack.c.b16 %v3192, %v3191
        %v3294 = vpack.c.b16 %v3194, %v3193
        %v3295 = vpack.c.b16 %v3196, %v3195
        %v3296 = vpack.c.b16 %v3198, %v3197
        %v3297 = vpack.c.b16 %v3200, %v3199
        %v3298 = vpack.c.b16 %v3202, %v3201
        %v3299 = vpack.c.b16 %v3204, %v3203
        %v3300 = vpack.c.b16 %v3206, %v3205
        %v3301 = vpack.c.b16 %v3208, %v3207
        %v3302 = vpack.c.b16 %v3210, %v3209
        %v3303 = vpack.c.b16 %v3212, %v3211
        %v3304 = vpack.c.b16 %v3214, %v3213
        %v3305 = vpack.c.b16 %v3216, %v3215
        %v3306 = vpack.c.b16 %v3218, %v3217
        %v3307 = vpack.c.b16 %v3220, %v3219
        %v3308 = vpack.c.b16 %v3222, %v3221
        %v3309 = vpack.c.b16 %v3224, %v3223
        %v3310 = vpack.c.b16 %v3226, %v3225
        %v3311 = vpack.c.b16 %v3228, %v3227
        %v3312 = vpack.c.b16 %v3230, %v3229
        %v3313 = vpack.c.b16 %v3232, %v3231
        %v3314 = vpack.c.b16 %v3234, %v3233
        %v3315 = vpack.c.b16 %v3236, %v3235
        %v3316 = vpack.c.b16 %v3238, %v3237
        %v3317 = vpack.c.b16 %v3240, %v3239
        %v3318 = vpack.c.b16 %v3242, %v3241
        %v3319 = vpack.c.b16 %v3244, %v3243
        %v3320 = vpack.c.b16 %v3246, %v3245
        %v3321 = vpack.c.b16 %v3248, %v3247
        %v3322 = vpack.c.b16 %v3250, %v3249
        %3395 = vmatpush.bf16.msra.mxu0 %v3258
        %3396 = vmatpush.bf16.msra.mxu0 %v3257
        %3397 = vmatpush.bf16.msra.mxu0 %v3256
        %3398 = vmatpush.bf16.msra.mxu0 %v3255
        %3399 = vmatpush.bf16.msra.mxu0 %v3254
        %3400 = vmatpush.bf16.msra.mxu0 %v3253
        %3401 = vmatpush.bf16.msra.mxu0 %v3252
        %3402 = vmatpush.bf16.msra.mxu0 %v3251
        %3403 = vmatmul.bf16.gmra.mxu0 %v2589
        %v3404 = vpop.f32.mrf.mxu0
        %v3405 = vadd.f32 %v2962, %v3404
        %v3406 = vpop.f32.mrf.mxu0
        %v3407 = vadd.f32 %v2962, %v3406
        %3408 = vmatmul.bf16.gmra.mxu0 %v2590
        %v3409 = vpop.f32.mrf.mxu0
        %v3410 = vadd.f32 %v2962, %v3409
        %v3411 = vpop.f32.mrf.mxu0
        %v3412 = vadd.f32 %v2962, %v3411
        %3413 = vmatmul.bf16.gmra.mxu0 %v2591
        %v3414 = vpop.f32.mrf.mxu0
        %v3415 = vadd.f32 %v2962, %v3414
        %v3416 = vpop.f32.mrf.mxu0
        %v3417 = vadd.f32 %v2962, %v3416
        %3418 = vmatmul.bf16.gmra.mxu0 %v2592
        %v3419 = vpop.f32.mrf.mxu0
        %v3420 = vadd.f32 %v2962, %v3419
        %v3421 = vpop.f32.mrf.mxu0
        %v3422 = vadd.f32 %v2962, %v3421
        %3423 = vmatmul.bf16.gmra.mxu0 %v2593
        %v3424 = vpop.f32.mrf.mxu0
        %v3425 = vadd.f32 %v2962, %v3424
        %v3426 = vpop.f32.mrf.mxu0
        %v3427 = vadd.f32 %v2962, %v3426
        %3428 = vmatmul.bf16.gmra.mxu0 %v2594
        %v3429 = vpop.f32.mrf.mxu0
        %v3430 = vadd.f32 %v2962, %v3429
        %v3431 = vpop.f32.mrf.mxu0
        %v3432 = vadd.f32 %v2962, %v3431
        %3433 = vmatmul.bf16.gmra.mxu0 %v2595
        %v3434 = vpop.f32.mrf.mxu0
        %v3435 = vadd.f32 %v2962, %v3434
        %v3436 = vpop.f32.mrf.mxu0
        %v3437 = vadd.f32 %v2962, %v3436
        %3438 = vmatmul.bf16.gmra.mxu0 %v2596
        %v3439 = vpop.f32.mrf.mxu0
        %v3440 = vadd.f32 %v2962, %v3439
        %v3441 = vpop.f32.mrf.mxu0
        %v3442 = vadd.f32 %v2962, %v3441
        %3443 = vdwg.mxu0
        %3444 = vmatpush.bf16.msra.mxu0 %v3266
        %3445 = vmatpush.bf16.msra.mxu0 %v3265
        %3446 = vmatpush.bf16.msra.mxu0 %v3264
        %3447 = vmatpush.bf16.msra.mxu0 %v3263
        %3448 = vmatpush.bf16.msra.mxu0 %v3262
        %3449 = vmatpush.bf16.msra.mxu0 %v3261
        %3450 = vmatpush.bf16.msra.mxu0 %v3260
        %3451 = vmatpush.bf16.msra.mxu0 %v3259
        %3452 = vmatmul.bf16.gmra.mxu0 %v2640
        %v3453 = vpop.f32.mrf.mxu0
        %v3454 = vadd.f32 %v3405, %v3453
        %v3455 = vpop.f32.mrf.mxu0
        %v3456 = vadd.f32 %v3407, %v3455
        %3457 = vmatmul.bf16.gmra.mxu0 %v2652
        %v3458 = vpop.f32.mrf.mxu0
        %v3459 = vadd.f32 %v3410, %v3458
        %v3460 = vpop.f32.mrf.mxu0
        %v3461 = vadd.f32 %v3412, %v3460
        %3462 = vmatmul.bf16.gmra.mxu0 %v2664
        %v3463 = vpop.f32.mrf.mxu0
        %v3464 = vadd.f32 %v3415, %v3463
        %v3465 = vpop.f32.mrf.mxu0
        %v3466 = vadd.f32 %v3417, %v3465
        %3467 = vmatmul.bf16.gmra.mxu0 %v2676
        %v3468 = vpop.f32.mrf.mxu0
        %v3469 = vadd.f32 %v3420, %v3468
        %v3470 = vpop.f32.mrf.mxu0
        %v3471 = vadd.f32 %v3422, %v3470
        %3472 = vmatmul.bf16.gmra.mxu0 %v2688
        %v3473 = vpop.f32.mrf.mxu0
        %v3474 = vadd.f32 %v3425, %v3473
        %v3475 = vpop.f32.mrf.mxu0
        %v3476 = vadd.f32 %v3427, %v3475
        %3477 = vmatmul.bf16.gmra.mxu0 %v2700
        %v3478 = vpop.f32.mrf.mxu0
        %v3479 = vadd.f32 %v3430, %v3478
        %v3480 = vpop.f32.mrf.mxu0
        %v3481 = vadd.f32 %v3432, %v3480
        %3482 = vmatmul.bf16.gmra.mxu0 %v2712
        %v3483 = vpop.f32.mrf.mxu0
        %v3484 = vadd.f32 %v3435, %v3483
        %v3485 = vpop.f32.mrf.mxu0
        %v3486 = vadd.f32 %v3437, %v3485
        %3487 = vmatmul.bf16.gmra.mxu0 %v2724
        %v3488 = vpop.f32.mrf.mxu0
        %v3489 = vadd.f32 %v3440, %v3488
        %v3490 = vpop.f32.mrf.mxu0
        %v3491 = vadd.f32 %v3442, %v3490
        %3492 = vdwg.mxu0
        %3493 = vmatpush.bf16.msra.mxu0 %v3274
        %3494 = vmatpush.bf16.msra.mxu0 %v3273
        %3495 = vmatpush.bf16.msra.mxu0 %v3272
        %3496 = vmatpush.bf16.msra.mxu0 %v3271
        %3497 = vmatpush.bf16.msra.mxu0 %v3270
        %3498 = vmatpush.bf16.msra.mxu0 %v3269
        %3499 = vmatpush.bf16.msra.mxu0 %v3268
        %3500 = vmatpush.bf16.msra.mxu0 %v3267
        %3501 = vmatmul.bf16.gmra.mxu0 %v2735
        %v3502 = vpop.f32.mrf.mxu0
        %v3503 = vadd.f32 %v3454, %v3502
        %v3504 = vpop.f32.mrf.mxu0
        %v3505 = vadd.f32 %v3456, %v3504
        %3506 = vmatmul.bf16.gmra.mxu0 %v2738
        %v3507 = vpop.f32.mrf.mxu0
        %v3508 = vadd.f32 %v3459, %v3507
        %v3509 = vpop.f32.mrf.mxu0
        %v3510 = vadd.f32 %v3461, %v3509
        %3511 = vmatmul.bf16.gmra.mxu0 %v2741
        %v3512 = vpop.f32.mrf.mxu0
        %v3513 = vadd.f32 %v3464, %v3512
        %v3514 = vpop.f32.mrf.mxu0
        %v3515 = vadd.f32 %v3466, %v3514
        %3516 = vmatmul.bf16.gmra.mxu0 %v2744
        %v3517 = vpop.f32.mrf.mxu0
        %v3518 = vadd.f32 %v3469, %v3517
        %v3519 = vpop.f32.mrf.mxu0
        %v3520 = vadd.f32 %v3471, %v3519
        %3521 = vmatmul.bf16.gmra.mxu0 %v2747
        %v3522 = vpop.f32.mrf.mxu0
        %v3523 = vadd.f32 %v3474, %v3522
        %v3524 = vpop.f32.mrf.mxu0
        %v3525 = vadd.f32 %v3476, %v3524
        %3526 = vmatmul.bf16.gmra.mxu0 %v2750
        %v3527 = vpop.f32.mrf.mxu0
        %v3528 = vadd.f32 %v3479, %v3527
        %v3529 = vpop.f32.mrf.mxu0
        %v3530 = vadd.f32 %v3481, %v3529
        %3531 = vmatmul.bf16.gmra.mxu0 %v2753
        %v3532 = vpop.f32.mrf.mxu0
        %v3533 = vadd.f32 %v3484, %v3532
        %v3534 = vpop.f32.mrf.mxu0
        %v3535 = vadd.f32 %v3486, %v3534
        %3536 = vmatmul.bf16.gmra.mxu0 %v2756
        %v3537 = vpop.f32.mrf.mxu0
        %v3538 = vadd.f32 %v3489, %v3537
        %v3539 = vpop.f32.mrf.mxu0
        %v3540 = vadd.f32 %v3491, %v3539
        %3541 = vdwg.mxu0
        %3542 = vmatpush.bf16.msra.mxu0 %v3282
        %3543 = vmatpush.bf16.msra.mxu0 %v3281
        %3544 = vmatpush.bf16.msra.mxu0 %v3280
        %3545 = vmatpush.bf16.msra.mxu0 %v3279
        %3546 = vmatpush.bf16.msra.mxu0 %v3278
        %3547 = vmatpush.bf16.msra.mxu0 %v3277
        %3548 = vmatpush.bf16.msra.mxu0 %v3276
        %3549 = vmatpush.bf16.msra.mxu0 %v3275
        %3550 = vmatmul.bf16.gmra.mxu0 %v2590
        %v3551 = vpop.f32.mrf.mxu0
        %v3552 = vadd.f32 %v3503, %v3551
        %v3553 = vpop.f32.mrf.mxu0
        %v3554 = vadd.f32 %v3505, %v3553
        %3555 = vmatmul.bf16.gmra.mxu0 %v2591
        %v3556 = vpop.f32.mrf.mxu0
        %v3557 = vadd.f32 %v3508, %v3556
        %v3558 = vpop.f32.mrf.mxu0
        %v3559 = vadd.f32 %v3510, %v3558
        %3560 = vmatmul.bf16.gmra.mxu0 %v2592
        %v3561 = vpop.f32.mrf.mxu0
        %v3562 = vadd.f32 %v3513, %v3561
        %v3563 = vpop.f32.mrf.mxu0
        %v3564 = vadd.f32 %v3515, %v3563
        %3565 = vmatmul.bf16.gmra.mxu0 %v2593
        %v3566 = vpop.f32.mrf.mxu0
        %v3567 = vadd.f32 %v3518, %v3566
        %v3568 = vpop.f32.mrf.mxu0
        %v3569 = vadd.f32 %v3520, %v3568
        %3570 = vmatmul.bf16.gmra.mxu0 %v2594
        %v3571 = vpop.f32.mrf.mxu0
        %v3572 = vadd.f32 %v3523, %v3571
        %v3573 = vpop.f32.mrf.mxu0
        %v3574 = vadd.f32 %v3525, %v3573
        %3575 = vmatmul.bf16.gmra.mxu0 %v2595
        %v3576 = vpop.f32.mrf.mxu0
        %v3577 = vadd.f32 %v3528, %v3576
        %v3578 = vpop.f32.mrf.mxu0
        %v3579 = vadd.f32 %v3530, %v3578
        %3580 = vmatmul.bf16.gmra.mxu0 %v2596
        %v3581 = vpop.f32.mrf.mxu0
        %v3582 = vadd.f32 %v3533, %v3581
        %v3583 = vpop.f32.mrf.mxu0
        %v3584 = vadd.f32 %v3535, %v3583
        %3585 = vmatmul.bf16.gmra.mxu0 %v2769
        %v3586 = vpop.f32.mrf.mxu0
        %v3587 = vadd.f32 %v3538, %v3586
        %v3588 = vpop.f32.mrf.mxu0
        %v3589 = vadd.f32 %v3540, %v3588
        %3590 = vdwg.mxu0
        %3591 = vmatpush.bf16.msra.mxu0 %v3290
        %3592 = vmatpush.bf16.msra.mxu0 %v3289
        %3593 = vmatpush.bf16.msra.mxu0 %v3288
        %3594 = vmatpush.bf16.msra.mxu0 %v3287
        %3595 = vmatpush.bf16.msra.mxu0 %v3286
        %3596 = vmatpush.bf16.msra.mxu0 %v3285
        %3597 = vmatpush.bf16.msra.mxu0 %v3284
        %3598 = vmatpush.bf16.msra.mxu0 %v3283
        %3599 = vmatmul.bf16.gmra.mxu0 %v2652
        %v3600 = vpop.f32.mrf.mxu0
        %v3601 = vadd.f32 %v3552, %v3600
        %v3602 = vpop.f32.mrf.mxu0
        %v3603 = vadd.f32 %v3554, %v3602
        %3604 = vmatmul.bf16.gmra.mxu0 %v2664
        %v3605 = vpop.f32.mrf.mxu0
        %v3606 = vadd.f32 %v3557, %v3605
        %v3607 = vpop.f32.mrf.mxu0
        %v3608 = vadd.f32 %v3559, %v3607
        %3609 = vmatmul.bf16.gmra.mxu0 %v2676
        %v3610 = vpop.f32.mrf.mxu0
        %v3611 = vadd.f32 %v3562, %v3610
        %v3612 = vpop.f32.mrf.mxu0
        %v3613 = vadd.f32 %v3564, %v3612
        %3614 = vmatmul.bf16.gmra.mxu0 %v2688
        %v3615 = vpop.f32.mrf.mxu0
        %v3616 = vadd.f32 %v3567, %v3615
        %v3617 = vpop.f32.mrf.mxu0
        %v3618 = vadd.f32 %v3569, %v3617
        %3619 = vmatmul.bf16.gmra.mxu0 %v2700
        %v3620 = vpop.f32.mrf.mxu0
        %v3621 = vadd.f32 %v3572, %v3620
        %v3622 = vpop.f32.mrf.mxu0
        %v3623 = vadd.f32 %v3574, %v3622
        %3624 = vmatmul.bf16.gmra.mxu0 %v2712
        %v3625 = vpop.f32.mrf.mxu0
        %v3626 = vadd.f32 %v3577, %v3625
        %v3627 = vpop.f32.mrf.mxu0
        %v3628 = vadd.f32 %v3579, %v3627
        %3629 = vmatmul.bf16.gmra.mxu0 %v2724
        %v3630 = vpop.f32.mrf.mxu0
        %v3631 = vadd.f32 %v3582, %v3630
        %v3632 = vpop.f32.mrf.mxu0
        %v3633 = vadd.f32 %v3584, %v3632
        %3634 = vmatmul.bf16.gmra.mxu0 %v2785
        %v3635 = vpop.f32.mrf.mxu0
        %v3636 = vadd.f32 %v3587, %v3635
        %v3637 = vpop.f32.mrf.mxu0
        %v3638 = vadd.f32 %v3589, %v3637
        %3639 = vdwg.mxu0
        %3640 = vmatpush.bf16.msra.mxu0 %v3298
        %3641 = vmatpush.bf16.msra.mxu0 %v3297
        %3642 = vmatpush.bf16.msra.mxu0 %v3296
        %3643 = vmatpush.bf16.msra.mxu0 %v3295
        %3644 = vmatpush.bf16.msra.mxu0 %v3294
        %3645 = vmatpush.bf16.msra.mxu0 %v3293
        %3646 = vmatpush.bf16.msra.mxu0 %v3292
        %3647 = vmatpush.bf16.msra.mxu0 %v3291
        %3648 = vmatmul.bf16.gmra.mxu0 %v2738
        %v3649 = vpop.f32.mrf.mxu0
        %v3650 = vadd.f32 %v3601, %v3649
        %v3651 = vpop.f32.mrf.mxu0
        %v3652 = vadd.f32 %v3603, %v3651
        %3653 = vmatmul.bf16.gmra.mxu0 %v2741
        %v3654 = vpop.f32.mrf.mxu0
        %v3655 = vadd.f32 %v3606, %v3654
        %v3656 = vpop.f32.mrf.mxu0
        %v3657 = vadd.f32 %v3608, %v3656
        %3658 = vmatmul.bf16.gmra.mxu0 %v2744
        %v3659 = vpop.f32.mrf.mxu0
        %v3660 = vadd.f32 %v3611, %v3659
        %v3661 = vpop.f32.mrf.mxu0
        %v3662 = vadd.f32 %v3613, %v3661
        %3663 = vmatmul.bf16.gmra.mxu0 %v2747
        %v3664 = vpop.f32.mrf.mxu0
        %v3665 = vadd.f32 %v3616, %v3664
        %v3666 = vpop.f32.mrf.mxu0
        %v3667 = vadd.f32 %v3618, %v3666
        %3668 = vmatmul.bf16.gmra.mxu0 %v2750
        %v3669 = vpop.f32.mrf.mxu0
        %v3670 = vadd.f32 %v3621, %v3669
        %v3671 = vpop.f32.mrf.mxu0
        %v3672 = vadd.f32 %v3623, %v3671
        %3673 = vmatmul.bf16.gmra.mxu0 %v2753
        %v3674 = vpop.f32.mrf.mxu0
        %v3675 = vadd.f32 %v3626, %v3674
        %v3676 = vpop.f32.mrf.mxu0
        %v3677 = vadd.f32 %v3628, %v3676
        %3678 = vmatmul.bf16.gmra.mxu0 %v2756
        %v3679 = vpop.f32.mrf.mxu0
        %v3680 = vadd.f32 %v3631, %v3679
        %v3681 = vpop.f32.mrf.mxu0
        %v3682 = vadd.f32 %v3633, %v3681
        %3683 = vmatmul.bf16.gmra.mxu0 %v2789
        %v3684 = vpop.f32.mrf.mxu0
        %v3685 = vadd.f32 %v3636, %v3684
        %v3686 = vpop.f32.mrf.mxu0
        %v3687 = vadd.f32 %v3638, %v3686
        %3688 = vdwg.mxu0
        %3689 = vmatpush.bf16.msra.mxu0 %v3306
        %3690 = vmatpush.bf16.msra.mxu0 %v3305
        %3691 = vmatpush.bf16.msra.mxu0 %v3304
        %3692 = vmatpush.bf16.msra.mxu0 %v3303
        %3693 = vmatpush.bf16.msra.mxu0 %v3302
        %3694 = vmatpush.bf16.msra.mxu0 %v3301
        %3695 = vmatpush.bf16.msra.mxu0 %v3300
        %3696 = vmatpush.bf16.msra.mxu0 %v3299
        %3697 = vmatmul.bf16.gmra.mxu0 %v2591
        %v3698 = vpop.f32.mrf.mxu0
        %v3699 = vadd.f32 %v3650, %v3698
        %v3700 = vpop.f32.mrf.mxu0
        %v3701 = vadd.f32 %v3652, %v3700
        %3702 = vmatmul.bf16.gmra.mxu0 %v2592
        %v3703 = vpop.f32.mrf.mxu0
        %v3704 = vadd.f32 %v3655, %v3703
        %v3705 = vpop.f32.mrf.mxu0
        %v3706 = vadd.f32 %v3657, %v3705
        %3707 = vmatmul.bf16.gmra.mxu0 %v2593
        %v3708 = vpop.f32.mrf.mxu0
        %v3709 = vadd.f32 %v3660, %v3708
        %v3710 = vpop.f32.mrf.mxu0
        %v3711 = vadd.f32 %v3662, %v3710
        %3712 = vmatmul.bf16.gmra.mxu0 %v2594
        %v3713 = vpop.f32.mrf.mxu0
        %v3714 = vadd.f32 %v3665, %v3713
        %v3715 = vpop.f32.mrf.mxu0
        %v3716 = vadd.f32 %v3667, %v3715
        %3717 = vmatmul.bf16.gmra.mxu0 %v2595
        %v3718 = vpop.f32.mrf.mxu0
        %v3719 = vadd.f32 %v3670, %v3718
        %v3720 = vpop.f32.mrf.mxu0
        %v3721 = vadd.f32 %v3672, %v3720
        %3722 = vmatmul.bf16.gmra.mxu0 %v2596
        %v3723 = vpop.f32.mrf.mxu0
        %v3724 = vadd.f32 %v3675, %v3723
        %v3725 = vpop.f32.mrf.mxu0
        %v3726 = vadd.f32 %v3677, %v3725
        %3727 = vmatmul.bf16.gmra.mxu0 %v2769
        %v3728 = vpop.f32.mrf.mxu0
        %v3729 = vadd.f32 %v3680, %v3728
        %v3730 = vpop.f32.mrf.mxu0
        %v3731 = vadd.f32 %v3682, %v3730
        %3732 = vmatmul.bf16.gmra.mxu0 %v2795
        %v3733 = vpop.f32.mrf.mxu0
        %v3734 = vadd.f32 %v3685, %v3733
        %v3735 = vpop.f32.mrf.mxu0
        %v3736 = vadd.f32 %v3687, %v3735
        %3737 = vdwg.mxu0
        %3738 = vmatpush.bf16.msra.mxu0 %v3314
        %3739 = vmatpush.bf16.msra.mxu0 %v3313
        %3740 = vmatpush.bf16.msra.mxu0 %v3312
        %3741 = vmatpush.bf16.msra.mxu0 %v3311
        %3742 = vmatpush.bf16.msra.mxu0 %v3310
        %3743 = vmatpush.bf16.msra.mxu0 %v3309
        %3744 = vmatpush.bf16.msra.mxu0 %v3308
        %3745 = vmatpush.bf16.msra.mxu0 %v3307
        %3746 = vmatmul.bf16.gmra.mxu0 %v2664
        %v3747 = vpop.f32.mrf.mxu0
        %v3748 = vadd.f32 %v3699, %v3747
        %v3749 = vpop.f32.mrf.mxu0
        %v3750 = vadd.f32 %v3701, %v3749
        %3751 = vmatmul.bf16.gmra.mxu0 %v2676
        %v3752 = vpop.f32.mrf.mxu0
        %v3753 = vadd.f32 %v3704, %v3752
        %v3754 = vpop.f32.mrf.mxu0
        %v3755 = vadd.f32 %v3706, %v3754
        %3756 = vmatmul.bf16.gmra.mxu0 %v2688
        %v3757 = vpop.f32.mrf.mxu0
        %v3758 = vadd.f32 %v3709, %v3757
        %v3759 = vpop.f32.mrf.mxu0
        %v3760 = vadd.f32 %v3711, %v3759
        %3761 = vmatmul.bf16.gmra.mxu0 %v2700
        %v3762 = vpop.f32.mrf.mxu0
        %v3763 = vadd.f32 %v3714, %v3762
        %v3764 = vpop.f32.mrf.mxu0
        %v3765 = vadd.f32 %v3716, %v3764
        %3766 = vmatmul.bf16.gmra.mxu0 %v2712
        %v3767 = vpop.f32.mrf.mxu0
        %v3768 = vadd.f32 %v3719, %v3767
        %v3769 = vpop.f32.mrf.mxu0
        %v3770 = vadd.f32 %v3721, %v3769
        %3771 = vmatmul.bf16.gmra.mxu0 %v2724
        %v3772 = vpop.f32.mrf.mxu0
        %v3773 = vadd.f32 %v3724, %v3772
        %v3774 = vpop.f32.mrf.mxu0
        %v3775 = vadd.f32 %v3726, %v3774
        %3776 = vmatmul.bf16.gmra.mxu0 %v2785
        %v3777 = vpop.f32.mrf.mxu0
        %v3778 = vadd.f32 %v3729, %v3777
        %v3779 = vpop.f32.mrf.mxu0
        %v3780 = vadd.f32 %v3731, %v3779
        %3781 = vmatmul.bf16.gmra.mxu0 %v2811
        %v3782 = vpop.f32.mrf.mxu0
        %v3783 = vadd.f32 %v3734, %v3782
        %v3784 = vpop.f32.mrf.mxu0
        %v3785 = vadd.f32 %v3736, %v3784
        %3786 = vdwg.mxu0
        %3787 = vmatpush.bf16.msra.mxu0 %v3322
        %3788 = vmatpush.bf16.msra.mxu0 %v3321
        %3789 = vmatpush.bf16.msra.mxu0 %v3320
        %3790 = vmatpush.bf16.msra.mxu0 %v3319
        %3791 = vmatpush.bf16.msra.mxu0 %v3318
        %3792 = vmatpush.bf16.msra.mxu0 %v3317
        %3793 = vmatpush.bf16.msra.mxu0 %v3316
        %3794 = vmatpush.bf16.msra.mxu0 %v3315
        %3795 = vmatmul.bf16.gmra.mxu0 %v2741
        %v3796 = vpop.f32.mrf.mxu0
        %v3797 = vadd.f32 %v3748, %v3796
        %v3798 = vpop.f32.mrf.mxu0
        %v3799 = vadd.f32 %v3750, %v3798
        %3800 = vmatmul.bf16.gmra.mxu0 %v2744
        %v3801 = vpop.f32.mrf.mxu0
        %v3802 = vadd.f32 %v3753, %v3801
        %v3803 = vpop.f32.mrf.mxu0
        %v3804 = vadd.f32 %v3755, %v3803
        %3805 = vmatmul.bf16.gmra.mxu0 %v2747
        %v3806 = vpop.f32.mrf.mxu0
        %v3807 = vadd.f32 %v3758, %v3806
        %v3808 = vpop.f32.mrf.mxu0
        %v3809 = vadd.f32 %v3760, %v3808
        %3810 = vmatmul.bf16.gmra.mxu0 %v2750
        %v3811 = vpop.f32.mrf.mxu0
        %v3812 = vadd.f32 %v3763, %v3811
        %v3813 = vpop.f32.mrf.mxu0
        %v3814 = vadd.f32 %v3765, %v3813
        %3815 = vmatmul.bf16.gmra.mxu0 %v2753
        %v3816 = vpop.f32.mrf.mxu0
        %v3817 = vadd.f32 %v3768, %v3816
        %v3818 = vpop.f32.mrf.mxu0
        %v3819 = vadd.f32 %v3770, %v3818
        %3820 = vmatmul.bf16.gmra.mxu0 %v2756
        %v3821 = vpop.f32.mrf.mxu0
        %v3822 = vadd.f32 %v3773, %v3821
        %v3823 = vpop.f32.mrf.mxu0
        %v3824 = vadd.f32 %v3775, %v3823
        %3825 = vmatmul.bf16.gmra.mxu0 %v2789
        %v3826 = vpop.f32.mrf.mxu0
        %v3827 = vadd.f32 %v3778, %v3826
        %v3828 = vpop.f32.mrf.mxu0
        %v3829 = vadd.f32 %v3780, %v3828
        %3830 = vmatmul.bf16.gmra.mxu0 %v2815
        %v3831 = vpop.f32.mrf.mxu0
        %v3832 = vadd.f32 %v3783, %v3831
        %v3833 = vpop.f32.mrf.mxu0
        %v3834 = vadd.f32 %v3785, %v3833
        %3835 = vdwg.mxu0
        %v3836 = vpack.c.bf16 %v287, %v287
        %v3837 = vpack.c.bf16 %v288, %v288
        %v3838 = vpack.c.bf16 %v289, %v289
        %v3839 = vpack.c.bf16 %v290, %v290
        %v3840 = vpack.c.bf16 %v291, %v291
        %v3841 = vpack.c.bf16 %v292, %v292
        %v3842 = vpack.c.bf16 %v293, %v293
        %v3843 = vpack.c.bf16 %v294, %v294
        %v3844 = vpack.c.bf16 %v295, %v295
        %v3845 = vpack.c.bf16 %v296, %v296
        %v3846 = vpack.c.bf16 %v297, %v297
        %v3847 = vpack.c.bf16 %v298, %v298
        %v3848 = vpack.c.bf16 %v299, %v299
        %v3849 = vpack.c.bf16 %v300, %v300
        %v3850 = vpack.c.bf16 %v301, %v301
        %v3851 = vpack.c.bf16 %v302, %v302
        %v3852 = vpack.c.bf16 %v303, %v303
        %v3853 = vpack.c.bf16 %v304, %v304
        %v3854 = vpack.c.bf16 %v305, %v305
        %v3855 = vpack.c.bf16 %v306, %v306
        %v3856 = vpack.c.bf16 %v307, %v307
        %v3857 = vpack.c.bf16 %v308, %v308
        %v3858 = vpack.c.bf16 %v309, %v309
        %v3859 = vpack.c.bf16 %v310, %v310
        %vm3860 = vsmask.f32 3328
        %vm3861 = vsmask.f32 7440
        %vm3862 = vmor %vm3860, %vm3861
        %v3864 = vshrl.u32 %v3836, 16
        %v3866 = vrot.slane %v3864, 4
        %v3867 = vshll.u32 %v3836, 16
        %v3869 = vrot.slane %v3867, 5
        %v3870 = vor.u32 %v3866, %v3869
        %v3871 = vrot.slane %v3870, 4
        %v3873 = vshll.u32 %v3837, 16
        %v3875 = vrot.slane %v3873, 5
        %v3876 = vsel %vm3862, %v3871, %v3875
        %v3877 = vshrl.u32 %v3837, 16
        %v3879 = vrot.slane %v3877, 4
        %v3880 = vor.u32 %v3879, %v3875
        %v3881 = vrot.slane %v3880, 4
        %v3883 = vshll.u32 %v3838, 16
        %v3885 = vrot.slane %v3883, 5
        %v3886 = vsel %vm3862, %v3881, %v3885
        %v3888 = vshrl.u32 %v3839, 16
        %v3890 = vrot.slane %v3888, 4
        %v3891 = vshll.u32 %v3839, 16
        %v3893 = vrot.slane %v3891, 5
        %v3894 = vor.u32 %v3890, %v3893
        %v3895 = vrot.slane %v3894, 4
        %v3897 = vshll.u32 %v3840, 16
        %v3899 = vrot.slane %v3897, 5
        %v3900 = vsel %vm3862, %v3895, %v3899
        %v3901 = vshrl.u32 %v3840, 16
        %v3903 = vrot.slane %v3901, 4
        %v3904 = vor.u32 %v3903, %v3899
        %v3905 = vrot.slane %v3904, 4
        %v3907 = vshll.u32 %v3841, 16
        %v3909 = vrot.slane %v3907, 5
        %v3910 = vsel %vm3862, %v3905, %v3909
        %v3912 = vshrl.u32 %v3842, 16
        %v3914 = vrot.slane %v3912, 4
        %v3915 = vshll.u32 %v3842, 16
        %v3917 = vrot.slane %v3915, 5
        %v3918 = vor.u32 %v3914, %v3917
        %v3919 = vrot.slane %v3918, 4
        %v3921 = vshll.u32 %v3843, 16
        %v3923 = vrot.slane %v3921, 5
        %v3924 = vsel %vm3862, %v3919, %v3923
        %v3925 = vshrl.u32 %v3843, 16
        %v3927 = vrot.slane %v3925, 4
        %v3928 = vor.u32 %v3927, %v3923
        %v3929 = vrot.slane %v3928, 4
        %v3931 = vshll.u32 %v3844, 16
        %v3933 = vrot.slane %v3931, 5
        %v3934 = vsel %vm3862, %v3929, %v3933
        %v3936 = vshrl.u32 %v3845, 16
        %v3938 = vrot.slane %v3936, 4
        %v3939 = vshll.u32 %v3845, 16
        %v3941 = vrot.slane %v3939, 5
        %v3942 = vor.u32 %v3938, %v3941
        %v3943 = vrot.slane %v3942, 4
        %v3945 = vshll.u32 %v3846, 16
        %v3947 = vrot.slane %v3945, 5
        %v3948 = vsel %vm3862, %v3943, %v3947
        %v3949 = vshrl.u32 %v3846, 16
        %v3951 = vrot.slane %v3949, 4
        %v3952 = vor.u32 %v3951, %v3947
        %v3953 = vrot.slane %v3952, 4
        %v3955 = vshll.u32 %v3847, 16
        %v3957 = vrot.slane %v3955, 5
        %v3958 = vsel %vm3862, %v3953, %v3957
        %v3960 = vshrl.u32 %v3848, 16
        %v3962 = vrot.slane %v3960, 4
        %v3963 = vshll.u32 %v3848, 16
        %v3965 = vrot.slane %v3963, 5
        %v3966 = vor.u32 %v3962, %v3965
        %v3967 = vrot.slane %v3966, 4
        %v3969 = vshll.u32 %v3849, 16
        %v3971 = vrot.slane %v3969, 5
        %v3972 = vsel %vm3862, %v3967, %v3971
        %v3973 = vshrl.u32 %v3849, 16
        %v3975 = vrot.slane %v3973, 4
        %v3976 = vor.u32 %v3975, %v3971
        %v3977 = vrot.slane %v3976, 4
        %v3979 = vshll.u32 %v3850, 16
        %v3981 = vrot.slane %v3979, 5
        %v3982 = vsel %vm3862, %v3977, %v3981
        %v3984 = vshrl.u32 %v3851, 16
        %v3986 = vrot.slane %v3984, 4
        %v3987 = vshll.u32 %v3851, 16
        %v3989 = vrot.slane %v3987, 5
        %v3990 = vor.u32 %v3986, %v3989
        %v3991 = vrot.slane %v3990, 4
        %v3993 = vshll.u32 %v3852, 16
        %v3995 = vrot.slane %v3993, 5
        %v3996 = vsel %vm3862, %v3991, %v3995
        %v3997 = vshrl.u32 %v3852, 16
        %v3999 = vrot.slane %v3997, 4
        %v4000 = vor.u32 %v3999, %v3995
        %v4001 = vrot.slane %v4000, 4
        %v4003 = vshll.u32 %v3853, 16
        %v4005 = vrot.slane %v4003, 5
        %v4006 = vsel %vm3862, %v4001, %v4005
        %v4008 = vshrl.u32 %v3854, 16
        %v4010 = vrot.slane %v4008, 4
        %v4011 = vshll.u32 %v3854, 16
        %v4013 = vrot.slane %v4011, 5
        %v4014 = vor.u32 %v4010, %v4013
        %v4015 = vrot.slane %v4014, 4
        %v4017 = vshll.u32 %v3855, 16
        %v4019 = vrot.slane %v4017, 5
        %v4020 = vsel %vm3862, %v4015, %v4019
        %v4021 = vshrl.u32 %v3855, 16
        %v4023 = vrot.slane %v4021, 4
        %v4024 = vor.u32 %v4023, %v4019
        %v4025 = vrot.slane %v4024, 4
        %v4027 = vshll.u32 %v3856, 16
        %v4029 = vrot.slane %v4027, 5
        %v4030 = vsel %vm3862, %v4025, %v4029
        %v4032 = vshrl.u32 %v3857, 16
        %v4034 = vrot.slane %v4032, 4
        %v4035 = vshll.u32 %v3857, 16
        %v4037 = vrot.slane %v4035, 5
        %v4038 = vor.u32 %v4034, %v4037
        %v4039 = vrot.slane %v4038, 4
        %v4041 = vshll.u32 %v3858, 16
        %v4043 = vrot.slane %v4041, 5
        %v4044 = vsel %vm3862, %v4039, %v4043
        %v4045 = vshrl.u32 %v3858, 16
        %v4047 = vrot.slane %v4045, 4
        %v4048 = vor.u32 %v4047, %v4043
        %v4049 = vrot.slane %v4048, 4
        %v4051 = vshll.u32 %v3859, 16
        %v4053 = vrot.slane %v4051, 5
        %v4054 = vsel %vm3862, %v4049, %v4053
        %v4055 = vld [vmem:[%s3] sm:$0xf]
        %v4056 = vld [vmem:[%s3 + $0x4] sm:$0xf]
        %v4057 = vld [vmem:[%s3 + $0x8] sm:$0xf]
        %v4058 = vld [vmem:[%s3 + $0xc] sm:$0xf]
        %v4059 = vld [vmem:[%s3 + $0x10] sm:$0xf]
        %v4060 = vld [vmem:[%s3 + $0x14] sm:$0xf]
        %v4061 = vld [vmem:[%s3 + $0x18] sm:$0xf]
        %v4062 = vld [vmem:[%s3 + $0x1c] sm:$0xf]
        %v4063 = vld [vmem:[%s3 + $0x20] sm:$0xf]
        %v4064 = vld [vmem:[%s3 + $0x24] sm:$0xf]
        %v4065 = vld [vmem:[%s3 + $0x28] sm:$0xf]
        %v4066 = vld [vmem:[%s3 + $0x2c] sm:$0xf]
        %v4067 = vld [vmem:[%s3 + $0x30] sm:$0xf]
        %v4068 = vld [vmem:[%s3 + $0x34] sm:$0xf]
        %v4069 = vld [vmem:[%s3 + $0x38] sm:$0xf]
        %v4070 = vld [vmem:[%s3 + $0x3c] sm:$0xf]
        %v4071 = vld [vmem:[%s5 + $0x4] sm:$0x1]
        %v4072 = vperm.slane %v4071, 0
        %v4073 = vunpack.c.l.b16 %v3876
        %v4074 = vunpack.c.l.b16 %v3886
        %v4075 = vunpack.c.l.b16 %v3900
        %v4076 = vunpack.c.l.b16 %v3910
        %v4077 = vunpack.c.l.b16 %v3924
        %v4078 = vunpack.c.l.b16 %v3934
        %v4079 = vunpack.c.l.b16 %v3948
        %v4080 = vunpack.c.l.b16 %v3958
        %v4081 = vunpack.c.l.b16 %v3972
        %v4082 = vunpack.c.l.b16 %v3982
        %v4083 = vunpack.c.l.b16 %v3996
        %v4084 = vunpack.c.l.b16 %v4006
        %v4085 = vunpack.c.l.b16 %v4020
        %v4086 = vunpack.c.l.b16 %v4030
        %v4087 = vunpack.c.l.b16 %v4044
        %v4088 = vunpack.c.l.b16 %v4054
        %v4089 = vpack.c.b16 %v4074, %v4073
        %v4090 = vpack.c.b16 %v4076, %v4075
        %v4091 = vpack.c.b16 %v4078, %v4077
        %v4092 = vpack.c.b16 %v4080, %v4079
        %v4093 = vpack.c.b16 %v4082, %v4081
        %v4094 = vpack.c.b16 %v4084, %v4083
        %v4095 = vpack.c.b16 %v4086, %v4085
        %v4096 = vpack.c.b16 %v4088, %v4087
        %v4121 = vunpack.c.l.b16 %v4055
        %v4122 = vunpack.c.l.b16 %v4056
        %v4123 = vunpack.c.l.b16 %v4057
        %v4124 = vunpack.c.l.b16 %v4058
        %v4125 = vunpack.c.l.b16 %v4059
        %v4126 = vunpack.c.l.b16 %v4060
        %v4127 = vunpack.c.l.b16 %v4061
        %v4128 = vunpack.c.l.b16 %v4062
        %v4129 = vunpack.c.l.b16 %v4063
        %v4130 = vunpack.c.l.b16 %v4064
        %v4131 = vunpack.c.l.b16 %v4065
        %v4132 = vunpack.c.l.b16 %v4066
        %v4133 = vunpack.c.l.b16 %v4067
        %v4134 = vunpack.c.l.b16 %v4068
        %v4135 = vunpack.c.l.b16 %v4069
        %v4136 = vunpack.c.l.b16 %v4070
        %v4137 = vpack.c.b16 %v4122, %v4121
        %v4138 = vpack.c.b16 %v4124, %v4123
        %v4139 = vpack.c.b16 %v4126, %v4125
        %v4140 = vpack.c.b16 %v4128, %v4127
        %v4141 = vpack.c.b16 %v4130, %v4129
        %v4142 = vpack.c.b16 %v4132, %v4131
        %v4143 = vpack.c.b16 %v4134, %v4133
        %v4144 = vpack.c.b16 %v4136, %v4135
        %4153 = vmatpush.bf16.msra.mxu0 %v4144
        %4154 = vmatpush.bf16.msra.mxu0 %v4143
        %4155 = vmatpush.bf16.msra.mxu0 %v4142
        %4156 = vmatpush.bf16.msra.mxu0 %v4141
        %4157 = vmatpush.bf16.msra.mxu0 %v4140
        %4158 = vmatpush.bf16.msra.mxu0 %v4139
        %4159 = vmatpush.bf16.msra.mxu0 %v4138
        %4160 = vmatpush.bf16.msra.mxu0 %v4137
        %4161 = vmatmul.bf16.gmra.mxu0 %v4089
        %v4162 = vpop.f32.mrf.mxu0
        %v4163 = vadd.f32 %v4072, %v4162
        %v4164 = vpop.f32.mrf.mxu0
        %v4165 = vadd.f32 %v4072, %v4164
        %4166 = vmatmul.bf16.gmra.mxu0 %v4090
        %v4167 = vpop.f32.mrf.mxu0
        %v4168 = vadd.f32 %v4072, %v4167
        %v4169 = vpop.f32.mrf.mxu0
        %v4170 = vadd.f32 %v4072, %v4169
        %4171 = vmatmul.bf16.gmra.mxu0 %v4091
        %v4172 = vpop.f32.mrf.mxu0
        %v4173 = vadd.f32 %v4072, %v4172
        %v4174 = vpop.f32.mrf.mxu0
        %v4175 = vadd.f32 %v4072, %v4174
        %4176 = vmatmul.bf16.gmra.mxu0 %v4092
        %v4177 = vpop.f32.mrf.mxu0
        %v4178 = vadd.f32 %v4072, %v4177
        %v4179 = vpop.f32.mrf.mxu0
        %v4180 = vadd.f32 %v4072, %v4179
        %4181 = vmatmul.bf16.gmra.mxu0 %v4093
        %v4182 = vpop.f32.mrf.mxu0
        %v4183 = vadd.f32 %v4072, %v4182
        %v4184 = vpop.f32.mrf.mxu0
        %v4185 = vadd.f32 %v4072, %v4184
        %4186 = vmatmul.bf16.gmra.mxu0 %v4094
        %v4187 = vpop.f32.mrf.mxu0
        %v4188 = vadd.f32 %v4072, %v4187
        %v4189 = vpop.f32.mrf.mxu0
        %v4190 = vadd.f32 %v4072, %v4189
        %4191 = vmatmul.bf16.gmra.mxu0 %v4095
        %v4192 = vpop.f32.mrf.mxu0
        %v4193 = vadd.f32 %v4072, %v4192
        %v4194 = vpop.f32.mrf.mxu0
        %v4195 = vadd.f32 %v4072, %v4194
        %4196 = vmatmul.bf16.gmra.mxu0 %v4096
        %v4197 = vpop.f32.mrf.mxu0
        %v4198 = vadd.f32 %v4072, %v4197
        %v4199 = vpop.f32.mrf.mxu0
        %v4200 = vadd.f32 %v4072, %v4199
        %4201 = vdwg.mxu0
        %v4202 = vld [vmem:[%s5 + $0x5] sm:$0x1]
        %v4203 = vperm.slane %v4202, 0
        %v4204 = vmul.f32 %v4163, %v4203
        %v4205 = vmul.f32 %v4165, %v4203
        %v4206 = vmul.f32 %v4168, %v4203
        %v4207 = vmul.f32 %v4170, %v4203
        %v4208 = vmul.f32 %v4173, %v4203
        %v4209 = vmul.f32 %v4175, %v4203
        %v4210 = vmul.f32 %v4178, %v4203
        %v4211 = vmul.f32 %v4180, %v4203
        %v4212 = vmul.f32 %v4183, %v4203
        %v4213 = vmul.f32 %v4185, %v4203
        %v4214 = vmul.f32 %v4188, %v4203
        %v4215 = vmul.f32 %v4190, %v4203
        %v4216 = vmul.f32 %v4193, %v4203
        %v4217 = vmul.f32 %v4195, %v4203
        %v4218 = vmul.f32 %v4198, %v4203
        %v4219 = vmul.f32 %v4200, %v4203
        %v4220 = vld [vmem:[%s5 + $0x6] sm:$0x1]
        %v4221 = vperm.slane %v4220, 0
        %v4222 = vadd.f32 %v4204, %v4221
        %v4223 = vadd.f32 %v4205, %v4221
        %v4224 = vadd.f32 %v4206, %v4221
        %v4225 = vadd.f32 %v4207, %v4221
        %v4226 = vadd.f32 %v4208, %v4221
        %v4227 = vadd.f32 %v4209, %v4221
        %v4228 = vadd.f32 %v4210, %v4221
        %v4229 = vadd.f32 %v4211, %v4221
        %v4230 = vadd.f32 %v4212, %v4221
        %v4231 = vadd.f32 %v4213, %v4221
        %v4232 = vadd.f32 %v4214, %v4221
        %v4233 = vadd.f32 %v4215, %v4221
        %v4234 = vadd.f32 %v4216, %v4221
        %v4235 = vadd.f32 %v4217, %v4221
        %v4236 = vadd.f32 %v4218, %v4221
        %v4237 = vadd.f32 %v4219, %v4221
        %v4238 = vadd.f32 %v3797, %v4222
        %v4239 = vadd.f32 %v3799, %v4223
        %v4240 = vadd.f32 %v3802, %v4224
        %v4241 = vadd.f32 %v3804, %v4225
        %v4242 = vadd.f32 %v3807, %v4226
        %v4243 = vadd.f32 %v3809, %v4227
        %v4244 = vadd.f32 %v3812, %v4228
        %v4245 = vadd.f32 %v3814, %v4229
        %v4246 = vadd.f32 %v3817, %v4230
        %v4247 = vadd.f32 %v3819, %v4231
        %v4248 = vadd.f32 %v3822, %v4232
        %v4249 = vadd.f32 %v3824, %v4233
        %v4250 = vadd.f32 %v3827, %v4234
        %v4251 = vadd.f32 %v3829, %v4235
        %v4252 = vadd.f32 %v3832, %v4236
        %v4253 = vadd.f32 %v3834, %v4237
        %4254 = vst [vmem:[%s268] sm:$0xff] %v4238
        %4255 = vst [vmem:[%s268 + $0x8] sm:$0xff] %v4239
        %4256 = vst [vmem:[%s268 + $0x10] sm:$0xff] %v4240
        %4257 = vst [vmem:[%s268 + $0x18] sm:$0xff] %v4241
        %4258 = vst [vmem:[%s268 + $0x20] sm:$0xff] %v4242
        %4259 = vst [vmem:[%s268 + $0x28] sm:$0xff] %v4243
        %4260 = vst [vmem:[%s268 + $0x30] sm:$0xff] %v4244
        %4261 = vst [vmem:[%s268 + $0x38] sm:$0xff] %v4245
        %4262 = vst [vmem:[%s268 + $0x40] sm:$0xff] %v4246
        %4263 = vst [vmem:[%s268 + $0x48] sm:$0xff] %v4247
        %4264 = vst [vmem:[%s268 + $0x50] sm:$0xff] %v4248
        %4265 = vst [vmem:[%s268 + $0x58] sm:$0xff] %v4249
        %4266 = vst [vmem:[%s268 + $0x60] sm:$0xff] %v4250
        %4267 = vst [vmem:[%s268 + $0x68] sm:$0xff] %v4251
        %4268 = vst [vmem:[%s268 + $0x70] sm:$0xff] %v4252
        %4269 = vst [vmem:[%s268 + $0x78] sm:$0xff] %v4253
        %s4270 = sand.u32 %s177, 1
        %s4271 = scalar_lea.sflag [#allocation4], %s4270
        %s4272 = sand.u32 %s177, 1
        %s4273 = smul.addr %s4272, 128
        %s4274 = scalar_lea.vmem [#allocation3], %s4273
        // Predicated region
        $region45: #{tpu_custom_call.1} parent=43 // pred_check
          %p4275 = pneg %p187
        $region46: #{tpu_custom_call.1} parent=43 // pred_check_branch
          %4277 = sbr.rel (%p4275) target = $region48
        $region47: #{tpu_custom_call.1} parent=43 // pred_region
          %s4278 = smul.u32 8, %s25
          %4280 = vsyncadd %s4271, 0
          %s4281 = smul.addr %s4278, 2
          %s4282 = smul.addr %s24, 32
          %s4283 = sadd.s32 %s4281, %s4282
          %s4284 = smul.addr %s4283, 8
          %s4285 = scalar_lea.hbm %s6, %s4284
          %s4286 = sshll.u32 %s4274, 4
          %s4287 = int_to_ptr.vmem [resolvable:$true] %s4286
          %s4288 = sshll.u32 %s4285, 4
          %s4289 = int_to_ptr.hbm [resolvable:$true] %s4288
          %4294 = dma.vmem_to_hbm [thread:$0]  %s4287, 2048, %s4289, %s4271, 128, 128, 8
        $region48: #{tpu_custom_call.1} parent=43 // pred_fallthru
          _
      $region44: #{tpu_custom_call.1} parent=5 // pred_fallthru
        _
      %p4295 = scmp.le.s32.totalorder 2, %s15
      // Predicated region
      $region49: #{tpu_custom_call.1} parent=5 // pred_check
        %p4296 = pneg %p4295
      $region50: #{tpu_custom_call.1} parent=5 // pred_check_branch
        %4298 = sbr.rel (%p4296) target = $region52
      $region51: #{tpu_custom_call.1} parent=5 // pred_region
        %s4299 = ssub.s32 %s15, 2
        // Predicated region
        $region53: #{tpu_custom_call.1} parent=51 // pred_check
          %p4300 = pneg %p193
        $region54: #{tpu_custom_call.1} parent=51 // pred_check_branch
          %4302 = sbr.rel (%p4300) target = $region56
        $region55: #{tpu_custom_call.1} parent=51 // pred_region
          %s4303 = sand.u32 %s178, 1
          %s4304 = scalar_lea.sflag [#allocation4], %s4303
          %s4305 = sand.u32 %s178, 1
          %s4306 = smul.addr %s4305, 128
          %s4307 = scalar_lea.vmem [#allocation3], %s4306
          %4309 = dma.done %s4304, 2048
        $region56: #{tpu_custom_call.1} parent=51 // pred_fallthru
          _
      $region52: #{tpu_custom_call.1} parent=5 // pred_fallthru
        _
    $region6: #{tpu_custom_call.1} parent=1 // loop_footer
      %s19 = sadd.s32 1, %s15
    $region7: #{tpu_custom_call.1} parent=1 // loop_footer_branch
      %14 = sbr.rel target = $region3
    $region8: #{tpu_custom_call.1} parent=1 // loop_exit
      _
    %4310 = vsyncpa [#allocation4], 1
    %s4311 = scalar_lea.sflag [#allocation4], 1
    %4312 = vsyncpa %s4311, 1

</llo_original>
